<compile_context>
chip_gen: v7x
topology: tpu7x:2x2x1
jax: 0.10.0
libtpu: 0.0.40
codegen_flags: <defaults>
</compile_context>

<pallas_src>
import math
import functools

import jax
import jax.numpy as jnp
from jax.experimental import pallas as pl
from jax.experimental.pallas import tpu as pltpu


# ------------------------------------------------------------------------------------
# Kernel
# ------------------------------------------------------------------------------------
def _make_sirens_kernel(num_layers):
    """Fused SIREN stack kernel.

    Refs:
      x_ref : [N_TILE, Fin]                 input tile, natural [points, features] layout
      then for each layer l:
        w_ref_l : [Fout_l, Fin_l]           omega-folded weight (PyTorch [out, in] layout)
        b_ref_l : [Fout_l, 1]               omega-folded bias
      o_ref : [N_TILE, Fout_last]           output tile, natural layout (no wrapper .T)
    """

    def kernel(x_ref, *refs):
        o_ref = refs[-1]
        wb_refs = refs[:-1]

        # [N_TILE, Fin] -> [Fin, N_TILE]: features on sublanes, points on the 128-lane
        # axis so the per-layer sin() runs on fully-populated vregs.  XLU transpose,
        # the XLU slot is otherwise idle in this kernel.
        a = x_ref[...].T                       # [Fin, N_TILE], f32

        for l in range(num_layers):
            w = wb_refs[2 * l][...]            # [Fout_l, Fin_l]
            b = wb_refs[2 * l + 1][...]        # [Fout_l, 1] -> broadcasts over lanes
            z = jnp.dot(w, a, preferred_element_type=jnp.float32)   # [Fout_l, N_TILE]
            a = jnp.sin(z + b)                 # omega_0 already folded into w, b

        # [Fout_last, N_TILE] -> [N_TILE, Fout_last]; lane-narrow store is hidden inside the
        # pipelined writeback and saves a whole extra HBM transpose pass in the wrapper.
        o_ref[...] = a.T.astype(o_ref.dtype)

    return kernel


# ------------------------------------------------------------------------------------
# Parameter handling
# ------------------------------------------------------------------------------------
def init_sirens_params(key, in_features, out_features, layers, is_first=False, omega_0=30.0):
    """Deterministic init matching the PyTorch module's __init__ shapes / ranges."""
    dims = [in_features] + list(layers) + [out_features]
    params = []
    for fin, fout in zip(dims[:-1], dims[1:]):
        key, kw, kb = jax.random.split(key, 3)
        if is_first:
            wlim = 1.0 / fin
        else:
            wlim = math.sqrt(6.0 / fin) / omega_0
        # PyTorch stores weight as [out_features, in_features]; bias keeps nn.Linear default init.
        w = jax.random.uniform(kw, (fout, fin), jnp.float32, -wlim, wlim)
        blim = 1.0 / math.sqrt(fin)
        b = jax.random.uniform(kb, (fout,), jnp.float32, -blim, blim)
        params.append((w, b))
    return params


def prepare_params(params, omega_0):
    """One-time transform: fold omega_0 into W and b; bias -> [Fout, 1] column."""
    prepped = []
    for w, b in params:
        w_eff = (omega_0 * w).astype(jnp.float32)                 # [Fout, Fin]
        b_eff = (omega_0 * b).astype(jnp.float32).reshape(-1, 1)  # [Fout, 1]
        prepped.append((w_eff, b_eff))
    return prepped


# ------------------------------------------------------------------------------------
# Tile selection
# ------------------------------------------------------------------------------------
def _pick_n_tile(N, requested=None):
    """Pick the batch (point) tile.

    Prefers 512 (sweep-recommended; 256-multiple for v6e/v7x MXU width, big enough to
    amortize per-grid-step overhead) while keeping >=2 grid steps for v7x's 2 TCs, and
    prefers tiles that divide N exactly so no padding copy is ever made.
    """
    if requested is not None:
        return requested
    for t in (512, 256, 1024, 128):
        if N % t == 0 and N // t >= 2:
            return t
    for t in (512, 256, 128):
        if N % t == 0:
            return t
    return 512  # ragged fallback: wrapper pads (rare path)


# ------------------------------------------------------------------------------------
# Forward wrapper
# ------------------------------------------------------------------------------------
def sirens_forward(x, prepped_params, n_tile=None):
    """Forward pass of the SIRENs stack as one fused Pallas kernel.

    x              : [N, Fin] float32
    prepped_params : list of (w_eff [Fout, Fin], b_eff [Fout, 1]) with omega_0 folded in
    returns        : [N, Fout_last] float32
    """
    N, fin = x.shape
    num_layers = len(prepped_params)
    fout_last = prepped_params[-1][0].shape[0]

    tile = _pick_n_tile(N, n_tile)
    n_blocks = pl.cdiv(N, tile)
    n_pad = n_blocks * tile

    x_in = x
    if n_pad != N:
        # TODO(synk): handle the ragged tail with an in-kernel mask on the last grid step
        # instead of this padding copy (only hit when no candidate tile divides N).
        x_in = jnp.pad(x, ((0, n_pad - N), (0, 0)))

    in_specs = [pl.BlockSpec((tile, fin), lambda i: (i, 0))]
    args = [x_in]
    for w, b in prepped_params:
        fo, fi = w.shape
        in_specs.append(pl.BlockSpec((fo, fi), lambda i: (0, 0)))   # weights: full, resident
        in_specs.append(pl.BlockSpec((fo, 1), lambda i: (0, 0)))    # bias: full, resident
        args.append(w)
        args.append(b)

    out_spec = pl.BlockSpec((tile, fout_last), lambda i: (i, 0))

    # Advisory cost hint for XLA's scheduler around this low-arithmetic-intensity call.
    flops = 2 * n_pad * sum(w.shape[0] * w.shape[1] for w, _ in prepped_params)
    transcendentals = n_pad * sum(w.shape[0] for w, _ in prepped_params)
    bytes_accessed = 4 * (x_in.size + n_pad * fout_last
                          + sum(w.size + b.size for w, b in prepped_params))

    out = pl.pallas_call(
        _make_sirens_kernel(num_layers),
        out_shape=jax.ShapeDtypeStruct((n_pad, fout_last), jnp.float32),
        grid_spec=pl.GridSpec(
            grid=(n_blocks,),
            in_specs=in_specs,
            out_specs=out_spec,
        ),
        compiler_params=pltpu.CompilerParams(
            dimension_semantics=("parallel",),  # independent batch tiles (shards on v7x 2-TC)
        ),
        cost_estimate=pl.CostEstimate(
            flops=flops,
            transcendentals=transcendentals,
            bytes_accessed=bytes_accessed,
        ),
    )(*args)

    if n_pad != N:
        out = out[:N]
    return out


# ------------------------------------------------------------------------------------
# Demo / correctness check
# ------------------------------------------------------------------------------------
if __name__ == "__main__":
    key = jax.random.PRNGKey(0)

    in_features = 4
    layers = [32, 32]
    out_features = 8
    omega_0 = 30.0
    N = 2048          # 4 grid steps of 512 points each (keeps >=2 steps for v7x's 2 TCs)

    kx, kp = jax.random.split(key)
    x = jax.random.uniform(kx, (N, in_features), jnp.float32, -1.0, 1.0)
    params = init_sirens_params(kp, in_features, out_features, layers,
                                is_first=False, omega_0=omega_0)
    prepped = prepare_params(params, omega_0)

    fwd = jax.jit(functools.partial(sirens_forward))
    out = fwd(x, prepped)
    out = jax.block_until_ready(out)

    # Pure-JAX reference (same math as the PyTorch module).
    ref = x
    for (w, b) in params:
        ref = jnp.sin(omega_0 * (ref @ w.T + b))

    assert out.shape == (N, out_features)
    assert jnp.allclose(out, ref, atol=1e-4, rtol=1e-4), float(jnp.abs(out - ref).max())

    print("KERNEL_OK")
</pallas_src>

<mosaic_0001>
module attributes {stable_mosaic.version = 11 : i64} {
  func.func @kernel(%arg0: i32, %arg1: memref<512x4xf32, #tpu.memory_space<vmem>>, %arg2: memref<32x4xf32, #tpu.memory_space<vmem>>, %arg3: memref<32x1xf32, #tpu.memory_space<vmem>>, %arg4: memref<32x32xf32, #tpu.memory_space<vmem>>, %arg5: memref<32x1xf32, #tpu.memory_space<vmem>>, %arg6: memref<8x32xf32, #tpu.memory_space<vmem>>, %arg7: memref<8x1xf32, #tpu.memory_space<vmem>>, %arg8: memref<512x8xf32, #tpu.memory_space<vmem>>) attributes {dimension_semantics = [#tpu.dimension_semantics<parallel>], iteration_bounds = array<i64: 4>, scalar_prefetch = 0 : i64, scratch_operands = 0 : i64, tpu.core_type = #tpu.core_type<tc>, window_params = [{transform_indices = @transform_0, window_bounds = array<i64: 512, 4>}, {pipeline_mode = #tpu.pipeline_mode<synchronous>, transform_indices = @transform_1, window_bounds = array<i64: 32, 4>}, {pipeline_mode = #tpu.pipeline_mode<synchronous>, transform_indices = @transform_2, window_bounds = array<i64: 32, 1>}, {pipeline_mode = #tpu.pipeline_mode<synchronous>, transform_indices = @transform_3, window_bounds = array<i64: 32, 32>}, {pipeline_mode = #tpu.pipeline_mode<synchronous>, transform_indices = @transform_4, window_bounds = array<i64: 32, 1>}, {pipeline_mode = #tpu.pipeline_mode<synchronous>, transform_indices = @transform_5, window_bounds = array<i64: 8, 32>}, {pipeline_mode = #tpu.pipeline_mode<synchronous>, transform_indices = @transform_6, window_bounds = array<i64: 8, 1>}, {transform_indices = @transform_7, window_bounds = array<i64: 512, 8>}]} {
    %c0 = arith.constant 0 : index
    %c0_0 = arith.constant 0 : index
    %0 = vector.load %arg1[%c0, %c0_0] : memref<512x4xf32, #tpu.memory_space<vmem>>, vector<512x4xf32>
    %1 = tpu.transpose %0, [1, 0] : vector<512x4xf32> -> vector<4x512xf32>
    %c0_1 = arith.constant 0 : index
    %c0_2 = arith.constant 0 : index
    %2 = vector.load %arg2[%c0_1, %c0_2] : memref<32x4xf32, #tpu.memory_space<vmem>>, vector<32x4xf32>
    %c0_3 = arith.constant 0 : index
    %c0_4 = arith.constant 0 : index
    %3 = vector.load %arg3[%c0_3, %c0_4] : memref<32x1xf32, #tpu.memory_space<vmem>>, vector<32x1xf32>
    %cst = arith.constant dense<0.000000e+00> : vector<32x512xf32>
    %4 = tpu.matmul %2, %1, %cst {dimension_numbers = #tpu.dot_dimension_numbers<[1], [0], [0], [1], [0, 0, 1, 1], [], []>} : vector<32x4xf32>, vector<4x512xf32>, vector<32x512xf32> -> vector<32x512xf32>
    %5 = vector.broadcast %3 : vector<32x1xf32> to vector<32x512xf32>
    %6 = arith.addf %4, %5 : vector<32x512xf32>
    %7 = math.sin %6 : vector<32x512xf32>
    %c0_5 = arith.constant 0 : index
    %c0_6 = arith.constant 0 : index
    %8 = vector.load %arg4[%c0_5, %c0_6] : memref<32x32xf32, #tpu.memory_space<vmem>>, vector<32x32xf32>
    %c0_7 = arith.constant 0 : index
    %c0_8 = arith.constant 0 : index
    %9 = vector.load %arg5[%c0_7, %c0_8] : memref<32x1xf32, #tpu.memory_space<vmem>>, vector<32x1xf32>
    %cst_9 = arith.constant dense<0.000000e+00> : vector<32x512xf32>
    %10 = tpu.matmul %8, %7, %cst_9 {dimension_numbers = #tpu.dot_dimension_numbers<[1], [0], [0], [1], [0, 0, 1, 1], [], []>} : vector<32x32xf32>, vector<32x512xf32>, vector<32x512xf32> -> vector<32x512xf32>
    %11 = vector.broadcast %9 : vector<32x1xf32> to vector<32x512xf32>
    %12 = arith.addf %10, %11 : vector<32x512xf32>
    %13 = math.sin %12 : vector<32x512xf32>
    %c0_10 = arith.constant 0 : index
    %c0_11 = arith.constant 0 : index
    %14 = vector.load %arg6[%c0_10, %c0_11] : memref<8x32xf32, #tpu.memory_space<vmem>>, vector<8x32xf32>
    %c0_12 = arith.constant 0 : index
    %c0_13 = arith.constant 0 : index
    %15 = vector.load %arg7[%c0_12, %c0_13] : memref<8x1xf32, #tpu.memory_space<vmem>>, vector<8x1xf32>
    %cst_14 = arith.constant dense<0.000000e+00> : vector<8x512xf32>
    %16 = tpu.matmul %14, %13, %cst_14 {dimension_numbers = #tpu.dot_dimension_numbers<[1], [0], [0], [1], [0, 0, 1, 1], [], []>} : vector<8x32xf32>, vector<32x512xf32>, vector<8x512xf32> -> vector<8x512xf32>
    %17 = vector.broadcast %15 : vector<8x1xf32> to vector<8x512xf32>
    %18 = arith.addf %16, %17 : vector<8x512xf32>
    %19 = math.sin %18 : vector<8x512xf32>
    %20 = tpu.transpose %19, [1, 0] : vector<8x512xf32> -> vector<512x8xf32>
    %c0_15 = arith.constant 0 : index
    %c0_16 = arith.constant 0 : index
    %21 = vector.load %arg8[%c0_15, %c0_16] : memref<512x8xf32, #tpu.memory_space<vmem>>, vector<512x8xf32>
    tpu.vector_store %arg8[%c0_15, %c0_16], %20 {strides = array<i32>} : memref<512x8xf32, #tpu.memory_space<vmem>>, vector<512x8xf32>,
    return
  }
  func.func @transform_0(%arg0: i32) -> (i32, i32) {
    %c0_i32 = arith.constant 0 : i32
    %c0_i32_0 = arith.constant 0 : i32
    return %arg0, %c0_i32 : i32, i32
  }
  func.func @transform_1(%arg0: i32) -> (i32, i32) {
    %c0_i32 = arith.constant 0 : i32
    %c0_i32_0 = arith.constant 0 : i32
    %c0_i32_1 = arith.constant 0 : i32
    return %c0_i32, %c0_i32_0 : i32, i32
  }
  func.func @transform_2(%arg0: i32) -> (i32, i32) {
    %c0_i32 = arith.constant 0 : i32
    %c0_i32_0 = arith.constant 0 : i32
    %c0_i32_1 = arith.constant 0 : i32
    return %c0_i32, %c0_i32_0 : i32, i32
  }
  func.func @transform_3(%arg0: i32) -> (i32, i32) {
    %c0_i32 = arith.constant 0 : i32
    %c0_i32_0 = arith.constant 0 : i32
    %c0_i32_1 = arith.constant 0 : i32
    return %c0_i32, %c0_i32_0 : i32, i32
  }
  func.func @transform_4(%arg0: i32) -> (i32, i32) {
    %c0_i32 = arith.constant 0 : i32
    %c0_i32_0 = arith.constant 0 : i32
    %c0_i32_1 = arith.constant 0 : i32
    return %c0_i32, %c0_i32_0 : i32, i32
  }
  func.func @transform_5(%arg0: i32) -> (i32, i32) {
    %c0_i32 = arith.constant 0 : i32
    %c0_i32_0 = arith.constant 0 : i32
    %c0_i32_1 = arith.constant 0 : i32
    return %c0_i32, %c0_i32_0 : i32, i32
  }
  func.func @transform_6(%arg0: i32) -> (i32, i32) {
    %c0_i32 = arith.constant 0 : i32
    %c0_i32_0 = arith.constant 0 : i32
    %c0_i32_1 = arith.constant 0 : i32
    return %c0_i32, %c0_i32_0 : i32, i32
  }
  func.func @transform_7(%arg0: i32) -> (i32, i32) {
    %c0_i32 = arith.constant 0 : i32
    %c0_i32_0 = arith.constant 0 : i32
    return %arg0, %c0_i32 : i32, i32
  }
}

</mosaic_0001>

<llo_original>
// kernel: sirens_forward.1
$region0: #{sirens_forward.1}
  #allocation0 [shape = 'u32[]', space=smem, size = 0x4, offset = 0x4, fixed_abs, tag = 'smem constant byte address 0x4 - core index']
  #allocation1 [shape = 'u32[144,128]{1,0:T(1,128)}', space=vmem, size = 0x12000, scoped, tag = 'internal scratch']
  %s0 = inlined_call_operand.vmem [shape: f32[2048,4], index: 0, kind: input, shape index: {}]
  %s1 = inlined_call_operand.vmem [shape: f32[32,4], index: 1, kind: input, shape index: {}]
  %s2 = inlined_call_operand.vmem [shape: f32[32,1], index: 2, kind: input, shape index: {}]
  %s3 = inlined_call_operand.vmem [shape: f32[32,32], index: 3, kind: input, shape index: {}]
  %s4 = inlined_call_operand.vmem [shape: f32[32,1], index: 4, kind: input, shape index: {}]
  %s5 = inlined_call_operand.vmem [shape: f32[8,32], index: 5, kind: input, shape index: {}]
  %s6 = inlined_call_operand.vmem [shape: f32[8,1], index: 6, kind: input, shape index: {}]
  %s7 = inlined_call_operand.vmem [shape: f32[2048,8], index: 7, kind: output, shape index: {}]
  %s8 = sld [smem:[#allocation0]]
  $region61: #{sirens_forward.1} parent=0
    _
  %s10 = ssub.s32 1, %s8
  %s11 = scalar_select 0, %s10, %s8
  loop: start=0, step=1, limit=6
  $region2: #{sirens_forward.1} parent=0 // loop_pre_header
    _
  $region3: #{sirens_forward.1} parent=0 // loop_header
    %s13 = sphi 0, %s17
    %p14 = scmp.ge.s32.totalorder %s13, 6
    %s23 = sphi 0, %s25
    %s26 = sphi 0, %s23
    %s27 = sphi 0, %s26
    %s43 = sphi 0, %s27
    %s47 = sphi 0, %s47
    %s49 = sphi 0, %s47
    %s50 = sphi 0, %s49
    %s64 = sphi 0, %s50
    %s68 = sphi 0, %s68
    %s70 = sphi 0, %s68
    %s71 = sphi 0, %s70
    %s85 = sphi 0, %s71
    %s89 = sphi 0, %s89
    %s91 = sphi 0, %s89
    %s92 = sphi 0, %s91
    %s106 = sphi 0, %s92
    %s110 = sphi 0, %s110
    %s112 = sphi 0, %s110
    %s113 = sphi 0, %s112
    %s127 = sphi 0, %s113
    %s131 = sphi 0, %s131
    %s133 = sphi 0, %s131
    %s134 = sphi 0, %s133
    %s148 = sphi 0, %s134
    %s152 = sphi 0, %s152
    %s154 = sphi 0, %s152
    %s155 = sphi 0, %s154
    %s169 = sphi 0, %s155
    %s175 = sphi 0, %s177
    %s178 = sphi 0, %s175
    %s179 = sphi 0, %s178
    %s195 = sphi 0, %s179
  $region4: #{sirens_forward.1} parent=0 // loop_header_branch
    %16 = sbr.rel (%p14) target = $region8
  $region5: #{sirens_forward.1} parent=0 // loop_body
    %s18 = ssub.s32 %s13, 1
    %s19 = ssub.s32 %s13, 2
    %s20 = sadd.s32 %s13, 1
    %s21 = ssub.s32 %s13, %s20
    %p22 = scmp.eq.s32.totalorder %s21, 0
    %s24 = sadd.s32 %s23, 1
    %s25 = scalar_select %p22, %s23, %s24
    %p28 = pneg %p22
    %p29 = scmp.eq.s32.totalorder %s13, 3
    %p30 = por %p28, %p29
    %p31 = scmp.ne.s32.totalorder %s23, %s26
    %p32 = scmp.eq.s32.totalorder %s13, 0
    %p33 = por %p31, %p32
    %p34 = scmp.ne.s32.totalorder %s23, %s26
    %p35 = scmp.eq.s32.totalorder %s18, 3
    %p36 = por %p34, %p35
    %p37 = scmp.ne.s32.totalorder %s26, %s27
    %p38 = scmp.eq.s32.totalorder %s18, 0
    %p39 = por %p37, %p38
    %p40 = scmp.ne.s32.totalorder %s26, %s27
    %p41 = scmp.eq.s32.totalorder %s19, 3
    %p42 = por %p40, %p41
    %p44 = scmp.ne.s32.totalorder %s27, %s43
    %p45 = scmp.eq.s32.totalorder %s19, 0
    %p46 = por %p44, %p45
    %s48 = sadd.s32 %s47, 1
    %p51 = scmp.eq.s32.totalorder %s13, 3
    %p52 = scmp.ne.s32.totalorder %s47, %s49
    %p53 = scmp.eq.s32.totalorder %s13, 0
    %p54 = por %p52, %p53
    %p55 = scmp.ne.s32.totalorder %s47, %s49
    %p56 = scmp.eq.s32.totalorder %s18, 3
    %p57 = por %p55, %p56
    %p58 = scmp.ne.s32.totalorder %s49, %s50
    %p59 = scmp.eq.s32.totalorder %s18, 0
    %p60 = por %p58, %p59
    %p61 = scmp.ne.s32.totalorder %s49, %s50
    %p62 = scmp.eq.s32.totalorder %s19, 3
    %p63 = por %p61, %p62
    %p65 = scmp.ne.s32.totalorder %s50, %s64
    %p66 = scmp.eq.s32.totalorder %s19, 0
    %p67 = por %p65, %p66
    %s69 = sadd.s32 %s68, 1
    %p72 = scmp.eq.s32.totalorder %s13, 3
    %p73 = scmp.ne.s32.totalorder %s68, %s70
    %p74 = scmp.eq.s32.totalorder %s13, 0
    %p75 = por %p73, %p74
    %p76 = scmp.ne.s32.totalorder %s68, %s70
    %p77 = scmp.eq.s32.totalorder %s18, 3
    %p78 = por %p76, %p77
    %p79 = scmp.ne.s32.totalorder %s70, %s71
    %p80 = scmp.eq.s32.totalorder %s18, 0
    %p81 = por %p79, %p80
    %p82 = scmp.ne.s32.totalorder %s70, %s71
    %p83 = scmp.eq.s32.totalorder %s19, 3
    %p84 = por %p82, %p83
    %p86 = scmp.ne.s32.totalorder %s71, %s85
    %p87 = scmp.eq.s32.totalorder %s19, 0
    %p88 = por %p86, %p87
    %s90 = sadd.s32 %s89, 1
    %p93 = scmp.eq.s32.totalorder %s13, 3
    %p94 = scmp.ne.s32.totalorder %s89, %s91
    %p95 = scmp.eq.s32.totalorder %s13, 0
    %p96 = por %p94, %p95
    %p97 = scmp.ne.s32.totalorder %s89, %s91
    %p98 = scmp.eq.s32.totalorder %s18, 3
    %p99 = por %p97, %p98
    %p100 = scmp.ne.s32.totalorder %s91, %s92
    %p101 = scmp.eq.s32.totalorder %s18, 0
    %p102 = por %p100, %p101
    %p103 = scmp.ne.s32.totalorder %s91, %s92
    %p104 = scmp.eq.s32.totalorder %s19, 3
    %p105 = por %p103, %p104
    %p107 = scmp.ne.s32.totalorder %s92, %s106
    %p108 = scmp.eq.s32.totalorder %s19, 0
    %p109 = por %p107, %p108
    %s111 = sadd.s32 %s110, 1
    %p114 = scmp.eq.s32.totalorder %s13, 3
    %p115 = scmp.ne.s32.totalorder %s110, %s112
    %p116 = scmp.eq.s32.totalorder %s13, 0
    %p117 = por %p115, %p116
    %p118 = scmp.ne.s32.totalorder %s110, %s112
    %p119 = scmp.eq.s32.totalorder %s18, 3
    %p120 = por %p118, %p119
    %p121 = scmp.ne.s32.totalorder %s112, %s113
    %p122 = scmp.eq.s32.totalorder %s18, 0
    %p123 = por %p121, %p122
    %p124 = scmp.ne.s32.totalorder %s112, %s113
    %p125 = scmp.eq.s32.totalorder %s19, 3
    %p126 = por %p124, %p125
    %p128 = scmp.ne.s32.totalorder %s113, %s127
    %p129 = scmp.eq.s32.totalorder %s19, 0
    %p130 = por %p128, %p129
    %s132 = sadd.s32 %s131, 1
    %p135 = scmp.eq.s32.totalorder %s13, 3
    %p136 = scmp.ne.s32.totalorder %s131, %s133
    %p137 = scmp.eq.s32.totalorder %s13, 0
    %p138 = por %p136, %p137
    %p139 = scmp.ne.s32.totalorder %s131, %s133
    %p140 = scmp.eq.s32.totalorder %s18, 3
    %p141 = por %p139, %p140
    %p142 = scmp.ne.s32.totalorder %s133, %s134
    %p143 = scmp.eq.s32.totalorder %s18, 0
    %p144 = por %p142, %p143
    %p145 = scmp.ne.s32.totalorder %s133, %s134
    %p146 = scmp.eq.s32.totalorder %s19, 3
    %p147 = por %p145, %p146
    %p149 = scmp.ne.s32.totalorder %s134, %s148
    %p150 = scmp.eq.s32.totalorder %s19, 0
    %p151 = por %p149, %p150
    %s153 = sadd.s32 %s152, 1
    %p156 = scmp.eq.s32.totalorder %s13, 3
    %p157 = scmp.ne.s32.totalorder %s152, %s154
    %p158 = scmp.eq.s32.totalorder %s13, 0
    %p159 = por %p157, %p158
    %p160 = scmp.ne.s32.totalorder %s152, %s154
    %p161 = scmp.eq.s32.totalorder %s18, 3
    %p162 = por %p160, %p161
    %p163 = scmp.ne.s32.totalorder %s154, %s155
    %p164 = scmp.eq.s32.totalorder %s18, 0
    %p165 = por %p163, %p164
    %p166 = scmp.ne.s32.totalorder %s154, %s155
    %p167 = scmp.eq.s32.totalorder %s19, 3
    %p168 = por %p166, %p167
    %p170 = scmp.ne.s32.totalorder %s155, %s169
    %p171 = scmp.eq.s32.totalorder %s19, 0
    %p172 = por %p170, %p171
    %s173 = ssub.s32 %s13, %s20
    %p174 = scmp.eq.s32.totalorder %s173, 0
    %s176 = sadd.s32 %s175, 1
    %s177 = scalar_select %p174, %s175, %s176
    %p180 = pneg %p174
    %p181 = scmp.eq.s32.totalorder %s13, 3
    %p182 = por %p180, %p181
    %p183 = scmp.ne.s32.totalorder %s175, %s178
    %p184 = scmp.eq.s32.totalorder %s13, 0
    %p185 = por %p183, %p184
    %p186 = scmp.ne.s32.totalorder %s175, %s178
    %p187 = scmp.eq.s32.totalorder %s18, 3
    %p188 = por %p186, %p187
    %p189 = scmp.ne.s32.totalorder %s178, %s179
    %p190 = scmp.eq.s32.totalorder %s18, 0
    %p191 = por %p189, %p190
    %p192 = scmp.ne.s32.totalorder %s178, %s179
    %p193 = scmp.eq.s32.totalorder %s19, 3
    %p194 = por %p192, %p193
    %p196 = scmp.ne.s32.totalorder %s179, %s195
    %p197 = scmp.eq.s32.totalorder %s19, 0
    %p198 = por %p196, %p197
    %p199 = scmp.le.s32.totalorder 1, %s13
    %p200 = scmp.lt.s32.totalorder %s13, 5
    %p201 = pnand %p199, %p200
    %p202 = pneg %p201
    // Predicated region
    $region9: #{sirens_forward.1} parent=5 // pred_check
      _
    $region10: #{sirens_forward.1} parent=5 // pred_check_branch
      %204 = sbr.rel (%p201) target = $region12
    $region11: #{sirens_forward.1} parent=5 // pred_region
      %s205 = ssub.s32 %s13, 1
      // Predicated region
      $region13: #{sirens_forward.1} parent=11 // pred_check
        %p206 = pneg %p60
      $region14: #{sirens_forward.1} parent=11 // pred_check_branch
        %208 = sbr.rel (%p206) target = $region16
      $region15: #{sirens_forward.1} parent=11 // pred_region
        _
      $region16: #{sirens_forward.1} parent=11 // pred_fallthru
        _
      // Predicated region
      $region17: #{sirens_forward.1} parent=11 // pred_check
        %p209 = pneg %p81
      $region18: #{sirens_forward.1} parent=11 // pred_check_branch
        %211 = sbr.rel (%p209) target = $region20
      $region19: #{sirens_forward.1} parent=11 // pred_region
        _
      $region20: #{sirens_forward.1} parent=11 // pred_fallthru
        _
      // Predicated region
      $region21: #{sirens_forward.1} parent=11 // pred_check
        %p212 = pneg %p102
      $region22: #{sirens_forward.1} parent=11 // pred_check_branch
        %214 = sbr.rel (%p212) target = $region24
      $region23: #{sirens_forward.1} parent=11 // pred_region
        _
      $region24: #{sirens_forward.1} parent=11 // pred_fallthru
        _
      // Predicated region
      $region25: #{sirens_forward.1} parent=11 // pred_check
        %p215 = pneg %p123
      $region26: #{sirens_forward.1} parent=11 // pred_check_branch
        %217 = sbr.rel (%p215) target = $region28
      $region27: #{sirens_forward.1} parent=11 // pred_region
        _
      $region28: #{sirens_forward.1} parent=11 // pred_fallthru
        _
      // Predicated region
      $region29: #{sirens_forward.1} parent=11 // pred_check
        %p218 = pneg %p144
      $region30: #{sirens_forward.1} parent=11 // pred_check_branch
        %220 = sbr.rel (%p218) target = $region32
      $region31: #{sirens_forward.1} parent=11 // pred_region
        _
      $region32: #{sirens_forward.1} parent=11 // pred_fallthru
        _
      // Predicated region
      $region33: #{sirens_forward.1} parent=11 // pred_check
        %p221 = pneg %p165
      $region34: #{sirens_forward.1} parent=11 // pred_check_branch
        %223 = sbr.rel (%p221) target = $region36
      $region35: #{sirens_forward.1} parent=11 // pred_region
        _
      $region36: #{sirens_forward.1} parent=11 // pred_fallthru
        _
    $region12: #{sirens_forward.1} parent=5 // pred_fallthru
      _
    %p224 = scmp.lt.s32.totalorder %s13, 4
    // Predicated region
    $region37: #{sirens_forward.1} parent=5 // pred_check
      %p225 = pneg %p224
    $region38: #{sirens_forward.1} parent=5 // pred_check_branch
      %227 = sbr.rel (%p225) target = $region40
    $region39: #{sirens_forward.1} parent=5 // pred_region
      // Predicated region
      $region41: #{sirens_forward.1} parent=39 // pred_check
        %p228 = pneg %p33
      $region42: #{sirens_forward.1} parent=39 // pred_check_branch
        %230 = sbr.rel (%p228) target = $region44
      $region43: #{sirens_forward.1} parent=39 // pred_region
        %s231 = smul.u32 64, %s13
        %p232 = scmp.lt.s32.totalorder %s231, 255
        %s233 = scalar_select %p232, %s231, 255
        %s234 = smul.addr %s233, 8
        %s235 = scalar_lea.vmem %s0, %s234
        %s236 = smul.u32 64, %s13
      $region44: #{sirens_forward.1} parent=39 // pred_fallthru
        _
    $region40: #{sirens_forward.1} parent=5 // pred_fallthru
      _
    %p237 = scmp.le.s32.totalorder 1, %s13
    %p238 = scmp.lt.s32.totalorder %s13, 5
    %p239 = pnand %p237, %p238
    %p240 = pneg %p239
    // Predicated region
    $region45: #{sirens_forward.1} parent=5 // pred_check
      _
    $region46: #{sirens_forward.1} parent=5 // pred_check_branch
      %242 = sbr.rel (%p239) target = $region48
    $region47: #{sirens_forward.1} parent=5 // pred_region
      %s243 = ssub.s32 %s13, 1
      %s244 = smul.u32 64, %s18
      %p245 = scmp.lt.s32.totalorder %s244, 255
      %s246 = scalar_select %p245, %s244, 255
      %s247 = smul.addr %s246, 8
      %s248 = scalar_lea.vmem %s0, %s247
      %p249 = pneg %p39
      %p250 = pneg %p36
      %p251 = pneg %p60
      %p252 = pneg %p57
      %p253 = pneg %p81
      %p254 = pneg %p78
      %p255 = pneg %p102
      %p256 = pneg %p99
      %p257 = pneg %p123
      %p258 = pneg %p120
      %p259 = pneg %p144
      %p260 = pneg %p141
      %p261 = pneg %p165
      %p262 = pneg %p162
      %p263 = pneg %p191
      %p264 = pneg %p188
      %s265 = smul.u32 64, %s18
      %p266 = scmp.lt.s32.totalorder %s265, 255
      %s267 = scalar_select %p266, %s265, 255
      %s268 = smul.addr %s267, 8
      %s269 = scalar_lea.vmem %s7, %s268
      %s270 = smul.u32 64, %s18
      %p271 = scmp.lt.s32.totalorder %s270, 255
      %s272 = scalar_select %p271, %s270, 255
      %s273 = smul.addr %s272, 8
      %s274 = scalar_lea.vmem %s0, %s273
      %s275 = smul.u32 64, %s18
      %s276 = smul.u32 64, %s18
      %p277 = scmp.lt.s32.totalorder %s276, 255
      %s278 = scalar_select %p277, %s276, 255
      %s279 = smul.addr %s278, 8
      %s280 = scalar_lea.vmem %s7, %s279
      %s281 = smul.u32 64, %s18
      %v282 = vld [vmem:[%s274] sm:$0xff]
      %v283 = vld [vmem:[%s274 + $0x8] sm:$0xff]
      %v284 = vld [vmem:[%s274 + $0x10] sm:$0xff]
      %v285 = vld [vmem:[%s274 + $0x18] sm:$0xff]
      %v286 = vld [vmem:[%s274 + $0x20] sm:$0xff]
      %v287 = vld [vmem:[%s274 + $0x28] sm:$0xff]
      %v288 = vld [vmem:[%s274 + $0x30] sm:$0xff]
      %v289 = vld [vmem:[%s274 + $0x38] sm:$0xff]
      %v290 = vld [vmem:[%s274 + $0x40] sm:$0xff]
      %v291 = vld [vmem:[%s274 + $0x48] sm:$0xff]
      %v292 = vld [vmem:[%s274 + $0x50] sm:$0xff]
      %v293 = vld [vmem:[%s274 + $0x58] sm:$0xff]
      %v294 = vld [vmem:[%s274 + $0x60] sm:$0xff]
      %v295 = vld [vmem:[%s274 + $0x68] sm:$0xff]
      %v296 = vld [vmem:[%s274 + $0x70] sm:$0xff]
      %v297 = vld [vmem:[%s274 + $0x78] sm:$0xff]
      %v298 = vld [vmem:[%s274 + $0x80] sm:$0xff]
      %v299 = vld [vmem:[%s274 + $0x88] sm:$0xff]
      %v300 = vld [vmem:[%s274 + $0x90] sm:$0xff]
      %v301 = vld [vmem:[%s274 + $0x98] sm:$0xff]
      %v302 = vld [vmem:[%s274 + $0xa0] sm:$0xff]
      %v303 = vld [vmem:[%s274 + $0xa8] sm:$0xff]
      %v304 = vld [vmem:[%s274 + $0xb0] sm:$0xff]
      %v305 = vld [vmem:[%s274 + $0xb8] sm:$0xff]
      %v306 = vld [vmem:[%s274 + $0xc0] sm:$0xff]
      %v307 = vld [vmem:[%s274 + $0xc8] sm:$0xff]
      %v308 = vld [vmem:[%s274 + $0xd0] sm:$0xff]
      %v309 = vld [vmem:[%s274 + $0xd8] sm:$0xff]
      %v310 = vld [vmem:[%s274 + $0xe0] sm:$0xff]
      %v311 = vld [vmem:[%s274 + $0xe8] sm:$0xff]
      %v312 = vld [vmem:[%s274 + $0xf0] sm:$0xff]
      %v313 = vld [vmem:[%s274 + $0xf8] sm:$0xff]
      %v314 = vld [vmem:[%s274 + $0x100] sm:$0xff]
      %v315 = vld [vmem:[%s274 + $0x108] sm:$0xff]
      %v316 = vld [vmem:[%s274 + $0x110] sm:$0xff]
      %v317 = vld [vmem:[%s274 + $0x118] sm:$0xff]
      %v318 = vld [vmem:[%s274 + $0x120] sm:$0xff]
      %v319 = vld [vmem:[%s274 + $0x128] sm:$0xff]
      %v320 = vld [vmem:[%s274 + $0x130] sm:$0xff]
      %v321 = vld [vmem:[%s274 + $0x138] sm:$0xff]
      %v322 = vld [vmem:[%s274 + $0x140] sm:$0xff]
      %v323 = vld [vmem:[%s274 + $0x148] sm:$0xff]
      %v324 = vld [vmem:[%s274 + $0x150] sm:$0xff]
      %v325 = vld [vmem:[%s274 + $0x158] sm:$0xff]
      %v326 = vld [vmem:[%s274 + $0x160] sm:$0xff]
      %v327 = vld [vmem:[%s274 + $0x168] sm:$0xff]
      %v328 = vld [vmem:[%s274 + $0x170] sm:$0xff]
      %v329 = vld [vmem:[%s274 + $0x178] sm:$0xff]
      %v330 = vld [vmem:[%s274 + $0x180] sm:$0xff]
      %v331 = vld [vmem:[%s274 + $0x188] sm:$0xff]
      %v332 = vld [vmem:[%s274 + $0x190] sm:$0xff]
      %v333 = vld [vmem:[%s274 + $0x198] sm:$0xff]
      %v334 = vld [vmem:[%s274 + $0x1a0] sm:$0xff]
      %v335 = vld [vmem:[%s274 + $0x1a8] sm:$0xff]
      %v336 = vld [vmem:[%s274 + $0x1b0] sm:$0xff]
      %v337 = vld [vmem:[%s274 + $0x1b8] sm:$0xff]
      %v338 = vld [vmem:[%s274 + $0x1c0] sm:$0xff]
      %v339 = vld [vmem:[%s274 + $0x1c8] sm:$0xff]
      %v340 = vld [vmem:[%s274 + $0x1d0] sm:$0xff]
      %v341 = vld [vmem:[%s274 + $0x1d8] sm:$0xff]
      %v342 = vld [vmem:[%s274 + $0x1e0] sm:$0xff]
      %v343 = vld [vmem:[%s274 + $0x1e8] sm:$0xff]
      %v344 = vld [vmem:[%s274 + $0x1f0] sm:$0xff]
      %v345 = vld [vmem:[%s274 + $0x1f8] sm:$0xff]
      %v346 = vld [vmem:[%s1] sm:$0xff]
      %v347 = vld [vmem:[%s1 + $0x8] sm:$0xff]
      %v348 = vld [vmem:[%s1 + $0x10] sm:$0xff]
      %v349 = vld [vmem:[%s1 + $0x18] sm:$0xff]
      %v350 = vld [vmem:[%s2] sm:$0xff]
      %v351 = vld [vmem:[%s2 + $0x8] sm:$0xff]
      %v352 = vld [vmem:[%s2 + $0x10] sm:$0xff]
      %v353 = vld [vmem:[%s2 + $0x18] sm:$0xff]
      %355 = vset.pattern.permute.xlu0 0
      %356 = vperm.xlu0 %355, %v350
      %v357 = vpop.permute.xlu0 %356
      %360 = vset.pattern.permute.xlu0 0
      %361 = vperm.xlu0 %360, %v351
      %v362 = vpop.permute.xlu0 %361
      %365 = vset.pattern.permute.xlu0 0
      %366 = vperm.xlu0 %365, %v352
      %v367 = vpop.permute.xlu0 %366
      %370 = vset.pattern.permute.xlu0 0
      %371 = vperm.xlu0 %370, %v353
      %v372 = vpop.permute.xlu0 %371
      %vm374 = vcmask 31744
      %v376 = vsel %vm374, %v346, 0
      %v379 = vsel %vm374, %v347, 0
      %v382 = vsel %vm374, %v348, 0
      %v385 = vsel %vm374, %v349, 0
      %v388 = vsel %vm374, %v282, 0
      %v391 = vsel %vm374, %v283, 0
      %v394 = vsel %vm374, %v284, 0
      %v397 = vsel %vm374, %v285, 0
      %v400 = vsel %vm374, %v286, 0
      %v403 = vsel %vm374, %v287, 0
      %v406 = vsel %vm374, %v288, 0
      %v409 = vsel %vm374, %v289, 0
      %v412 = vsel %vm374, %v290, 0
      %v415 = vsel %vm374, %v291, 0
      %v418 = vsel %vm374, %v292, 0
      %v421 = vsel %vm374, %v293, 0
      %v424 = vsel %vm374, %v294, 0
      %v427 = vsel %vm374, %v295, 0
      %v430 = vsel %vm374, %v296, 0
      %v433 = vsel %vm374, %v297, 0
      %v436 = vsel %vm374, %v298, 0
      %v439 = vsel %vm374, %v299, 0
      %v442 = vsel %vm374, %v300, 0
      %v445 = vsel %vm374, %v301, 0
      %v448 = vsel %vm374, %v302, 0
      %v451 = vsel %vm374, %v303, 0
      %v454 = vsel %vm374, %v304, 0
      %v457 = vsel %vm374, %v305, 0
      %v460 = vsel %vm374, %v306, 0
      %v463 = vsel %vm374, %v307, 0
      %v466 = vsel %vm374, %v308, 0
      %v469 = vsel %vm374, %v309, 0
      %v472 = vsel %vm374, %v310, 0
      %v475 = vsel %vm374, %v311, 0
      %v478 = vsel %vm374, %v312, 0
      %v481 = vsel %vm374, %v313, 0
      %v484 = vsel %vm374, %v314, 0
      %v487 = vsel %vm374, %v315, 0
      %v490 = vsel %vm374, %v316, 0
      %v493 = vsel %vm374, %v317, 0
      %v496 = vsel %vm374, %v318, 0
      %v499 = vsel %vm374, %v319, 0
      %v502 = vsel %vm374, %v320, 0
      %v505 = vsel %vm374, %v321, 0
      %v508 = vsel %vm374, %v322, 0
      %v511 = vsel %vm374, %v323, 0
      %v514 = vsel %vm374, %v324, 0
      %v517 = vsel %vm374, %v325, 0
      %v520 = vsel %vm374, %v326, 0
      %v523 = vsel %vm374, %v327, 0
      %v526 = vsel %vm374, %v328, 0
      %v529 = vsel %vm374, %v329, 0
      %v532 = vsel %vm374, %v330, 0
      %v535 = vsel %vm374, %v331, 0
      %v538 = vsel %vm374, %v332, 0
      %v541 = vsel %vm374, %v333, 0
      %v544 = vsel %vm374, %v334, 0
      %v547 = vsel %vm374, %v335, 0
      %v550 = vsel %vm374, %v336, 0
      %v553 = vsel %vm374, %v337, 0
      %v556 = vsel %vm374, %v338, 0
      %v559 = vsel %vm374, %v339, 0
      %v562 = vsel %vm374, %v340, 0
      %v565 = vsel %vm374, %v341, 0
      %v568 = vsel %vm374, %v342, 0
      %v571 = vsel %vm374, %v343, 0
      %v574 = vsel %vm374, %v344, 0
      %v577 = vsel %vm374, %v345, 0
      %579 = vmatprep.subr.mxu0 0.0
      %580 = vmatpush1.xpose.msra.mxu0 %v388
      %581 = vmatprep.subr.mxu0 0.0
      %582 = vmatpush1.xpose.msra.mxu0 %v391
      %583 = vmatprep.subr.mxu0 0.0
      %584 = vmatpush1.xpose.msra.mxu0 %v394
      %585 = vmatprep.subr.mxu0 0.0
      %586 = vmatpush1.xpose.msra.mxu0 %v397
      %587 = vmatprep.subr.mxu0 0.0
      %588 = vmatpush1.xpose.msra.mxu0 %v400
      %589 = vmatprep.subr.mxu0 0.0
      %590 = vmatpush1.xpose.msra.mxu0 %v403
      %591 = vmatprep.subr.mxu0 0.0
      %592 = vmatpush1.xpose.msra.mxu0 %v406
      %593 = vmatprep.subr.mxu0 0.0
      %594 = vmatpush1.xpose.msra.mxu0 %v409
      %595 = vmatprep.subr.mxu0 0.0
      %596 = vmatpush1.xpose.msra.mxu0 %v412
      %597 = vmatprep.subr.mxu0 0.0
      %598 = vmatpush1.xpose.msra.mxu0 %v415
      %599 = vmatprep.subr.mxu0 0.0
      %600 = vmatpush1.xpose.msra.mxu0 %v418
      %601 = vmatprep.subr.mxu0 0.0
      %602 = vmatpush1.xpose.msra.mxu0 %v421
      %603 = vmatprep.subr.mxu0 0.0
      %604 = vmatpush1.xpose.msra.mxu0 %v424
      %605 = vmatprep.subr.mxu0 0.0
      %606 = vmatpush1.xpose.msra.mxu0 %v427
      %607 = vmatprep.subr.mxu0 0.0
      %608 = vmatpush1.xpose.msra.mxu0 %v430
      %609 = vmatprep.subr.mxu0 0.0
      %610 = vmatpush1.xpose.msra.mxu0 %v433
      %611 = vmatprep.subr.mxu0 0.0
      %612 = vmatpush1.xpose.msra.mxu0 %v436
      %613 = vmatprep.subr.mxu0 0.0
      %614 = vmatpush1.xpose.msra.mxu0 %v439
      %615 = vmatprep.subr.mxu0 0.0
      %616 = vmatpush1.xpose.msra.mxu0 %v442
      %617 = vmatprep.subr.mxu0 0.0
      %618 = vmatpush1.xpose.msra.mxu0 %v445
      %619 = vmatprep.subr.mxu0 0.0
      %620 = vmatpush1.xpose.msra.mxu0 %v448
      %621 = vmatprep.subr.mxu0 0.0
      %622 = vmatpush1.xpose.msra.mxu0 %v451
      %623 = vmatprep.subr.mxu0 0.0
      %624 = vmatpush1.xpose.msra.mxu0 %v454
      %625 = vmatprep.subr.mxu0 0.0
      %626 = vmatpush1.xpose.msra.mxu0 %v457
      %627 = vmatprep.subr.mxu0 0.0
      %628 = vmatpush1.xpose.msra.mxu0 %v460
      %629 = vmatprep.subr.mxu0 0.0
      %630 = vmatpush1.xpose.msra.mxu0 %v463
      %631 = vmatprep.subr.mxu0 0.0
      %632 = vmatpush1.xpose.msra.mxu0 %v466
      %633 = vmatprep.subr.mxu0 0.0
      %634 = vmatpush1.xpose.msra.mxu0 %v469
      %635 = vmatprep.subr.mxu0 0.0
      %636 = vmatpush1.xpose.msra.mxu0 %v472
      %637 = vmatprep.subr.mxu0 0.0
      %638 = vmatpush1.xpose.msra.mxu0 %v475
      %639 = vmatprep.subr.mxu0 0.0
      %640 = vmatpush1.xpose.msra.mxu0 %v478
      %641 = vmatprep.subr.mxu0 0.0
      %642 = vmatpush1.xpose.msra.mxu0 %v481
      %643 = vmatprep.mubr.f32.mxu0 0.0
      %644 = vmatmul.mubr.f32.gmra.mrb[0].mxu0 %v376
      %v645 = vpop.f32.mrb[0].mxu0
      %v646 = vadd.f32 %v357, %v645
      %v647 = vpop.f32.mrb[0].mxu0
      %v648 = vadd.f32 %v357, %v647
      %649 = vmatprep.mubr.f32.mxu0 0.0
      %650 = vmatmul.mubr.f32.gmra.mrb[0].mxu0 %v379
      %v651 = vpop.f32.mrb[0].mxu0
      %v652 = vadd.f32 %v362, %v651
      %v653 = vpop.f32.mrb[0].mxu0
      %v654 = vadd.f32 %v362, %v653
      %655 = vmatprep.mubr.f32.mxu0 0.0
      %656 = vmatmul.mubr.f32.gmra.mrb[0].mxu0 %v382
      %v657 = vpop.f32.mrb[0].mxu0
      %v658 = vadd.f32 %v367, %v657
      %v659 = vpop.f32.mrb[0].mxu0
      %v660 = vadd.f32 %v367, %v659
      %661 = vmatprep.mubr.f32.mxu0 0.0
      %662 = vmatmul.mubr.f32.gmra.mrb[0].mxu0 %v385
      %v663 = vpop.f32.mrb[0].mxu0
      %v664 = vadd.f32 %v372, %v663
      %v665 = vpop.f32.mrb[0].mxu0
      %v666 = vadd.f32 %v372, %v665
      %667 = vdwg.mxu0
      %668 = vmatprep.subr.mxu0 0.0
      %669 = vmatpush1.xpose.msra.mxu0 %v484
      %670 = vmatprep.subr.mxu0 0.0
      %671 = vmatpush1.xpose.msra.mxu0 %v487
      %672 = vmatprep.subr.mxu0 0.0
      %673 = vmatpush1.xpose.msra.mxu0 %v490
      %674 = vmatprep.subr.mxu0 0.0
      %675 = vmatpush1.xpose.msra.mxu0 %v493
      %676 = vmatprep.subr.mxu0 0.0
      %677 = vmatpush1.xpose.msra.mxu0 %v496
      %678 = vmatprep.subr.mxu0 0.0
      %679 = vmatpush1.xpose.msra.mxu0 %v499
      %680 = vmatprep.subr.mxu0 0.0
      %681 = vmatpush1.xpose.msra.mxu0 %v502
      %682 = vmatprep.subr.mxu0 0.0
      %683 = vmatpush1.xpose.msra.mxu0 %v505
      %684 = vmatprep.subr.mxu0 0.0
      %685 = vmatpush1.xpose.msra.mxu0 %v508
      %686 = vmatprep.subr.mxu0 0.0
      %687 = vmatpush1.xpose.msra.mxu0 %v511
      %688 = vmatprep.subr.mxu0 0.0
      %689 = vmatpush1.xpose.msra.mxu0 %v514
      %690 = vmatprep.subr.mxu0 0.0
      %691 = vmatpush1.xpose.msra.mxu0 %v517
      %692 = vmatprep.subr.mxu0 0.0
      %693 = vmatpush1.xpose.msra.mxu0 %v520
      %694 = vmatprep.subr.mxu0 0.0
      %695 = vmatpush1.xpose.msra.mxu0 %v523
      %696 = vmatprep.subr.mxu0 0.0
      %697 = vmatpush1.xpose.msra.mxu0 %v526
      %698 = vmatprep.subr.mxu0 0.0
      %699 = vmatpush1.xpose.msra.mxu0 %v529
      %700 = vmatprep.subr.mxu0 0.0
      %701 = vmatpush1.xpose.msra.mxu0 %v532
      %702 = vmatprep.subr.mxu0 0.0
      %703 = vmatpush1.xpose.msra.mxu0 %v535
      %704 = vmatprep.subr.mxu0 0.0
      %705 = vmatpush1.xpose.msra.mxu0 %v538
      %706 = vmatprep.subr.mxu0 0.0
      %707 = vmatpush1.xpose.msra.mxu0 %v541
      %708 = vmatprep.subr.mxu0 0.0
      %709 = vmatpush1.xpose.msra.mxu0 %v544
      %710 = vmatprep.subr.mxu0 0.0
      %711 = vmatpush1.xpose.msra.mxu0 %v547
      %712 = vmatprep.subr.mxu0 0.0
      %713 = vmatpush1.xpose.msra.mxu0 %v550
      %714 = vmatprep.subr.mxu0 0.0
      %715 = vmatpush1.xpose.msra.mxu0 %v553
      %716 = vmatprep.subr.mxu0 0.0
      %717 = vmatpush1.xpose.msra.mxu0 %v556
      %718 = vmatprep.subr.mxu0 0.0
      %719 = vmatpush1.xpose.msra.mxu0 %v559
      %720 = vmatprep.subr.mxu0 0.0
      %721 = vmatpush1.xpose.msra.mxu0 %v562
      %722 = vmatprep.subr.mxu0 0.0
      %723 = vmatpush1.xpose.msra.mxu0 %v565
      %724 = vmatprep.subr.mxu0 0.0
      %725 = vmatpush1.xpose.msra.mxu0 %v568
      %726 = vmatprep.subr.mxu0 0.0
      %727 = vmatpush1.xpose.msra.mxu0 %v571
      %728 = vmatprep.subr.mxu0 0.0
      %729 = vmatpush1.xpose.msra.mxu0 %v574
      %730 = vmatprep.subr.mxu0 0.0
      %731 = vmatpush1.xpose.msra.mxu0 %v577
      %732 = vmatprep.mubr.f32.mxu0 0.0
      %733 = vmatmul.mubr.f32.gmra.mrb[0].mxu0 %v376
      %v734 = vpop.f32.mrb[0].mxu0
      %v735 = vadd.f32 %v357, %v734
      %v736 = vpop.f32.mrb[0].mxu0
      %v737 = vadd.f32 %v357, %v736
      %738 = vmatprep.mubr.f32.mxu0 0.0
      %739 = vmatmul.mubr.f32.gmra.mrb[0].mxu0 %v379
      %v740 = vpop.f32.mrb[0].mxu0
      %v741 = vadd.f32 %v362, %v740
      %v742 = vpop.f32.mrb[0].mxu0
      %v743 = vadd.f32 %v362, %v742
      %744 = vmatprep.mubr.f32.mxu0 0.0
      %745 = vmatmul.mubr.f32.gmra.mrb[0].mxu0 %v382
      %v746 = vpop.f32.mrb[0].mxu0
      %v747 = vadd.f32 %v367, %v746
      %v748 = vpop.f32.mrb[0].mxu0
      %v749 = vadd.f32 %v367, %v748
      %750 = vmatprep.mubr.f32.mxu0 0.0
      %751 = vmatmul.mubr.f32.gmra.mrb[0].mxu0 %v385
      %v752 = vpop.f32.mrb[0].mxu0
      %v753 = vadd.f32 %v372, %v752
      %v754 = vpop.f32.mrb[0].mxu0
      %v755 = vadd.f32 %v372, %v754
      %756 = vdwg.mxu0
      %v757 = vand.u32 2147483647, %v646
      %vm758 = vcmp.le.f32.partialorder %v757, 0.7853982
      %vm759 = vcmp.lt.s32.totalorder %v646, 0
      %v760 = vand.u32 %v646, 2139095040
      %v761 = vshrl.u32 %v760, 23
      %v762 = vsub.s32 %v761, 127
      %v763 = vand.u32 2147483647, %v646
      %v764 = vand.u32 %v763, 8388607
      %v765 = vor.u32 %v764, 8388608
      %v766 = vsub.s32 0, %v765
      %v767 = vadd.s32 %v762, 1
      %vm768 = vcmp.gt.s32.totalorder %v767, 0
      %v769 = vsel %vm768, %v767, 0
      %v770 = vshrl.u32 %v769, 5
      %v771 = vand.u32 %v769, 31
      %v772 = vsub.s32 32, %v771
      %v773 = vshrl.u32 683565275, %v772
      %v774 = vshll.u32 683565275, %v771
      %v775 = vshrl.u32 2475754826, %v772
      %v776 = vor.u32 %v774, %v775
      %v777 = vshll.u32 2475754826, %v771
      %v778 = vshrl.u32 2131351028, %v772
      %v779 = vor.u32 %v777, %v778
      %v780 = vshll.u32 2131351028, %v771
      %v781 = vshrl.u32 2102212464, %v772
      %v782 = vor.u32 %v780, %v781
      %v783 = vshll.u32 2102212464, %v771
      %v784 = vshrl.u32 920167782, %v772
      %v785 = vor.u32 %v783, %v784
      %v786 = vshll.u32 920167782, %v771
      %v787 = vshrl.u32 1326507024, %v772
      %v788 = vor.u32 %v786, %v787
      %vm789 = vcmp.lt.s32.totalorder %v770, 1
      %vm790 = vcmp.lt.s32.totalorder %v770, 2
      %vm791 = vcmp.lt.s32.totalorder %v770, 3
      %vm792 = vcmp.lt.s32.totalorder %v770, 4
      %v793 = vsel %vm789, %v773, %v776
      %v794 = vsel %vm792, %v782, 2102212464
      %v795 = vsel %vm791, %v779, %v794
      %v796 = vsel %vm790, %v793, %v795
      %v797 = vsel %vm789, %v776, %v779
      %v798 = vsel %vm792, %v785, 920167782
      %v799 = vsel %vm791, %v782, %v798
      %v800 = vsel %vm790, %v797, %v799
      %v801 = vsel %vm789, %v779, %v782
      %v802 = vsel %vm792, %v788, 1326507024
      %v803 = vsel %vm791, %v785, %v802
      %v804 = vsel %vm790, %v801, %v803
      %v805 = vshll.u32 %v765, 8
      %v806 = vmul.u32.u64.compose %v805, %v804
      %v807 = vextract.low.u32 %v806
      %v808 = vextract.high.u32 %v806
      %v809 = vmul.u32.u64.compose %v805, %v800
      %v810 = vextract.low.u32 %v809
      %v811 = vextract.high.u32 %v809
      %v812 = vmul.u32 %v805, %v796
      %v813 = vadd.s32 %v808, %v810
      %vm814 = vc.u32 %v808, %v810
      %v815 = vadd.s32 %v811, 1
      %v816 = vsel %vm814, %v815, %v811
      %v817 = vadd.s32 %v812, %v816
      %v818 = vadd.s32 %v817, 536870912
      %v819 = vshrl.u32 %v818, 30
      %v820 = vshll.u32 %v819, 30
      %v821 = vsub.s32 %v817, %v820
      %vm822 = vcmp.lt.s32.totalorder %v821, 0
      %v823 = vsub.s32 0, %v821
      %v824 = vsel %vm822, %v823, %v821
      %v825 = vclz %v824
      %v826 = vsub.s32 %v825, 2
      %vm827 = vcmp.gt.s32.totalorder 0, %v826
      %v828 = vsel %vm827, 0, %v826
      %v829 = vsub.s32 32, %v828
      %v830 = vshll.u32 %v821, %v828
      %v831 = vshrl.u32 %v813, %v829
      %v832 = vor.u32 %v830, %v831
      %v833 = vsub.s32 4294967266, %v828
      %v834 = vadd.s32 %v833, 127
      %v835 = vshll.u32 %v834, 23
      %v836 = vor.u32 4788187, %v835
      %v837 = vand.u32 2147483647, %v836
      %v839 = vcvt.s32.f32 %v832
      %v840 = vmul.f32 %v839, %v837
      %v841 = vxor.u32 %v840, 2147483648
      %v842 = vsel %vm759, %v841, %v840
      %v843 = vsub.s32 4, %v819
      %v844 = vsel %vm759, %v843, %v819
      %v845 = vsel %vm758, %v646, %v842
      %v846 = vsel %vm758, 0, %v844
      %v847 = vcosq.f32.pop %v845
      %v848 = vsinq.f32.pop %v845
      %vm849 = vweird.f32 %v646
      %v850 = vadd.s32 %v846, 3
      %v851 = vand.u32 %v850, 3
      %vm852 = vcmp.lt.s32.totalorder %v851, 2
      %vm853 = vcmp.eq.s32.totalorder %v851, 0
      %v854 = vxor.u32 %v848, 2147483648
      %v855 = vsel %vm853, %v847, %v854
      %vm856 = vcmp.eq.s32.totalorder %v851, 2
      %v857 = vxor.u32 %v847, 2147483648
      %v858 = vsel %vm856, %v857, %v848
      %v859 = vsel %vm852, %v855, %v858
      %v860 = vsel %vm849, nan, %v859
      %v861 = vand.u32 2147483647, %v648
      %vm862 = vcmp.le.f32.partialorder %v861, 0.7853982
      %vm863 = vcmp.lt.s32.totalorder %v648, 0
      %v864 = vand.u32 %v648, 2139095040
      %v865 = vshrl.u32 %v864, 23
      %v866 = vsub.s32 %v865, 127
      %v867 = vand.u32 2147483647, %v648
      %v868 = vand.u32 %v867, 8388607
      %v869 = vor.u32 %v868, 8388608
      %v870 = vsub.s32 0, %v869
      %v871 = vadd.s32 %v866, 1
      %vm872 = vcmp.gt.s32.totalorder %v871, 0
      %v873 = vsel %vm872, %v871, 0
      %v874 = vshrl.u32 %v873, 5
      %v875 = vand.u32 %v873, 31
      %v876 = vsub.s32 32, %v875
      %v877 = vshrl.u32 683565275, %v876
      %v878 = vshll.u32 683565275, %v875
      %v879 = vshrl.u32 2475754826, %v876
      %v880 = vor.u32 %v878, %v879
      %v881 = vshll.u32 2475754826, %v875
      %v882 = vshrl.u32 2131351028, %v876
      %v883 = vor.u32 %v881, %v882
      %v884 = vshll.u32 2131351028, %v875
      %v885 = vshrl.u32 2102212464, %v876
      %v886 = vor.u32 %v884, %v885
      %v887 = vshll.u32 2102212464, %v875
      %v888 = vshrl.u32 920167782, %v876
      %v889 = vor.u32 %v887, %v888
      %v890 = vshll.u32 920167782, %v875
      %v891 = vshrl.u32 1326507024, %v876
      %v892 = vor.u32 %v890, %v891
      %vm893 = vcmp.lt.s32.totalorder %v874, 1
      %vm894 = vcmp.lt.s32.totalorder %v874, 2
      %vm895 = vcmp.lt.s32.totalorder %v874, 3
      %vm896 = vcmp.lt.s32.totalorder %v874, 4
      %v897 = vsel %vm893, %v877, %v880
      %v898 = vsel %vm896, %v886, 2102212464
      %v899 = vsel %vm895, %v883, %v898
      %v900 = vsel %vm894, %v897, %v899
      %v901 = vsel %vm893, %v880, %v883
      %v902 = vsel %vm896, %v889, 920167782
      %v903 = vsel %vm895, %v886, %v902
      %v904 = vsel %vm894, %v901, %v903
      %v905 = vsel %vm893, %v883, %v886
      %v906 = vsel %vm896, %v892, 1326507024
      %v907 = vsel %vm895, %v889, %v906
      %v908 = vsel %vm894, %v905, %v907
      %v909 = vshll.u32 %v869, 8
      %v910 = vmul.u32.u64.compose %v909, %v908
      %v911 = vextract.low.u32 %v910
      %v912 = vextract.high.u32 %v910
      %v913 = vmul.u32.u64.compose %v909, %v904
      %v914 = vextract.low.u32 %v913
      %v915 = vextract.high.u32 %v913
      %v916 = vmul.u32 %v909, %v900
      %v917 = vadd.s32 %v912, %v914
      %vm918 = vc.u32 %v912, %v914
      %v919 = vadd.s32 %v915, 1
      %v920 = vsel %vm918, %v919, %v915
      %v921 = vadd.s32 %v916, %v920
      %v922 = vadd.s32 %v921, 536870912
      %v923 = vshrl.u32 %v922, 30
      %v924 = vshll.u32 %v923, 30
      %v925 = vsub.s32 %v921, %v924
      %vm926 = vcmp.lt.s32.totalorder %v925, 0
      %v927 = vsub.s32 0, %v925
      %v928 = vsel %vm926, %v927, %v925
      %v929 = vclz %v928
      %v930 = vsub.s32 %v929, 2
      %vm931 = vcmp.gt.s32.totalorder 0, %v930
      %v932 = vsel %vm931, 0, %v930
      %v933 = vsub.s32 32, %v932
      %v934 = vshll.u32 %v925, %v932
      %v935 = vshrl.u32 %v917, %v933
      %v936 = vor.u32 %v934, %v935
      %v937 = vsub.s32 4294967266, %v932
      %v938 = vadd.s32 %v937, 127
      %v939 = vshll.u32 %v938, 23
      %v940 = vor.u32 4788187, %v939
      %v941 = vand.u32 2147483647, %v940
      %v943 = vcvt.s32.f32 %v936
      %v944 = vmul.f32 %v943, %v941
      %v945 = vxor.u32 %v944, 2147483648
      %v946 = vsel %vm863, %v945, %v944
      %v947 = vsub.s32 4, %v923
      %v948 = vsel %vm863, %v947, %v923
      %v949 = vsel %vm862, %v648, %v946
      %v950 = vsel %vm862, 0, %v948
      %v951 = vcosq.f32.pop %v949
      %v952 = vsinq.f32.pop %v949
      %vm953 = vweird.f32 %v648
      %v954 = vadd.s32 %v950, 3
      %v955 = vand.u32 %v954, 3
      %vm956 = vcmp.lt.s32.totalorder %v955, 2
      %vm957 = vcmp.eq.s32.totalorder %v955, 0
      %v958 = vxor.u32 %v952, 2147483648
      %v959 = vsel %vm957, %v951, %v958
      %vm960 = vcmp.eq.s32.totalorder %v955, 2
      %v961 = vxor.u32 %v951, 2147483648
      %v962 = vsel %vm960, %v961, %v952
      %v963 = vsel %vm956, %v959, %v962
      %v964 = vsel %vm953, nan, %v963
      %v965 = vand.u32 2147483647, %v735
      %vm966 = vcmp.le.f32.partialorder %v965, 0.7853982
      %vm967 = vcmp.lt.s32.totalorder %v735, 0
      %v968 = vand.u32 %v735, 2139095040
      %v969 = vshrl.u32 %v968, 23
      %v970 = vsub.s32 %v969, 127
      %v971 = vand.u32 2147483647, %v735
      %v972 = vand.u32 %v971, 8388607
      %v973 = vor.u32 %v972, 8388608
      %v974 = vsub.s32 0, %v973
      %v975 = vadd.s32 %v970, 1
      %vm976 = vcmp.gt.s32.totalorder %v975, 0
      %v977 = vsel %vm976, %v975, 0
      %v978 = vshrl.u32 %v977, 5
      %v979 = vand.u32 %v977, 31
      %v980 = vsub.s32 32, %v979
      %v981 = vshrl.u32 683565275, %v980
      %v982 = vshll.u32 683565275, %v979
      %v983 = vshrl.u32 2475754826, %v980
      %v984 = vor.u32 %v982, %v983
      %v985 = vshll.u32 2475754826, %v979
      %v986 = vshrl.u32 2131351028, %v980
      %v987 = vor.u32 %v985, %v986
      %v988 = vshll.u32 2131351028, %v979
      %v989 = vshrl.u32 2102212464, %v980
      %v990 = vor.u32 %v988, %v989
      %v991 = vshll.u32 2102212464, %v979
      %v992 = vshrl.u32 920167782, %v980
      %v993 = vor.u32 %v991, %v992
      %v994 = vshll.u32 920167782, %v979
      %v995 = vshrl.u32 1326507024, %v980
      %v996 = vor.u32 %v994, %v995
      %vm997 = vcmp.lt.s32.totalorder %v978, 1
      %vm998 = vcmp.lt.s32.totalorder %v978, 2
      %vm999 = vcmp.lt.s32.totalorder %v978, 3
      %vm1000 = vcmp.lt.s32.totalorder %v978, 4
      %v1001 = vsel %vm997, %v981, %v984
      %v1002 = vsel %vm1000, %v990, 2102212464
      %v1003 = vsel %vm999, %v987, %v1002
      %v1004 = vsel %vm998, %v1001, %v1003
      %v1005 = vsel %vm997, %v984, %v987
      %v1006 = vsel %vm1000, %v993, 920167782
      %v1007 = vsel %vm999, %v990, %v1006
      %v1008 = vsel %vm998, %v1005, %v1007
      %v1009 = vsel %vm997, %v987, %v990
      %v1010 = vsel %vm1000, %v996, 1326507024
      %v1011 = vsel %vm999, %v993, %v1010
      %v1012 = vsel %vm998, %v1009, %v1011
      %v1013 = vshll.u32 %v973, 8
      %v1014 = vmul.u32.u64.compose %v1013, %v1012
      %v1015 = vextract.low.u32 %v1014
      %v1016 = vextract.high.u32 %v1014
      %v1017 = vmul.u32.u64.compose %v1013, %v1008
      %v1018 = vextract.low.u32 %v1017
      %v1019 = vextract.high.u32 %v1017
      %v1020 = vmul.u32 %v1013, %v1004
      %v1021 = vadd.s32 %v1016, %v1018
      %vm1022 = vc.u32 %v1016, %v1018
      %v1023 = vadd.s32 %v1019, 1
      %v1024 = vsel %vm1022, %v1023, %v1019
      %v1025 = vadd.s32 %v1020, %v1024
      %v1026 = vadd.s32 %v1025, 536870912
      %v1027 = vshrl.u32 %v1026, 30
      %v1028 = vshll.u32 %v1027, 30
      %v1029 = vsub.s32 %v1025, %v1028
      %vm1030 = vcmp.lt.s32.totalorder %v1029, 0
      %v1031 = vsub.s32 0, %v1029
      %v1032 = vsel %vm1030, %v1031, %v1029
      %v1033 = vclz %v1032
      %v1034 = vsub.s32 %v1033, 2
      %vm1035 = vcmp.gt.s32.totalorder 0, %v1034
      %v1036 = vsel %vm1035, 0, %v1034
      %v1037 = vsub.s32 32, %v1036
      %v1038 = vshll.u32 %v1029, %v1036
      %v1039 = vshrl.u32 %v1021, %v1037
      %v1040 = vor.u32 %v1038, %v1039
      %v1041 = vsub.s32 4294967266, %v1036
      %v1042 = vadd.s32 %v1041, 127
      %v1043 = vshll.u32 %v1042, 23
      %v1044 = vor.u32 4788187, %v1043
      %v1045 = vand.u32 2147483647, %v1044
      %v1047 = vcvt.s32.f32 %v1040
      %v1048 = vmul.f32 %v1047, %v1045
      %v1049 = vxor.u32 %v1048, 2147483648
      %v1050 = vsel %vm967, %v1049, %v1048
      %v1051 = vsub.s32 4, %v1027
      %v1052 = vsel %vm967, %v1051, %v1027
      %v1053 = vsel %vm966, %v735, %v1050
      %v1054 = vsel %vm966, 0, %v1052
      %v1055 = vcosq.f32.pop %v1053
      %v1056 = vsinq.f32.pop %v1053
      %vm1057 = vweird.f32 %v735
      %v1058 = vadd.s32 %v1054, 3
      %v1059 = vand.u32 %v1058, 3
      %vm1060 = vcmp.lt.s32.totalorder %v1059, 2
      %vm1061 = vcmp.eq.s32.totalorder %v1059, 0
      %v1062 = vxor.u32 %v1056, 2147483648
      %v1063 = vsel %vm1061, %v1055, %v1062
      %vm1064 = vcmp.eq.s32.totalorder %v1059, 2
      %v1065 = vxor.u32 %v1055, 2147483648
      %v1066 = vsel %vm1064, %v1065, %v1056
      %v1067 = vsel %vm1060, %v1063, %v1066
      %v1068 = vsel %vm1057, nan, %v1067
      %v1069 = vand.u32 2147483647, %v737
      %vm1070 = vcmp.le.f32.partialorder %v1069, 0.7853982
      %vm1071 = vcmp.lt.s32.totalorder %v737, 0
      %v1072 = vand.u32 %v737, 2139095040
      %v1073 = vshrl.u32 %v1072, 23
      %v1074 = vsub.s32 %v1073, 127
      %v1075 = vand.u32 2147483647, %v737
      %v1076 = vand.u32 %v1075, 8388607
      %v1077 = vor.u32 %v1076, 8388608
      %v1078 = vsub.s32 0, %v1077
      %v1079 = vadd.s32 %v1074, 1
      %vm1080 = vcmp.gt.s32.totalorder %v1079, 0
      %v1081 = vsel %vm1080, %v1079, 0
      %v1082 = vshrl.u32 %v1081, 5
      %v1083 = vand.u32 %v1081, 31
      %v1084 = vsub.s32 32, %v1083
      %v1085 = vshrl.u32 683565275, %v1084
      %v1086 = vshll.u32 683565275, %v1083
      %v1087 = vshrl.u32 2475754826, %v1084
      %v1088 = vor.u32 %v1086, %v1087
      %v1089 = vshll.u32 2475754826, %v1083
      %v1090 = vshrl.u32 2131351028, %v1084
      %v1091 = vor.u32 %v1089, %v1090
      %v1092 = vshll.u32 2131351028, %v1083
      %v1093 = vshrl.u32 2102212464, %v1084
      %v1094 = vor.u32 %v1092, %v1093
      %v1095 = vshll.u32 2102212464, %v1083
      %v1096 = vshrl.u32 920167782, %v1084
      %v1097 = vor.u32 %v1095, %v1096
      %v1098 = vshll.u32 920167782, %v1083
      %v1099 = vshrl.u32 1326507024, %v1084
      %v1100 = vor.u32 %v1098, %v1099
      %vm1101 = vcmp.lt.s32.totalorder %v1082, 1
      %vm1102 = vcmp.lt.s32.totalorder %v1082, 2
      %vm1103 = vcmp.lt.s32.totalorder %v1082, 3
      %vm1104 = vcmp.lt.s32.totalorder %v1082, 4
      %v1105 = vsel %vm1101, %v1085, %v1088
      %v1106 = vsel %vm1104, %v1094, 2102212464
      %v1107 = vsel %vm1103, %v1091, %v1106
      %v1108 = vsel %vm1102, %v1105, %v1107
      %v1109 = vsel %vm1101, %v1088, %v1091
      %v1110 = vsel %vm1104, %v1097, 920167782
      %v1111 = vsel %vm1103, %v1094, %v1110
      %v1112 = vsel %vm1102, %v1109, %v1111
      %v1113 = vsel %vm1101, %v1091, %v1094
      %v1114 = vsel %vm1104, %v1100, 1326507024
      %v1115 = vsel %vm1103, %v1097, %v1114
      %v1116 = vsel %vm1102, %v1113, %v1115
      %v1117 = vshll.u32 %v1077, 8
      %v1118 = vmul.u32.u64.compose %v1117, %v1116
      %v1119 = vextract.low.u32 %v1118
      %v1120 = vextract.high.u32 %v1118
      %v1121 = vmul.u32.u64.compose %v1117, %v1112
      %v1122 = vextract.low.u32 %v1121
      %v1123 = vextract.high.u32 %v1121
      %v1124 = vmul.u32 %v1117, %v1108
      %v1125 = vadd.s32 %v1120, %v1122
      %vm1126 = vc.u32 %v1120, %v1122
      %v1127 = vadd.s32 %v1123, 1
      %v1128 = vsel %vm1126, %v1127, %v1123
      %v1129 = vadd.s32 %v1124, %v1128
      %v1130 = vadd.s32 %v1129, 536870912
      %v1131 = vshrl.u32 %v1130, 30
      %v1132 = vshll.u32 %v1131, 30
      %v1133 = vsub.s32 %v1129, %v1132
      %vm1134 = vcmp.lt.s32.totalorder %v1133, 0
      %v1135 = vsub.s32 0, %v1133
      %v1136 = vsel %vm1134, %v1135, %v1133
      %v1137 = vclz %v1136
      %v1138 = vsub.s32 %v1137, 2
      %vm1139 = vcmp.gt.s32.totalorder 0, %v1138
      %v1140 = vsel %vm1139, 0, %v1138
      %v1141 = vsub.s32 32, %v1140
      %v1142 = vshll.u32 %v1133, %v1140
      %v1143 = vshrl.u32 %v1125, %v1141
      %v1144 = vor.u32 %v1142, %v1143
      %v1145 = vsub.s32 4294967266, %v1140
      %v1146 = vadd.s32 %v1145, 127
      %v1147 = vshll.u32 %v1146, 23
      %v1148 = vor.u32 4788187, %v1147
      %v1149 = vand.u32 2147483647, %v1148
      %v1151 = vcvt.s32.f32 %v1144
      %v1152 = vmul.f32 %v1151, %v1149
      %v1153 = vxor.u32 %v1152, 2147483648
      %v1154 = vsel %vm1071, %v1153, %v1152
      %v1155 = vsub.s32 4, %v1131
      %v1156 = vsel %vm1071, %v1155, %v1131
      %v1157 = vsel %vm1070, %v737, %v1154
      %v1158 = vsel %vm1070, 0, %v1156
      %v1159 = vcosq.f32.pop %v1157
      %v1160 = vsinq.f32.pop %v1157
      %vm1161 = vweird.f32 %v737
      %v1162 = vadd.s32 %v1158, 3
      %v1163 = vand.u32 %v1162, 3
      %vm1164 = vcmp.lt.s32.totalorder %v1163, 2
      %vm1165 = vcmp.eq.s32.totalorder %v1163, 0
      %v1166 = vxor.u32 %v1160, 2147483648
      %v1167 = vsel %vm1165, %v1159, %v1166
      %vm1168 = vcmp.eq.s32.totalorder %v1163, 2
      %v1169 = vxor.u32 %v1159, 2147483648
      %v1170 = vsel %vm1168, %v1169, %v1160
      %v1171 = vsel %vm1164, %v1167, %v1170
      %v1172 = vsel %vm1161, nan, %v1171
      %v1173 = vand.u32 2147483647, %v652
      %vm1174 = vcmp.le.f32.partialorder %v1173, 0.7853982
      %vm1175 = vcmp.lt.s32.totalorder %v652, 0
      %v1176 = vand.u32 %v652, 2139095040
      %v1177 = vshrl.u32 %v1176, 23
      %v1178 = vsub.s32 %v1177, 127
      %v1179 = vand.u32 2147483647, %v652
      %v1180 = vand.u32 %v1179, 8388607
      %v1181 = vor.u32 %v1180, 8388608
      %v1182 = vsub.s32 0, %v1181
      %v1183 = vadd.s32 %v1178, 1
      %vm1184 = vcmp.gt.s32.totalorder %v1183, 0
      %v1185 = vsel %vm1184, %v1183, 0
      %v1186 = vshrl.u32 %v1185, 5
      %v1187 = vand.u32 %v1185, 31
      %v1188 = vsub.s32 32, %v1187
      %v1189 = vshrl.u32 683565275, %v1188
      %v1190 = vshll.u32 683565275, %v1187
      %v1191 = vshrl.u32 2475754826, %v1188
      %v1192 = vor.u32 %v1190, %v1191
      %v1193 = vshll.u32 2475754826, %v1187
      %v1194 = vshrl.u32 2131351028, %v1188
      %v1195 = vor.u32 %v1193, %v1194
      %v1196 = vshll.u32 2131351028, %v1187
      %v1197 = vshrl.u32 2102212464, %v1188
      %v1198 = vor.u32 %v1196, %v1197
      %v1199 = vshll.u32 2102212464, %v1187
      %v1200 = vshrl.u32 920167782, %v1188
      %v1201 = vor.u32 %v1199, %v1200
      %v1202 = vshll.u32 920167782, %v1187
      %v1203 = vshrl.u32 1326507024, %v1188
      %v1204 = vor.u32 %v1202, %v1203
      %vm1205 = vcmp.lt.s32.totalorder %v1186, 1
      %vm1206 = vcmp.lt.s32.totalorder %v1186, 2
      %vm1207 = vcmp.lt.s32.totalorder %v1186, 3
      %vm1208 = vcmp.lt.s32.totalorder %v1186, 4
      %v1209 = vsel %vm1205, %v1189, %v1192
      %v1210 = vsel %vm1208, %v1198, 2102212464
      %v1211 = vsel %vm1207, %v1195, %v1210
      %v1212 = vsel %vm1206, %v1209, %v1211
      %v1213 = vsel %vm1205, %v1192, %v1195
      %v1214 = vsel %vm1208, %v1201, 920167782
      %v1215 = vsel %vm1207, %v1198, %v1214
      %v1216 = vsel %vm1206, %v1213, %v1215
      %v1217 = vsel %vm1205, %v1195, %v1198
      %v1218 = vsel %vm1208, %v1204, 1326507024
      %v1219 = vsel %vm1207, %v1201, %v1218
      %v1220 = vsel %vm1206, %v1217, %v1219
      %v1221 = vshll.u32 %v1181, 8
      %v1222 = vmul.u32.u64.compose %v1221, %v1220
      %v1223 = vextract.low.u32 %v1222
      %v1224 = vextract.high.u32 %v1222
      %v1225 = vmul.u32.u64.compose %v1221, %v1216
      %v1226 = vextract.low.u32 %v1225
      %v1227 = vextract.high.u32 %v1225
      %v1228 = vmul.u32 %v1221, %v1212
      %v1229 = vadd.s32 %v1224, %v1226
      %vm1230 = vc.u32 %v1224, %v1226
      %v1231 = vadd.s32 %v1227, 1
      %v1232 = vsel %vm1230, %v1231, %v1227
      %v1233 = vadd.s32 %v1228, %v1232
      %v1234 = vadd.s32 %v1233, 536870912
      %v1235 = vshrl.u32 %v1234, 30
      %v1236 = vshll.u32 %v1235, 30
      %v1237 = vsub.s32 %v1233, %v1236
      %vm1238 = vcmp.lt.s32.totalorder %v1237, 0
      %v1239 = vsub.s32 0, %v1237
      %v1240 = vsel %vm1238, %v1239, %v1237
      %v1241 = vclz %v1240
      %v1242 = vsub.s32 %v1241, 2
      %vm1243 = vcmp.gt.s32.totalorder 0, %v1242
      %v1244 = vsel %vm1243, 0, %v1242
      %v1245 = vsub.s32 32, %v1244
      %v1246 = vshll.u32 %v1237, %v1244
      %v1247 = vshrl.u32 %v1229, %v1245
      %v1248 = vor.u32 %v1246, %v1247
      %v1249 = vsub.s32 4294967266, %v1244
      %v1250 = vadd.s32 %v1249, 127
      %v1251 = vshll.u32 %v1250, 23
      %v1252 = vor.u32 4788187, %v1251
      %v1253 = vand.u32 2147483647, %v1252
      %v1255 = vcvt.s32.f32 %v1248
      %v1256 = vmul.f32 %v1255, %v1253
      %v1257 = vxor.u32 %v1256, 2147483648
      %v1258 = vsel %vm1175, %v1257, %v1256
      %v1259 = vsub.s32 4, %v1235
      %v1260 = vsel %vm1175, %v1259, %v1235
      %v1261 = vsel %vm1174, %v652, %v1258
      %v1262 = vsel %vm1174, 0, %v1260
      %v1263 = vcosq.f32.pop %v1261
      %v1264 = vsinq.f32.pop %v1261
      %vm1265 = vweird.f32 %v652
      %v1266 = vadd.s32 %v1262, 3
      %v1267 = vand.u32 %v1266, 3
      %vm1268 = vcmp.lt.s32.totalorder %v1267, 2
      %vm1269 = vcmp.eq.s32.totalorder %v1267, 0
      %v1270 = vxor.u32 %v1264, 2147483648
      %v1271 = vsel %vm1269, %v1263, %v1270
      %vm1272 = vcmp.eq.s32.totalorder %v1267, 2
      %v1273 = vxor.u32 %v1263, 2147483648
      %v1274 = vsel %vm1272, %v1273, %v1264
      %v1275 = vsel %vm1268, %v1271, %v1274
      %v1276 = vsel %vm1265, nan, %v1275
      %v1277 = vand.u32 2147483647, %v654
      %vm1278 = vcmp.le.f32.partialorder %v1277, 0.7853982
      %vm1279 = vcmp.lt.s32.totalorder %v654, 0
      %v1280 = vand.u32 %v654, 2139095040
      %v1281 = vshrl.u32 %v1280, 23
      %v1282 = vsub.s32 %v1281, 127
      %v1283 = vand.u32 2147483647, %v654
      %v1284 = vand.u32 %v1283, 8388607
      %v1285 = vor.u32 %v1284, 8388608
      %v1286 = vsub.s32 0, %v1285
      %v1287 = vadd.s32 %v1282, 1
      %vm1288 = vcmp.gt.s32.totalorder %v1287, 0
      %v1289 = vsel %vm1288, %v1287, 0
      %v1290 = vshrl.u32 %v1289, 5
      %v1291 = vand.u32 %v1289, 31
      %v1292 = vsub.s32 32, %v1291
      %v1293 = vshrl.u32 683565275, %v1292
      %v1294 = vshll.u32 683565275, %v1291
      %v1295 = vshrl.u32 2475754826, %v1292
      %v1296 = vor.u32 %v1294, %v1295
      %v1297 = vshll.u32 2475754826, %v1291
      %v1298 = vshrl.u32 2131351028, %v1292
      %v1299 = vor.u32 %v1297, %v1298
      %v1300 = vshll.u32 2131351028, %v1291
      %v1301 = vshrl.u32 2102212464, %v1292
      %v1302 = vor.u32 %v1300, %v1301
      %v1303 = vshll.u32 2102212464, %v1291
      %v1304 = vshrl.u32 920167782, %v1292
      %v1305 = vor.u32 %v1303, %v1304
      %v1306 = vshll.u32 920167782, %v1291
      %v1307 = vshrl.u32 1326507024, %v1292
      %v1308 = vor.u32 %v1306, %v1307
      %vm1309 = vcmp.lt.s32.totalorder %v1290, 1
      %vm1310 = vcmp.lt.s32.totalorder %v1290, 2
      %vm1311 = vcmp.lt.s32.totalorder %v1290, 3
      %vm1312 = vcmp.lt.s32.totalorder %v1290, 4
      %v1313 = vsel %vm1309, %v1293, %v1296
      %v1314 = vsel %vm1312, %v1302, 2102212464
      %v1315 = vsel %vm1311, %v1299, %v1314
      %v1316 = vsel %vm1310, %v1313, %v1315
      %v1317 = vsel %vm1309, %v1296, %v1299
      %v1318 = vsel %vm1312, %v1305, 920167782
      %v1319 = vsel %vm1311, %v1302, %v1318
      %v1320 = vsel %vm1310, %v1317, %v1319
      %v1321 = vsel %vm1309, %v1299, %v1302
      %v1322 = vsel %vm1312, %v1308, 1326507024
      %v1323 = vsel %vm1311, %v1305, %v1322
      %v1324 = vsel %vm1310, %v1321, %v1323
      %v1325 = vshll.u32 %v1285, 8
      %v1326 = vmul.u32.u64.compose %v1325, %v1324
      %v1327 = vextract.low.u32 %v1326
      %v1328 = vextract.high.u32 %v1326
      %v1329 = vmul.u32.u64.compose %v1325, %v1320
      %v1330 = vextract.low.u32 %v1329
      %v1331 = vextract.high.u32 %v1329
      %v1332 = vmul.u32 %v1325, %v1316
      %v1333 = vadd.s32 %v1328, %v1330
      %vm1334 = vc.u32 %v1328, %v1330
      %v1335 = vadd.s32 %v1331, 1
      %v1336 = vsel %vm1334, %v1335, %v1331
      %v1337 = vadd.s32 %v1332, %v1336
      %v1338 = vadd.s32 %v1337, 536870912
      %v1339 = vshrl.u32 %v1338, 30
      %v1340 = vshll.u32 %v1339, 30
      %v1341 = vsub.s32 %v1337, %v1340
      %vm1342 = vcmp.lt.s32.totalorder %v1341, 0
      %v1343 = vsub.s32 0, %v1341
      %v1344 = vsel %vm1342, %v1343, %v1341
      %v1345 = vclz %v1344
      %v1346 = vsub.s32 %v1345, 2
      %vm1347 = vcmp.gt.s32.totalorder 0, %v1346
      %v1348 = vsel %vm1347, 0, %v1346
      %v1349 = vsub.s32 32, %v1348
      %v1350 = vshll.u32 %v1341, %v1348
      %v1351 = vshrl.u32 %v1333, %v1349
      %v1352 = vor.u32 %v1350, %v1351
      %v1353 = vsub.s32 4294967266, %v1348
      %v1354 = vadd.s32 %v1353, 127
      %v1355 = vshll.u32 %v1354, 23
      %v1356 = vor.u32 4788187, %v1355
      %v1357 = vand.u32 2147483647, %v1356
      %v1359 = vcvt.s32.f32 %v1352
      %v1360 = vmul.f32 %v1359, %v1357
      %v1361 = vxor.u32 %v1360, 2147483648
      %v1362 = vsel %vm1279, %v1361, %v1360
      %v1363 = vsub.s32 4, %v1339
      %v1364 = vsel %vm1279, %v1363, %v1339
      %v1365 = vsel %vm1278, %v654, %v1362
      %v1366 = vsel %vm1278, 0, %v1364
      %v1367 = vcosq.f32.pop %v1365
      %v1368 = vsinq.f32.pop %v1365
      %vm1369 = vweird.f32 %v654
      %v1370 = vadd.s32 %v1366, 3
      %v1371 = vand.u32 %v1370, 3
      %vm1372 = vcmp.lt.s32.totalorder %v1371, 2
      %vm1373 = vcmp.eq.s32.totalorder %v1371, 0
      %v1374 = vxor.u32 %v1368, 2147483648
      %v1375 = vsel %vm1373, %v1367, %v1374
      %vm1376 = vcmp.eq.s32.totalorder %v1371, 2
      %v1377 = vxor.u32 %v1367, 2147483648
      %v1378 = vsel %vm1376, %v1377, %v1368
      %v1379 = vsel %vm1372, %v1375, %v1378
      %v1380 = vsel %vm1369, nan, %v1379
      %v1381 = vand.u32 2147483647, %v741
      %vm1382 = vcmp.le.f32.partialorder %v1381, 0.7853982
      %vm1383 = vcmp.lt.s32.totalorder %v741, 0
      %v1384 = vand.u32 %v741, 2139095040
      %v1385 = vshrl.u32 %v1384, 23
      %v1386 = vsub.s32 %v1385, 127
      %v1387 = vand.u32 2147483647, %v741
      %v1388 = vand.u32 %v1387, 8388607
      %v1389 = vor.u32 %v1388, 8388608
      %v1390 = vsub.s32 0, %v1389
      %v1391 = vadd.s32 %v1386, 1
      %vm1392 = vcmp.gt.s32.totalorder %v1391, 0
      %v1393 = vsel %vm1392, %v1391, 0
      %v1394 = vshrl.u32 %v1393, 5
      %v1395 = vand.u32 %v1393, 31
      %v1396 = vsub.s32 32, %v1395
      %v1397 = vshrl.u32 683565275, %v1396
      %v1398 = vshll.u32 683565275, %v1395
      %v1399 = vshrl.u32 2475754826, %v1396
      %v1400 = vor.u32 %v1398, %v1399
      %v1401 = vshll.u32 2475754826, %v1395
      %v1402 = vshrl.u32 2131351028, %v1396
      %v1403 = vor.u32 %v1401, %v1402
      %v1404 = vshll.u32 2131351028, %v1395
      %v1405 = vshrl.u32 2102212464, %v1396
      %v1406 = vor.u32 %v1404, %v1405
      %v1407 = vshll.u32 2102212464, %v1395
      %v1408 = vshrl.u32 920167782, %v1396
      %v1409 = vor.u32 %v1407, %v1408
      %v1410 = vshll.u32 920167782, %v1395
      %v1411 = vshrl.u32 1326507024, %v1396
      %v1412 = vor.u32 %v1410, %v1411
      %vm1413 = vcmp.lt.s32.totalorder %v1394, 1
      %vm1414 = vcmp.lt.s32.totalorder %v1394, 2
      %vm1415 = vcmp.lt.s32.totalorder %v1394, 3
      %vm1416 = vcmp.lt.s32.totalorder %v1394, 4
      %v1417 = vsel %vm1413, %v1397, %v1400
      %v1418 = vsel %vm1416, %v1406, 2102212464
      %v1419 = vsel %vm1415, %v1403, %v1418
      %v1420 = vsel %vm1414, %v1417, %v1419
      %v1421 = vsel %vm1413, %v1400, %v1403
      %v1422 = vsel %vm1416, %v1409, 920167782
      %v1423 = vsel %vm1415, %v1406, %v1422
      %v1424 = vsel %vm1414, %v1421, %v1423
      %v1425 = vsel %vm1413, %v1403, %v1406
      %v1426 = vsel %vm1416, %v1412, 1326507024
      %v1427 = vsel %vm1415, %v1409, %v1426
      %v1428 = vsel %vm1414, %v1425, %v1427
      %v1429 = vshll.u32 %v1389, 8
      %v1430 = vmul.u32.u64.compose %v1429, %v1428
      %v1431 = vextract.low.u32 %v1430
      %v1432 = vextract.high.u32 %v1430
      %v1433 = vmul.u32.u64.compose %v1429, %v1424
      %v1434 = vextract.low.u32 %v1433
      %v1435 = vextract.high.u32 %v1433
      %v1436 = vmul.u32 %v1429, %v1420
      %v1437 = vadd.s32 %v1432, %v1434
      %vm1438 = vc.u32 %v1432, %v1434
      %v1439 = vadd.s32 %v1435, 1
      %v1440 = vsel %vm1438, %v1439, %v1435
      %v1441 = vadd.s32 %v1436, %v1440
      %v1442 = vadd.s32 %v1441, 536870912
      %v1443 = vshrl.u32 %v1442, 30
      %v1444 = vshll.u32 %v1443, 30
      %v1445 = vsub.s32 %v1441, %v1444
      %vm1446 = vcmp.lt.s32.totalorder %v1445, 0
      %v1447 = vsub.s32 0, %v1445
      %v1448 = vsel %vm1446, %v1447, %v1445
      %v1449 = vclz %v1448
      %v1450 = vsub.s32 %v1449, 2
      %vm1451 = vcmp.gt.s32.totalorder 0, %v1450
      %v1452 = vsel %vm1451, 0, %v1450
      %v1453 = vsub.s32 32, %v1452
      %v1454 = vshll.u32 %v1445, %v1452
      %v1455 = vshrl.u32 %v1437, %v1453
      %v1456 = vor.u32 %v1454, %v1455
      %v1457 = vsub.s32 4294967266, %v1452
      %v1458 = vadd.s32 %v1457, 127
      %v1459 = vshll.u32 %v1458, 23
      %v1460 = vor.u32 4788187, %v1459
      %v1461 = vand.u32 2147483647, %v1460
      %v1463 = vcvt.s32.f32 %v1456
      %v1464 = vmul.f32 %v1463, %v1461
      %v1465 = vxor.u32 %v1464, 2147483648
      %v1466 = vsel %vm1383, %v1465, %v1464
      %v1467 = vsub.s32 4, %v1443
      %v1468 = vsel %vm1383, %v1467, %v1443
      %v1469 = vsel %vm1382, %v741, %v1466
      %v1470 = vsel %vm1382, 0, %v1468
      %v1471 = vcosq.f32.pop %v1469
      %v1472 = vsinq.f32.pop %v1469
      %vm1473 = vweird.f32 %v741
      %v1474 = vadd.s32 %v1470, 3
      %v1475 = vand.u32 %v1474, 3
      %vm1476 = vcmp.lt.s32.totalorder %v1475, 2
      %vm1477 = vcmp.eq.s32.totalorder %v1475, 0
      %v1478 = vxor.u32 %v1472, 2147483648
      %v1479 = vsel %vm1477, %v1471, %v1478
      %vm1480 = vcmp.eq.s32.totalorder %v1475, 2
      %v1481 = vxor.u32 %v1471, 2147483648
      %v1482 = vsel %vm1480, %v1481, %v1472
      %v1483 = vsel %vm1476, %v1479, %v1482
      %v1484 = vsel %vm1473, nan, %v1483
      %v1485 = vand.u32 2147483647, %v743
      %vm1486 = vcmp.le.f32.partialorder %v1485, 0.7853982
      %vm1487 = vcmp.lt.s32.totalorder %v743, 0
      %v1488 = vand.u32 %v743, 2139095040
      %v1489 = vshrl.u32 %v1488, 23
      %v1490 = vsub.s32 %v1489, 127
      %v1491 = vand.u32 2147483647, %v743
      %v1492 = vand.u32 %v1491, 8388607
      %v1493 = vor.u32 %v1492, 8388608
      %v1494 = vsub.s32 0, %v1493
      %v1495 = vadd.s32 %v1490, 1
      %vm1496 = vcmp.gt.s32.totalorder %v1495, 0
      %v1497 = vsel %vm1496, %v1495, 0
      %v1498 = vshrl.u32 %v1497, 5
      %v1499 = vand.u32 %v1497, 31
      %v1500 = vsub.s32 32, %v1499
      %v1501 = vshrl.u32 683565275, %v1500
      %v1502 = vshll.u32 683565275, %v1499
      %v1503 = vshrl.u32 2475754826, %v1500
      %v1504 = vor.u32 %v1502, %v1503
      %v1505 = vshll.u32 2475754826, %v1499
      %v1506 = vshrl.u32 2131351028, %v1500
      %v1507 = vor.u32 %v1505, %v1506
      %v1508 = vshll.u32 2131351028, %v1499
      %v1509 = vshrl.u32 2102212464, %v1500
      %v1510 = vor.u32 %v1508, %v1509
      %v1511 = vshll.u32 2102212464, %v1499
      %v1512 = vshrl.u32 920167782, %v1500
      %v1513 = vor.u32 %v1511, %v1512
      %v1514 = vshll.u32 920167782, %v1499
      %v1515 = vshrl.u32 1326507024, %v1500
      %v1516 = vor.u32 %v1514, %v1515
      %vm1517 = vcmp.lt.s32.totalorder %v1498, 1
      %vm1518 = vcmp.lt.s32.totalorder %v1498, 2
      %vm1519 = vcmp.lt.s32.totalorder %v1498, 3
      %vm1520 = vcmp.lt.s32.totalorder %v1498, 4
      %v1521 = vsel %vm1517, %v1501, %v1504
      %v1522 = vsel %vm1520, %v1510, 2102212464
      %v1523 = vsel %vm1519, %v1507, %v1522
      %v1524 = vsel %vm1518, %v1521, %v1523
      %v1525 = vsel %vm1517, %v1504, %v1507
      %v1526 = vsel %vm1520, %v1513, 920167782
      %v1527 = vsel %vm1519, %v1510, %v1526
      %v1528 = vsel %vm1518, %v1525, %v1527
      %v1529 = vsel %vm1517, %v1507, %v1510
      %v1530 = vsel %vm1520, %v1516, 1326507024
      %v1531 = vsel %vm1519, %v1513, %v1530
      %v1532 = vsel %vm1518, %v1529, %v1531
      %v1533 = vshll.u32 %v1493, 8
      %v1534 = vmul.u32.u64.compose %v1533, %v1532
      %v1535 = vextract.low.u32 %v1534
      %v1536 = vextract.high.u32 %v1534
      %v1537 = vmul.u32.u64.compose %v1533, %v1528
      %v1538 = vextract.low.u32 %v1537
      %v1539 = vextract.high.u32 %v1537
      %v1540 = vmul.u32 %v1533, %v1524
      %v1541 = vadd.s32 %v1536, %v1538
      %vm1542 = vc.u32 %v1536, %v1538
      %v1543 = vadd.s32 %v1539, 1
      %v1544 = vsel %vm1542, %v1543, %v1539
      %v1545 = vadd.s32 %v1540, %v1544
      %v1546 = vadd.s32 %v1545, 536870912
      %v1547 = vshrl.u32 %v1546, 30
      %v1548 = vshll.u32 %v1547, 30
      %v1549 = vsub.s32 %v1545, %v1548
      %vm1550 = vcmp.lt.s32.totalorder %v1549, 0
      %v1551 = vsub.s32 0, %v1549
      %v1552 = vsel %vm1550, %v1551, %v1549
      %v1553 = vclz %v1552
      %v1554 = vsub.s32 %v1553, 2
      %vm1555 = vcmp.gt.s32.totalorder 0, %v1554
      %v1556 = vsel %vm1555, 0, %v1554
      %v1557 = vsub.s32 32, %v1556
      %v1558 = vshll.u32 %v1549, %v1556
      %v1559 = vshrl.u32 %v1541, %v1557
      %v1560 = vor.u32 %v1558, %v1559
      %v1561 = vsub.s32 4294967266, %v1556
      %v1562 = vadd.s32 %v1561, 127
      %v1563 = vshll.u32 %v1562, 23
      %v1564 = vor.u32 4788187, %v1563
      %v1565 = vand.u32 2147483647, %v1564
      %v1567 = vcvt.s32.f32 %v1560
      %v1568 = vmul.f32 %v1567, %v1565
      %v1569 = vxor.u32 %v1568, 2147483648
      %v1570 = vsel %vm1487, %v1569, %v1568
      %v1571 = vsub.s32 4, %v1547
      %v1572 = vsel %vm1487, %v1571, %v1547
      %v1573 = vsel %vm1486, %v743, %v1570
      %v1574 = vsel %vm1486, 0, %v1572
      %v1575 = vcosq.f32.pop %v1573
      %v1576 = vsinq.f32.pop %v1573
      %vm1577 = vweird.f32 %v743
      %v1578 = vadd.s32 %v1574, 3
      %v1579 = vand.u32 %v1578, 3
      %vm1580 = vcmp.lt.s32.totalorder %v1579, 2
      %vm1581 = vcmp.eq.s32.totalorder %v1579, 0
      %v1582 = vxor.u32 %v1576, 2147483648
      %v1583 = vsel %vm1581, %v1575, %v1582
      %vm1584 = vcmp.eq.s32.totalorder %v1579, 2
      %v1585 = vxor.u32 %v1575, 2147483648
      %v1586 = vsel %vm1584, %v1585, %v1576
      %v1587 = vsel %vm1580, %v1583, %v1586
      %v1588 = vsel %vm1577, nan, %v1587
      %v1589 = vand.u32 2147483647, %v658
      %vm1590 = vcmp.le.f32.partialorder %v1589, 0.7853982
      %vm1591 = vcmp.lt.s32.totalorder %v658, 0
      %v1592 = vand.u32 %v658, 2139095040
      %v1593 = vshrl.u32 %v1592, 23
      %v1594 = vsub.s32 %v1593, 127
      %v1595 = vand.u32 2147483647, %v658
      %v1596 = vand.u32 %v1595, 8388607
      %v1597 = vor.u32 %v1596, 8388608
      %v1598 = vsub.s32 0, %v1597
      %v1599 = vadd.s32 %v1594, 1
      %vm1600 = vcmp.gt.s32.totalorder %v1599, 0
      %v1601 = vsel %vm1600, %v1599, 0
      %v1602 = vshrl.u32 %v1601, 5
      %v1603 = vand.u32 %v1601, 31
      %v1604 = vsub.s32 32, %v1603
      %v1605 = vshrl.u32 683565275, %v1604
      %v1606 = vshll.u32 683565275, %v1603
      %v1607 = vshrl.u32 2475754826, %v1604
      %v1608 = vor.u32 %v1606, %v1607
      %v1609 = vshll.u32 2475754826, %v1603
      %v1610 = vshrl.u32 2131351028, %v1604
      %v1611 = vor.u32 %v1609, %v1610
      %v1612 = vshll.u32 2131351028, %v1603
      %v1613 = vshrl.u32 2102212464, %v1604
      %v1614 = vor.u32 %v1612, %v1613
      %v1615 = vshll.u32 2102212464, %v1603
      %v1616 = vshrl.u32 920167782, %v1604
      %v1617 = vor.u32 %v1615, %v1616
      %v1618 = vshll.u32 920167782, %v1603
      %v1619 = vshrl.u32 1326507024, %v1604
      %v1620 = vor.u32 %v1618, %v1619
      %vm1621 = vcmp.lt.s32.totalorder %v1602, 1
      %vm1622 = vcmp.lt.s32.totalorder %v1602, 2
      %vm1623 = vcmp.lt.s32.totalorder %v1602, 3
      %vm1624 = vcmp.lt.s32.totalorder %v1602, 4
      %v1625 = vsel %vm1621, %v1605, %v1608
      %v1626 = vsel %vm1624, %v1614, 2102212464
      %v1627 = vsel %vm1623, %v1611, %v1626
      %v1628 = vsel %vm1622, %v1625, %v1627
      %v1629 = vsel %vm1621, %v1608, %v1611
      %v1630 = vsel %vm1624, %v1617, 920167782
      %v1631 = vsel %vm1623, %v1614, %v1630
      %v1632 = vsel %vm1622, %v1629, %v1631
      %v1633 = vsel %vm1621, %v1611, %v1614
      %v1634 = vsel %vm1624, %v1620, 1326507024
      %v1635 = vsel %vm1623, %v1617, %v1634
      %v1636 = vsel %vm1622, %v1633, %v1635
      %v1637 = vshll.u32 %v1597, 8
      %v1638 = vmul.u32.u64.compose %v1637, %v1636
      %v1639 = vextract.low.u32 %v1638
      %v1640 = vextract.high.u32 %v1638
      %v1641 = vmul.u32.u64.compose %v1637, %v1632
      %v1642 = vextract.low.u32 %v1641
      %v1643 = vextract.high.u32 %v1641
      %v1644 = vmul.u32 %v1637, %v1628
      %v1645 = vadd.s32 %v1640, %v1642
      %vm1646 = vc.u32 %v1640, %v1642
      %v1647 = vadd.s32 %v1643, 1
      %v1648 = vsel %vm1646, %v1647, %v1643
      %v1649 = vadd.s32 %v1644, %v1648
      %v1650 = vadd.s32 %v1649, 536870912
      %v1651 = vshrl.u32 %v1650, 30
      %v1652 = vshll.u32 %v1651, 30
      %v1653 = vsub.s32 %v1649, %v1652
      %vm1654 = vcmp.lt.s32.totalorder %v1653, 0
      %v1655 = vsub.s32 0, %v1653
      %v1656 = vsel %vm1654, %v1655, %v1653
      %v1657 = vclz %v1656
      %v1658 = vsub.s32 %v1657, 2
      %vm1659 = vcmp.gt.s32.totalorder 0, %v1658
      %v1660 = vsel %vm1659, 0, %v1658
      %v1661 = vsub.s32 32, %v1660
      %v1662 = vshll.u32 %v1653, %v1660
      %v1663 = vshrl.u32 %v1645, %v1661
      %v1664 = vor.u32 %v1662, %v1663
      %v1665 = vsub.s32 4294967266, %v1660
      %v1666 = vadd.s32 %v1665, 127
      %v1667 = vshll.u32 %v1666, 23
      %v1668 = vor.u32 4788187, %v1667
      %v1669 = vand.u32 2147483647, %v1668
      %v1671 = vcvt.s32.f32 %v1664
      %v1672 = vmul.f32 %v1671, %v1669
      %v1673 = vxor.u32 %v1672, 2147483648
      %v1674 = vsel %vm1591, %v1673, %v1672
      %v1675 = vsub.s32 4, %v1651
      %v1676 = vsel %vm1591, %v1675, %v1651
      %v1677 = vsel %vm1590, %v658, %v1674
      %v1678 = vsel %vm1590, 0, %v1676
      %v1679 = vcosq.f32.pop %v1677
      %v1680 = vsinq.f32.pop %v1677
      %vm1681 = vweird.f32 %v658
      %v1682 = vadd.s32 %v1678, 3
      %v1683 = vand.u32 %v1682, 3
      %vm1684 = vcmp.lt.s32.totalorder %v1683, 2
      %vm1685 = vcmp.eq.s32.totalorder %v1683, 0
      %v1686 = vxor.u32 %v1680, 2147483648
      %v1687 = vsel %vm1685, %v1679, %v1686
      %vm1688 = vcmp.eq.s32.totalorder %v1683, 2
      %v1689 = vxor.u32 %v1679, 2147483648
      %v1690 = vsel %vm1688, %v1689, %v1680
      %v1691 = vsel %vm1684, %v1687, %v1690
      %v1692 = vsel %vm1681, nan, %v1691
      %v1693 = vand.u32 2147483647, %v660
      %vm1694 = vcmp.le.f32.partialorder %v1693, 0.7853982
      %vm1695 = vcmp.lt.s32.totalorder %v660, 0
      %v1696 = vand.u32 %v660, 2139095040
      %v1697 = vshrl.u32 %v1696, 23
      %v1698 = vsub.s32 %v1697, 127
      %v1699 = vand.u32 2147483647, %v660
      %v1700 = vand.u32 %v1699, 8388607
      %v1701 = vor.u32 %v1700, 8388608
      %v1702 = vsub.s32 0, %v1701
      %v1703 = vadd.s32 %v1698, 1
      %vm1704 = vcmp.gt.s32.totalorder %v1703, 0
      %v1705 = vsel %vm1704, %v1703, 0
      %v1706 = vshrl.u32 %v1705, 5
      %v1707 = vand.u32 %v1705, 31
      %v1708 = vsub.s32 32, %v1707
      %v1709 = vshrl.u32 683565275, %v1708
      %v1710 = vshll.u32 683565275, %v1707
      %v1711 = vshrl.u32 2475754826, %v1708
      %v1712 = vor.u32 %v1710, %v1711
      %v1713 = vshll.u32 2475754826, %v1707
      %v1714 = vshrl.u32 2131351028, %v1708
      %v1715 = vor.u32 %v1713, %v1714
      %v1716 = vshll.u32 2131351028, %v1707
      %v1717 = vshrl.u32 2102212464, %v1708
      %v1718 = vor.u32 %v1716, %v1717
      %v1719 = vshll.u32 2102212464, %v1707
      %v1720 = vshrl.u32 920167782, %v1708
      %v1721 = vor.u32 %v1719, %v1720
      %v1722 = vshll.u32 920167782, %v1707
      %v1723 = vshrl.u32 1326507024, %v1708
      %v1724 = vor.u32 %v1722, %v1723
      %vm1725 = vcmp.lt.s32.totalorder %v1706, 1
      %vm1726 = vcmp.lt.s32.totalorder %v1706, 2
      %vm1727 = vcmp.lt.s32.totalorder %v1706, 3
      %vm1728 = vcmp.lt.s32.totalorder %v1706, 4
      %v1729 = vsel %vm1725, %v1709, %v1712
      %v1730 = vsel %vm1728, %v1718, 2102212464
      %v1731 = vsel %vm1727, %v1715, %v1730
      %v1732 = vsel %vm1726, %v1729, %v1731
      %v1733 = vsel %vm1725, %v1712, %v1715
      %v1734 = vsel %vm1728, %v1721, 920167782
      %v1735 = vsel %vm1727, %v1718, %v1734
      %v1736 = vsel %vm1726, %v1733, %v1735
      %v1737 = vsel %vm1725, %v1715, %v1718
      %v1738 = vsel %vm1728, %v1724, 1326507024
      %v1739 = vsel %vm1727, %v1721, %v1738
      %v1740 = vsel %vm1726, %v1737, %v1739
      %v1741 = vshll.u32 %v1701, 8
      %v1742 = vmul.u32.u64.compose %v1741, %v1740
      %v1743 = vextract.low.u32 %v1742
      %v1744 = vextract.high.u32 %v1742
      %v1745 = vmul.u32.u64.compose %v1741, %v1736
      %v1746 = vextract.low.u32 %v1745
      %v1747 = vextract.high.u32 %v1745
      %v1748 = vmul.u32 %v1741, %v1732
      %v1749 = vadd.s32 %v1744, %v1746
      %vm1750 = vc.u32 %v1744, %v1746
      %v1751 = vadd.s32 %v1747, 1
      %v1752 = vsel %vm1750, %v1751, %v1747
      %v1753 = vadd.s32 %v1748, %v1752
      %v1754 = vadd.s32 %v1753, 536870912
      %v1755 = vshrl.u32 %v1754, 30
      %v1756 = vshll.u32 %v1755, 30
      %v1757 = vsub.s32 %v1753, %v1756
      %vm1758 = vcmp.lt.s32.totalorder %v1757, 0
      %v1759 = vsub.s32 0, %v1757
      %v1760 = vsel %vm1758, %v1759, %v1757
      %v1761 = vclz %v1760
      %v1762 = vsub.s32 %v1761, 2
      %vm1763 = vcmp.gt.s32.totalorder 0, %v1762
      %v1764 = vsel %vm1763, 0, %v1762
      %v1765 = vsub.s32 32, %v1764
      %v1766 = vshll.u32 %v1757, %v1764
      %v1767 = vshrl.u32 %v1749, %v1765
      %v1768 = vor.u32 %v1766, %v1767
      %v1769 = vsub.s32 4294967266, %v1764
      %v1770 = vadd.s32 %v1769, 127
      %v1771 = vshll.u32 %v1770, 23
      %v1772 = vor.u32 4788187, %v1771
      %v1773 = vand.u32 2147483647, %v1772
      %v1775 = vcvt.s32.f32 %v1768
      %v1776 = vmul.f32 %v1775, %v1773
      %v1777 = vxor.u32 %v1776, 2147483648
      %v1778 = vsel %vm1695, %v1777, %v1776
      %v1779 = vsub.s32 4, %v1755
      %v1780 = vsel %vm1695, %v1779, %v1755
      %v1781 = vsel %vm1694, %v660, %v1778
      %v1782 = vsel %vm1694, 0, %v1780
      %v1783 = vcosq.f32.pop %v1781
      %v1784 = vsinq.f32.pop %v1781
      %vm1785 = vweird.f32 %v660
      %v1786 = vadd.s32 %v1782, 3
      %v1787 = vand.u32 %v1786, 3
      %vm1788 = vcmp.lt.s32.totalorder %v1787, 2
      %vm1789 = vcmp.eq.s32.totalorder %v1787, 0
      %v1790 = vxor.u32 %v1784, 2147483648
      %v1791 = vsel %vm1789, %v1783, %v1790
      %vm1792 = vcmp.eq.s32.totalorder %v1787, 2
      %v1793 = vxor.u32 %v1783, 2147483648
      %v1794 = vsel %vm1792, %v1793, %v1784
      %v1795 = vsel %vm1788, %v1791, %v1794
      %v1796 = vsel %vm1785, nan, %v1795
      %v1797 = vand.u32 2147483647, %v747
      %vm1798 = vcmp.le.f32.partialorder %v1797, 0.7853982
      %vm1799 = vcmp.lt.s32.totalorder %v747, 0
      %v1800 = vand.u32 %v747, 2139095040
      %v1801 = vshrl.u32 %v1800, 23
      %v1802 = vsub.s32 %v1801, 127
      %v1803 = vand.u32 2147483647, %v747
      %v1804 = vand.u32 %v1803, 8388607
      %v1805 = vor.u32 %v1804, 8388608
      %v1806 = vsub.s32 0, %v1805
      %v1807 = vadd.s32 %v1802, 1
      %vm1808 = vcmp.gt.s32.totalorder %v1807, 0
      %v1809 = vsel %vm1808, %v1807, 0
      %v1810 = vshrl.u32 %v1809, 5
      %v1811 = vand.u32 %v1809, 31
      %v1812 = vsub.s32 32, %v1811
      %v1813 = vshrl.u32 683565275, %v1812
      %v1814 = vshll.u32 683565275, %v1811
      %v1815 = vshrl.u32 2475754826, %v1812
      %v1816 = vor.u32 %v1814, %v1815
      %v1817 = vshll.u32 2475754826, %v1811
      %v1818 = vshrl.u32 2131351028, %v1812
      %v1819 = vor.u32 %v1817, %v1818
      %v1820 = vshll.u32 2131351028, %v1811
      %v1821 = vshrl.u32 2102212464, %v1812
      %v1822 = vor.u32 %v1820, %v1821
      %v1823 = vshll.u32 2102212464, %v1811
      %v1824 = vshrl.u32 920167782, %v1812
      %v1825 = vor.u32 %v1823, %v1824
      %v1826 = vshll.u32 920167782, %v1811
      %v1827 = vshrl.u32 1326507024, %v1812
      %v1828 = vor.u32 %v1826, %v1827
      %vm1829 = vcmp.lt.s32.totalorder %v1810, 1
      %vm1830 = vcmp.lt.s32.totalorder %v1810, 2
      %vm1831 = vcmp.lt.s32.totalorder %v1810, 3
      %vm1832 = vcmp.lt.s32.totalorder %v1810, 4
      %v1833 = vsel %vm1829, %v1813, %v1816
      %v1834 = vsel %vm1832, %v1822, 2102212464
      %v1835 = vsel %vm1831, %v1819, %v1834
      %v1836 = vsel %vm1830, %v1833, %v1835
      %v1837 = vsel %vm1829, %v1816, %v1819
      %v1838 = vsel %vm1832, %v1825, 920167782
      %v1839 = vsel %vm1831, %v1822, %v1838
      %v1840 = vsel %vm1830, %v1837, %v1839
      %v1841 = vsel %vm1829, %v1819, %v1822
      %v1842 = vsel %vm1832, %v1828, 1326507024
      %v1843 = vsel %vm1831, %v1825, %v1842
      %v1844 = vsel %vm1830, %v1841, %v1843
      %v1845 = vshll.u32 %v1805, 8
      %v1846 = vmul.u32.u64.compose %v1845, %v1844
      %v1847 = vextract.low.u32 %v1846
      %v1848 = vextract.high.u32 %v1846
      %v1849 = vmul.u32.u64.compose %v1845, %v1840
      %v1850 = vextract.low.u32 %v1849
      %v1851 = vextract.high.u32 %v1849
      %v1852 = vmul.u32 %v1845, %v1836
      %v1853 = vadd.s32 %v1848, %v1850
      %vm1854 = vc.u32 %v1848, %v1850
      %v1855 = vadd.s32 %v1851, 1
      %v1856 = vsel %vm1854, %v1855, %v1851
      %v1857 = vadd.s32 %v1852, %v1856
      %v1858 = vadd.s32 %v1857, 536870912
      %v1859 = vshrl.u32 %v1858, 30
      %v1860 = vshll.u32 %v1859, 30
      %v1861 = vsub.s32 %v1857, %v1860
      %vm1862 = vcmp.lt.s32.totalorder %v1861, 0
      %v1863 = vsub.s32 0, %v1861
      %v1864 = vsel %vm1862, %v1863, %v1861
      %v1865 = vclz %v1864
      %v1866 = vsub.s32 %v1865, 2
      %vm1867 = vcmp.gt.s32.totalorder 0, %v1866
      %v1868 = vsel %vm1867, 0, %v1866
      %v1869 = vsub.s32 32, %v1868
      %v1870 = vshll.u32 %v1861, %v1868
      %v1871 = vshrl.u32 %v1853, %v1869
      %v1872 = vor.u32 %v1870, %v1871
      %v1873 = vsub.s32 4294967266, %v1868
      %v1874 = vadd.s32 %v1873, 127
      %v1875 = vshll.u32 %v1874, 23
      %v1876 = vor.u32 4788187, %v1875
      %v1877 = vand.u32 2147483647, %v1876
      %v1879 = vcvt.s32.f32 %v1872
      %v1880 = vmul.f32 %v1879, %v1877
      %v1881 = vxor.u32 %v1880, 2147483648
      %v1882 = vsel %vm1799, %v1881, %v1880
      %v1883 = vsub.s32 4, %v1859
      %v1884 = vsel %vm1799, %v1883, %v1859
      %v1885 = vsel %vm1798, %v747, %v1882
      %v1886 = vsel %vm1798, 0, %v1884
      %v1887 = vcosq.f32.pop %v1885
      %v1888 = vsinq.f32.pop %v1885
      %vm1889 = vweird.f32 %v747
      %v1890 = vadd.s32 %v1886, 3
      %v1891 = vand.u32 %v1890, 3
      %vm1892 = vcmp.lt.s32.totalorder %v1891, 2
      %vm1893 = vcmp.eq.s32.totalorder %v1891, 0
      %v1894 = vxor.u32 %v1888, 2147483648
      %v1895 = vsel %vm1893, %v1887, %v1894
      %vm1896 = vcmp.eq.s32.totalorder %v1891, 2
      %v1897 = vxor.u32 %v1887, 2147483648
      %v1898 = vsel %vm1896, %v1897, %v1888
      %v1899 = vsel %vm1892, %v1895, %v1898
      %v1900 = vsel %vm1889, nan, %v1899
      %v1901 = vand.u32 2147483647, %v749
      %vm1902 = vcmp.le.f32.partialorder %v1901, 0.7853982
      %vm1903 = vcmp.lt.s32.totalorder %v749, 0
      %v1904 = vand.u32 %v749, 2139095040
      %v1905 = vshrl.u32 %v1904, 23
      %v1906 = vsub.s32 %v1905, 127
      %v1907 = vand.u32 2147483647, %v749
      %v1908 = vand.u32 %v1907, 8388607
      %v1909 = vor.u32 %v1908, 8388608
      %v1910 = vsub.s32 0, %v1909
      %v1911 = vadd.s32 %v1906, 1
      %vm1912 = vcmp.gt.s32.totalorder %v1911, 0
      %v1913 = vsel %vm1912, %v1911, 0
      %v1914 = vshrl.u32 %v1913, 5
      %v1915 = vand.u32 %v1913, 31
      %v1916 = vsub.s32 32, %v1915
      %v1917 = vshrl.u32 683565275, %v1916
      %v1918 = vshll.u32 683565275, %v1915
      %v1919 = vshrl.u32 2475754826, %v1916
      %v1920 = vor.u32 %v1918, %v1919
      %v1921 = vshll.u32 2475754826, %v1915
      %v1922 = vshrl.u32 2131351028, %v1916
      %v1923 = vor.u32 %v1921, %v1922
      %v1924 = vshll.u32 2131351028, %v1915
      %v1925 = vshrl.u32 2102212464, %v1916
      %v1926 = vor.u32 %v1924, %v1925
      %v1927 = vshll.u32 2102212464, %v1915
      %v1928 = vshrl.u32 920167782, %v1916
      %v1929 = vor.u32 %v1927, %v1928
      %v1930 = vshll.u32 920167782, %v1915
      %v1931 = vshrl.u32 1326507024, %v1916
      %v1932 = vor.u32 %v1930, %v1931
      %vm1933 = vcmp.lt.s32.totalorder %v1914, 1
      %vm1934 = vcmp.lt.s32.totalorder %v1914, 2
      %vm1935 = vcmp.lt.s32.totalorder %v1914, 3
      %vm1936 = vcmp.lt.s32.totalorder %v1914, 4
      %v1937 = vsel %vm1933, %v1917, %v1920
      %v1938 = vsel %vm1936, %v1926, 2102212464
      %v1939 = vsel %vm1935, %v1923, %v1938
      %v1940 = vsel %vm1934, %v1937, %v1939
      %v1941 = vsel %vm1933, %v1920, %v1923
      %v1942 = vsel %vm1936, %v1929, 920167782
      %v1943 = vsel %vm1935, %v1926, %v1942
      %v1944 = vsel %vm1934, %v1941, %v1943
      %v1945 = vsel %vm1933, %v1923, %v1926
      %v1946 = vsel %vm1936, %v1932, 1326507024
      %v1947 = vsel %vm1935, %v1929, %v1946
      %v1948 = vsel %vm1934, %v1945, %v1947
      %v1949 = vshll.u32 %v1909, 8
      %v1950 = vmul.u32.u64.compose %v1949, %v1948
      %v1951 = vextract.low.u32 %v1950
      %v1952 = vextract.high.u32 %v1950
      %v1953 = vmul.u32.u64.compose %v1949, %v1944
      %v1954 = vextract.low.u32 %v1953
      %v1955 = vextract.high.u32 %v1953
      %v1956 = vmul.u32 %v1949, %v1940
      %v1957 = vadd.s32 %v1952, %v1954
      %vm1958 = vc.u32 %v1952, %v1954
      %v1959 = vadd.s32 %v1955, 1
      %v1960 = vsel %vm1958, %v1959, %v1955
      %v1961 = vadd.s32 %v1956, %v1960
      %v1962 = vadd.s32 %v1961, 536870912
      %v1963 = vshrl.u32 %v1962, 30
      %v1964 = vshll.u32 %v1963, 30
      %v1965 = vsub.s32 %v1961, %v1964
      %vm1966 = vcmp.lt.s32.totalorder %v1965, 0
      %v1967 = vsub.s32 0, %v1965
      %v1968 = vsel %vm1966, %v1967, %v1965
      %v1969 = vclz %v1968
      %v1970 = vsub.s32 %v1969, 2
      %vm1971 = vcmp.gt.s32.totalorder 0, %v1970
      %v1972 = vsel %vm1971, 0, %v1970
      %v1973 = vsub.s32 32, %v1972
      %v1974 = vshll.u32 %v1965, %v1972
      %v1975 = vshrl.u32 %v1957, %v1973
      %v1976 = vor.u32 %v1974, %v1975
      %v1977 = vsub.s32 4294967266, %v1972
      %v1978 = vadd.s32 %v1977, 127
      %v1979 = vshll.u32 %v1978, 23
      %v1980 = vor.u32 4788187, %v1979
      %v1981 = vand.u32 2147483647, %v1980
      %v1983 = vcvt.s32.f32 %v1976
      %v1984 = vmul.f32 %v1983, %v1981
      %v1985 = vxor.u32 %v1984, 2147483648
      %v1986 = vsel %vm1903, %v1985, %v1984
      %v1987 = vsub.s32 4, %v1963
      %v1988 = vsel %vm1903, %v1987, %v1963
      %v1989 = vsel %vm1902, %v749, %v1986
      %v1990 = vsel %vm1902, 0, %v1988
      %v1991 = vcosq.f32.pop %v1989
      %v1992 = vsinq.f32.pop %v1989
      %vm1993 = vweird.f32 %v749
      %v1994 = vadd.s32 %v1990, 3
      %v1995 = vand.u32 %v1994, 3
      %vm1996 = vcmp.lt.s32.totalorder %v1995, 2
      %vm1997 = vcmp.eq.s32.totalorder %v1995, 0
      %v1998 = vxor.u32 %v1992, 2147483648
      %v1999 = vsel %vm1997, %v1991, %v1998
      %vm2000 = vcmp.eq.s32.totalorder %v1995, 2
      %v2001 = vxor.u32 %v1991, 2147483648
      %v2002 = vsel %vm2000, %v2001, %v1992
      %v2003 = vsel %vm1996, %v1999, %v2002
      %v2004 = vsel %vm1993, nan, %v2003
      %v2005 = vand.u32 2147483647, %v664
      %vm2006 = vcmp.le.f32.partialorder %v2005, 0.7853982
      %vm2007 = vcmp.lt.s32.totalorder %v664, 0
      %v2008 = vand.u32 %v664, 2139095040
      %v2009 = vshrl.u32 %v2008, 23
      %v2010 = vsub.s32 %v2009, 127
      %v2011 = vand.u32 2147483647, %v664
      %v2012 = vand.u32 %v2011, 8388607
      %v2013 = vor.u32 %v2012, 8388608
      %v2014 = vsub.s32 0, %v2013
      %v2015 = vadd.s32 %v2010, 1
      %vm2016 = vcmp.gt.s32.totalorder %v2015, 0
      %v2017 = vsel %vm2016, %v2015, 0
      %v2018 = vshrl.u32 %v2017, 5
      %v2019 = vand.u32 %v2017, 31
      %v2020 = vsub.s32 32, %v2019
      %v2021 = vshrl.u32 683565275, %v2020
      %v2022 = vshll.u32 683565275, %v2019
      %v2023 = vshrl.u32 2475754826, %v2020
      %v2024 = vor.u32 %v2022, %v2023
      %v2025 = vshll.u32 2475754826, %v2019
      %v2026 = vshrl.u32 2131351028, %v2020
      %v2027 = vor.u32 %v2025, %v2026
      %v2028 = vshll.u32 2131351028, %v2019
      %v2029 = vshrl.u32 2102212464, %v2020
      %v2030 = vor.u32 %v2028, %v2029
      %v2031 = vshll.u32 2102212464, %v2019
      %v2032 = vshrl.u32 920167782, %v2020
      %v2033 = vor.u32 %v2031, %v2032
      %v2034 = vshll.u32 920167782, %v2019
      %v2035 = vshrl.u32 1326507024, %v2020
      %v2036 = vor.u32 %v2034, %v2035
      %vm2037 = vcmp.lt.s32.totalorder %v2018, 1
      %vm2038 = vcmp.lt.s32.totalorder %v2018, 2
      %vm2039 = vcmp.lt.s32.totalorder %v2018, 3
      %vm2040 = vcmp.lt.s32.totalorder %v2018, 4
      %v2041 = vsel %vm2037, %v2021, %v2024
      %v2042 = vsel %vm2040, %v2030, 2102212464
      %v2043 = vsel %vm2039, %v2027, %v2042
      %v2044 = vsel %vm2038, %v2041, %v2043
      %v2045 = vsel %vm2037, %v2024, %v2027
      %v2046 = vsel %vm2040, %v2033, 920167782
      %v2047 = vsel %vm2039, %v2030, %v2046
      %v2048 = vsel %vm2038, %v2045, %v2047
      %v2049 = vsel %vm2037, %v2027, %v2030
      %v2050 = vsel %vm2040, %v2036, 1326507024
      %v2051 = vsel %vm2039, %v2033, %v2050
      %v2052 = vsel %vm2038, %v2049, %v2051
      %v2053 = vshll.u32 %v2013, 8
      %v2054 = vmul.u32.u64.compose %v2053, %v2052
      %v2055 = vextract.low.u32 %v2054
      %v2056 = vextract.high.u32 %v2054
      %v2057 = vmul.u32.u64.compose %v2053, %v2048
      %v2058 = vextract.low.u32 %v2057
      %v2059 = vextract.high.u32 %v2057
      %v2060 = vmul.u32 %v2053, %v2044
      %v2061 = vadd.s32 %v2056, %v2058
      %vm2062 = vc.u32 %v2056, %v2058
      %v2063 = vadd.s32 %v2059, 1
      %v2064 = vsel %vm2062, %v2063, %v2059
      %v2065 = vadd.s32 %v2060, %v2064
      %v2066 = vadd.s32 %v2065, 536870912
      %v2067 = vshrl.u32 %v2066, 30
      %v2068 = vshll.u32 %v2067, 30
      %v2069 = vsub.s32 %v2065, %v2068
      %vm2070 = vcmp.lt.s32.totalorder %v2069, 0
      %v2071 = vsub.s32 0, %v2069
      %v2072 = vsel %vm2070, %v2071, %v2069
      %v2073 = vclz %v2072
      %v2074 = vsub.s32 %v2073, 2
      %vm2075 = vcmp.gt.s32.totalorder 0, %v2074
      %v2076 = vsel %vm2075, 0, %v2074
      %v2077 = vsub.s32 32, %v2076
      %v2078 = vshll.u32 %v2069, %v2076
      %v2079 = vshrl.u32 %v2061, %v2077
      %v2080 = vor.u32 %v2078, %v2079
      %v2081 = vsub.s32 4294967266, %v2076
      %v2082 = vadd.s32 %v2081, 127
      %v2083 = vshll.u32 %v2082, 23
      %v2084 = vor.u32 4788187, %v2083
      %v2085 = vand.u32 2147483647, %v2084
      %v2087 = vcvt.s32.f32 %v2080
      %v2088 = vmul.f32 %v2087, %v2085
      %v2089 = vxor.u32 %v2088, 2147483648
      %v2090 = vsel %vm2007, %v2089, %v2088
      %v2091 = vsub.s32 4, %v2067
      %v2092 = vsel %vm2007, %v2091, %v2067
      %v2093 = vsel %vm2006, %v664, %v2090
      %v2094 = vsel %vm2006, 0, %v2092
      %v2095 = vcosq.f32.pop %v2093
      %v2096 = vsinq.f32.pop %v2093
      %vm2097 = vweird.f32 %v664
      %v2098 = vadd.s32 %v2094, 3
      %v2099 = vand.u32 %v2098, 3
      %vm2100 = vcmp.lt.s32.totalorder %v2099, 2
      %vm2101 = vcmp.eq.s32.totalorder %v2099, 0
      %v2102 = vxor.u32 %v2096, 2147483648
      %v2103 = vsel %vm2101, %v2095, %v2102
      %vm2104 = vcmp.eq.s32.totalorder %v2099, 2
      %v2105 = vxor.u32 %v2095, 2147483648
      %v2106 = vsel %vm2104, %v2105, %v2096
      %v2107 = vsel %vm2100, %v2103, %v2106
      %v2108 = vsel %vm2097, nan, %v2107
      %v2109 = vand.u32 2147483647, %v666
      %vm2110 = vcmp.le.f32.partialorder %v2109, 0.7853982
      %vm2111 = vcmp.lt.s32.totalorder %v666, 0
      %v2112 = vand.u32 %v666, 2139095040
      %v2113 = vshrl.u32 %v2112, 23
      %v2114 = vsub.s32 %v2113, 127
      %v2115 = vand.u32 2147483647, %v666
      %v2116 = vand.u32 %v2115, 8388607
      %v2117 = vor.u32 %v2116, 8388608
      %v2118 = vsub.s32 0, %v2117
      %v2119 = vadd.s32 %v2114, 1
      %vm2120 = vcmp.gt.s32.totalorder %v2119, 0
      %v2121 = vsel %vm2120, %v2119, 0
      %v2122 = vshrl.u32 %v2121, 5
      %v2123 = vand.u32 %v2121, 31
      %v2124 = vsub.s32 32, %v2123
      %v2125 = vshrl.u32 683565275, %v2124
      %v2126 = vshll.u32 683565275, %v2123
      %v2127 = vshrl.u32 2475754826, %v2124
      %v2128 = vor.u32 %v2126, %v2127
      %v2129 = vshll.u32 2475754826, %v2123
      %v2130 = vshrl.u32 2131351028, %v2124
      %v2131 = vor.u32 %v2129, %v2130
      %v2132 = vshll.u32 2131351028, %v2123
      %v2133 = vshrl.u32 2102212464, %v2124
      %v2134 = vor.u32 %v2132, %v2133
      %v2135 = vshll.u32 2102212464, %v2123
      %v2136 = vshrl.u32 920167782, %v2124
      %v2137 = vor.u32 %v2135, %v2136
      %v2138 = vshll.u32 920167782, %v2123
      %v2139 = vshrl.u32 1326507024, %v2124
      %v2140 = vor.u32 %v2138, %v2139
      %vm2141 = vcmp.lt.s32.totalorder %v2122, 1
      %vm2142 = vcmp.lt.s32.totalorder %v2122, 2
      %vm2143 = vcmp.lt.s32.totalorder %v2122, 3
      %vm2144 = vcmp.lt.s32.totalorder %v2122, 4
      %v2145 = vsel %vm2141, %v2125, %v2128
      %v2146 = vsel %vm2144, %v2134, 2102212464
      %v2147 = vsel %vm2143, %v2131, %v2146
      %v2148 = vsel %vm2142, %v2145, %v2147
      %v2149 = vsel %vm2141, %v2128, %v2131
      %v2150 = vsel %vm2144, %v2137, 920167782
      %v2151 = vsel %vm2143, %v2134, %v2150
      %v2152 = vsel %vm2142, %v2149, %v2151
      %v2153 = vsel %vm2141, %v2131, %v2134
      %v2154 = vsel %vm2144, %v2140, 1326507024
      %v2155 = vsel %vm2143, %v2137, %v2154
      %v2156 = vsel %vm2142, %v2153, %v2155
      %v2157 = vshll.u32 %v2117, 8
      %v2158 = vmul.u32.u64.compose %v2157, %v2156
      %v2159 = vextract.low.u32 %v2158
      %v2160 = vextract.high.u32 %v2158
      %v2161 = vmul.u32.u64.compose %v2157, %v2152
      %v2162 = vextract.low.u32 %v2161
      %v2163 = vextract.high.u32 %v2161
      %v2164 = vmul.u32 %v2157, %v2148
      %v2165 = vadd.s32 %v2160, %v2162
      %vm2166 = vc.u32 %v2160, %v2162
      %v2167 = vadd.s32 %v2163, 1
      %v2168 = vsel %vm2166, %v2167, %v2163
      %v2169 = vadd.s32 %v2164, %v2168
      %v2170 = vadd.s32 %v2169, 536870912
      %v2171 = vshrl.u32 %v2170, 30
      %v2172 = vshll.u32 %v2171, 30
      %v2173 = vsub.s32 %v2169, %v2172
      %vm2174 = vcmp.lt.s32.totalorder %v2173, 0
      %v2175 = vsub.s32 0, %v2173
      %v2176 = vsel %vm2174, %v2175, %v2173
      %v2177 = vclz %v2176
      %v2178 = vsub.s32 %v2177, 2
      %vm2179 = vcmp.gt.s32.totalorder 0, %v2178
      %v2180 = vsel %vm2179, 0, %v2178
      %v2181 = vsub.s32 32, %v2180
      %v2182 = vshll.u32 %v2173, %v2180
      %v2183 = vshrl.u32 %v2165, %v2181
      %v2184 = vor.u32 %v2182, %v2183
      %v2185 = vsub.s32 4294967266, %v2180
      %v2186 = vadd.s32 %v2185, 127
      %v2187 = vshll.u32 %v2186, 23
      %v2188 = vor.u32 4788187, %v2187
      %v2189 = vand.u32 2147483647, %v2188
      %v2191 = vcvt.s32.f32 %v2184
      %v2192 = vmul.f32 %v2191, %v2189
      %v2193 = vxor.u32 %v2192, 2147483648
      %v2194 = vsel %vm2111, %v2193, %v2192
      %v2195 = vsub.s32 4, %v2171
      %v2196 = vsel %vm2111, %v2195, %v2171
      %v2197 = vsel %vm2110, %v666, %v2194
      %v2198 = vsel %vm2110, 0, %v2196
      %v2199 = vcosq.f32.pop %v2197
      %v2200 = vsinq.f32.pop %v2197
      %vm2201 = vweird.f32 %v666
      %v2202 = vadd.s32 %v2198, 3
      %v2203 = vand.u32 %v2202, 3
      %vm2204 = vcmp.lt.s32.totalorder %v2203, 2
      %vm2205 = vcmp.eq.s32.totalorder %v2203, 0
      %v2206 = vxor.u32 %v2200, 2147483648
      %v2207 = vsel %vm2205, %v2199, %v2206
      %vm2208 = vcmp.eq.s32.totalorder %v2203, 2
      %v2209 = vxor.u32 %v2199, 2147483648
      %v2210 = vsel %vm2208, %v2209, %v2200
      %v2211 = vsel %vm2204, %v2207, %v2210
      %v2212 = vsel %vm2201, nan, %v2211
      %v2213 = vand.u32 2147483647, %v753
      %vm2214 = vcmp.le.f32.partialorder %v2213, 0.7853982
      %vm2215 = vcmp.lt.s32.totalorder %v753, 0
      %v2216 = vand.u32 %v753, 2139095040
      %v2217 = vshrl.u32 %v2216, 23
      %v2218 = vsub.s32 %v2217, 127
      %v2219 = vand.u32 2147483647, %v753
      %v2220 = vand.u32 %v2219, 8388607
      %v2221 = vor.u32 %v2220, 8388608
      %v2222 = vsub.s32 0, %v2221
      %v2223 = vadd.s32 %v2218, 1
      %vm2224 = vcmp.gt.s32.totalorder %v2223, 0
      %v2225 = vsel %vm2224, %v2223, 0
      %v2226 = vshrl.u32 %v2225, 5
      %v2227 = vand.u32 %v2225, 31
      %v2228 = vsub.s32 32, %v2227
      %v2229 = vshrl.u32 683565275, %v2228
      %v2230 = vshll.u32 683565275, %v2227
      %v2231 = vshrl.u32 2475754826, %v2228
      %v2232 = vor.u32 %v2230, %v2231
      %v2233 = vshll.u32 2475754826, %v2227
      %v2234 = vshrl.u32 2131351028, %v2228
      %v2235 = vor.u32 %v2233, %v2234
      %v2236 = vshll.u32 2131351028, %v2227
      %v2237 = vshrl.u32 2102212464, %v2228
      %v2238 = vor.u32 %v2236, %v2237
      %v2239 = vshll.u32 2102212464, %v2227
      %v2240 = vshrl.u32 920167782, %v2228
      %v2241 = vor.u32 %v2239, %v2240
      %v2242 = vshll.u32 920167782, %v2227
      %v2243 = vshrl.u32 1326507024, %v2228
      %v2244 = vor.u32 %v2242, %v2243
      %vm2245 = vcmp.lt.s32.totalorder %v2226, 1
      %vm2246 = vcmp.lt.s32.totalorder %v2226, 2
      %vm2247 = vcmp.lt.s32.totalorder %v2226, 3
      %vm2248 = vcmp.lt.s32.totalorder %v2226, 4
      %v2249 = vsel %vm2245, %v2229, %v2232
      %v2250 = vsel %vm2248, %v2238, 2102212464
      %v2251 = vsel %vm2247, %v2235, %v2250
      %v2252 = vsel %vm2246, %v2249, %v2251
      %v2253 = vsel %vm2245, %v2232, %v2235
      %v2254 = vsel %vm2248, %v2241, 920167782
      %v2255 = vsel %vm2247, %v2238, %v2254
      %v2256 = vsel %vm2246, %v2253, %v2255
      %v2257 = vsel %vm2245, %v2235, %v2238
      %v2258 = vsel %vm2248, %v2244, 1326507024
      %v2259 = vsel %vm2247, %v2241, %v2258
      %v2260 = vsel %vm2246, %v2257, %v2259
      %v2261 = vshll.u32 %v2221, 8
      %v2262 = vmul.u32.u64.compose %v2261, %v2260
      %v2263 = vextract.low.u32 %v2262
      %v2264 = vextract.high.u32 %v2262
      %v2265 = vmul.u32.u64.compose %v2261, %v2256
      %v2266 = vextract.low.u32 %v2265
      %v2267 = vextract.high.u32 %v2265
      %v2268 = vmul.u32 %v2261, %v2252
      %v2269 = vadd.s32 %v2264, %v2266
      %vm2270 = vc.u32 %v2264, %v2266
      %v2271 = vadd.s32 %v2267, 1
      %v2272 = vsel %vm2270, %v2271, %v2267
      %v2273 = vadd.s32 %v2268, %v2272
      %v2274 = vadd.s32 %v2273, 536870912
      %v2275 = vshrl.u32 %v2274, 30
      %v2276 = vshll.u32 %v2275, 30
      %v2277 = vsub.s32 %v2273, %v2276
      %vm2278 = vcmp.lt.s32.totalorder %v2277, 0
      %v2279 = vsub.s32 0, %v2277
      %v2280 = vsel %vm2278, %v2279, %v2277
      %v2281 = vclz %v2280
      %v2282 = vsub.s32 %v2281, 2
      %vm2283 = vcmp.gt.s32.totalorder 0, %v2282
      %v2284 = vsel %vm2283, 0, %v2282
      %v2285 = vsub.s32 32, %v2284
      %v2286 = vshll.u32 %v2277, %v2284
      %v2287 = vshrl.u32 %v2269, %v2285
      %v2288 = vor.u32 %v2286, %v2287
      %v2289 = vsub.s32 4294967266, %v2284
      %v2290 = vadd.s32 %v2289, 127
      %v2291 = vshll.u32 %v2290, 23
      %v2292 = vor.u32 4788187, %v2291
      %v2293 = vand.u32 2147483647, %v2292
      %v2295 = vcvt.s32.f32 %v2288
      %v2296 = vmul.f32 %v2295, %v2293
      %v2297 = vxor.u32 %v2296, 2147483648
      %v2298 = vsel %vm2215, %v2297, %v2296
      %v2299 = vsub.s32 4, %v2275
      %v2300 = vsel %vm2215, %v2299, %v2275
      %v2301 = vsel %vm2214, %v753, %v2298
      %v2302 = vsel %vm2214, 0, %v2300
      %v2303 = vcosq.f32.pop %v2301
      %v2304 = vsinq.f32.pop %v2301
      %vm2305 = vweird.f32 %v753
      %v2306 = vadd.s32 %v2302, 3
      %v2307 = vand.u32 %v2306, 3
      %vm2308 = vcmp.lt.s32.totalorder %v2307, 2
      %vm2309 = vcmp.eq.s32.totalorder %v2307, 0
      %v2310 = vxor.u32 %v2304, 2147483648
      %v2311 = vsel %vm2309, %v2303, %v2310
      %vm2312 = vcmp.eq.s32.totalorder %v2307, 2
      %v2313 = vxor.u32 %v2303, 2147483648
      %v2314 = vsel %vm2312, %v2313, %v2304
      %v2315 = vsel %vm2308, %v2311, %v2314
      %v2316 = vsel %vm2305, nan, %v2315
      %v2317 = vand.u32 2147483647, %v755
      %vm2318 = vcmp.le.f32.partialorder %v2317, 0.7853982
      %vm2319 = vcmp.lt.s32.totalorder %v755, 0
      %v2320 = vand.u32 %v755, 2139095040
      %v2321 = vshrl.u32 %v2320, 23
      %v2322 = vsub.s32 %v2321, 127
      %v2323 = vand.u32 2147483647, %v755
      %v2324 = vand.u32 %v2323, 8388607
      %v2325 = vor.u32 %v2324, 8388608
      %v2326 = vsub.s32 0, %v2325
      %v2327 = vadd.s32 %v2322, 1
      %vm2328 = vcmp.gt.s32.totalorder %v2327, 0
      %v2329 = vsel %vm2328, %v2327, 0
      %v2330 = vshrl.u32 %v2329, 5
      %v2331 = vand.u32 %v2329, 31
      %v2332 = vsub.s32 32, %v2331
      %v2333 = vshrl.u32 683565275, %v2332
      %v2334 = vshll.u32 683565275, %v2331
      %v2335 = vshrl.u32 2475754826, %v2332
      %v2336 = vor.u32 %v2334, %v2335
      %v2337 = vshll.u32 2475754826, %v2331
      %v2338 = vshrl.u32 2131351028, %v2332
      %v2339 = vor.u32 %v2337, %v2338
      %v2340 = vshll.u32 2131351028, %v2331
      %v2341 = vshrl.u32 2102212464, %v2332
      %v2342 = vor.u32 %v2340, %v2341
      %v2343 = vshll.u32 2102212464, %v2331
      %v2344 = vshrl.u32 920167782, %v2332
      %v2345 = vor.u32 %v2343, %v2344
      %v2346 = vshll.u32 920167782, %v2331
      %v2347 = vshrl.u32 1326507024, %v2332
      %v2348 = vor.u32 %v2346, %v2347
      %vm2349 = vcmp.lt.s32.totalorder %v2330, 1
      %vm2350 = vcmp.lt.s32.totalorder %v2330, 2
      %vm2351 = vcmp.lt.s32.totalorder %v2330, 3
      %vm2352 = vcmp.lt.s32.totalorder %v2330, 4
      %v2353 = vsel %vm2349, %v2333, %v2336
      %v2354 = vsel %vm2352, %v2342, 2102212464
      %v2355 = vsel %vm2351, %v2339, %v2354
      %v2356 = vsel %vm2350, %v2353, %v2355
      %v2357 = vsel %vm2349, %v2336, %v2339
      %v2358 = vsel %vm2352, %v2345, 920167782
      %v2359 = vsel %vm2351, %v2342, %v2358
      %v2360 = vsel %vm2350, %v2357, %v2359
      %v2361 = vsel %vm2349, %v2339, %v2342
      %v2362 = vsel %vm2352, %v2348, 1326507024
      %v2363 = vsel %vm2351, %v2345, %v2362
      %v2364 = vsel %vm2350, %v2361, %v2363
      %v2365 = vshll.u32 %v2325, 8
      %v2366 = vmul.u32.u64.compose %v2365, %v2364
      %v2367 = vextract.low.u32 %v2366
      %v2368 = vextract.high.u32 %v2366
      %v2369 = vmul.u32.u64.compose %v2365, %v2360
      %v2370 = vextract.low.u32 %v2369
      %v2371 = vextract.high.u32 %v2369
      %v2372 = vmul.u32 %v2365, %v2356
      %v2373 = vadd.s32 %v2368, %v2370
      %vm2374 = vc.u32 %v2368, %v2370
      %v2375 = vadd.s32 %v2371, 1
      %v2376 = vsel %vm2374, %v2375, %v2371
      %v2377 = vadd.s32 %v2372, %v2376
      %v2378 = vadd.s32 %v2377, 536870912
      %v2379 = vshrl.u32 %v2378, 30
      %v2380 = vshll.u32 %v2379, 30
      %v2381 = vsub.s32 %v2377, %v2380
      %vm2382 = vcmp.lt.s32.totalorder %v2381, 0
      %v2383 = vsub.s32 0, %v2381
      %v2384 = vsel %vm2382, %v2383, %v2381
      %v2385 = vclz %v2384
      %v2386 = vsub.s32 %v2385, 2
      %vm2387 = vcmp.gt.s32.totalorder 0, %v2386
      %v2388 = vsel %vm2387, 0, %v2386
      %v2389 = vsub.s32 32, %v2388
      %v2390 = vshll.u32 %v2381, %v2388
      %v2391 = vshrl.u32 %v2373, %v2389
      %v2392 = vor.u32 %v2390, %v2391
      %v2393 = vsub.s32 4294967266, %v2388
      %v2394 = vadd.s32 %v2393, 127
      %v2395 = vshll.u32 %v2394, 23
      %v2396 = vor.u32 4788187, %v2395
      %v2397 = vand.u32 2147483647, %v2396
      %v2399 = vcvt.s32.f32 %v2392
      %v2400 = vmul.f32 %v2399, %v2397
      %v2401 = vxor.u32 %v2400, 2147483648
      %v2402 = vsel %vm2319, %v2401, %v2400
      %v2403 = vsub.s32 4, %v2379
      %v2404 = vsel %vm2319, %v2403, %v2379
      %v2405 = vsel %vm2318, %v755, %v2402
      %v2406 = vsel %vm2318, 0, %v2404
      %v2407 = vcosq.f32.pop %v2405
      %v2408 = vsinq.f32.pop %v2405
      %vm2409 = vweird.f32 %v755
      %v2410 = vadd.s32 %v2406, 3
      %v2411 = vand.u32 %v2410, 3
      %vm2412 = vcmp.lt.s32.totalorder %v2411, 2
      %vm2413 = vcmp.eq.s32.totalorder %v2411, 0
      %v2414 = vxor.u32 %v2408, 2147483648
      %v2415 = vsel %vm2413, %v2407, %v2414
      %vm2416 = vcmp.eq.s32.totalorder %v2411, 2
      %v2417 = vxor.u32 %v2407, 2147483648
      %v2418 = vsel %vm2416, %v2417, %v2408
      %v2419 = vsel %vm2412, %v2415, %v2418
      %v2420 = vsel %vm2409, nan, %v2419
      %v2421 = vld [vmem:[%s3] sm:$0xff]
      %v2422 = vld [vmem:[%s3 + $0x8] sm:$0xff]
      %v2423 = vld [vmem:[%s3 + $0x10] sm:$0xff]
      %v2424 = vld [vmem:[%s3 + $0x18] sm:$0xff]
      %v2425 = vld [vmem:[%s4] sm:$0xff]
      %v2426 = vld [vmem:[%s4 + $0x8] sm:$0xff]
      %v2427 = vld [vmem:[%s4 + $0x10] sm:$0xff]
      %v2428 = vld [vmem:[%s4 + $0x18] sm:$0xff]
      %2430 = vset.pattern.permute.xlu0 0
      %2431 = vperm.xlu0 %2430, %v2425
      %v2432 = vpop.permute.xlu0 %2431
      %2435 = vset.pattern.permute.xlu0 0
      %2436 = vperm.xlu0 %2435, %v2426
      %v2437 = vpop.permute.xlu0 %2436
      %2440 = vset.pattern.permute.xlu0 0
      %2441 = vperm.xlu0 %2440, %v2427
      %v2442 = vpop.permute.xlu0 %2441
      %2445 = vset.pattern.permute.xlu0 0
      %2446 = vperm.xlu0 %2445, %v2428
      %v2447 = vpop.permute.xlu0 %2446
      %vm2449 = vcmask 261120
      %v2451 = vsel %vm2449, %v2421, 0
      %v2454 = vsel %vm2449, %v2422, 0
      %v2457 = vsel %vm2449, %v2423, 0
      %v2460 = vsel %vm2449, %v2424, 0
      %2462 = vmatprep.subr.mxu0 %v964
      %2463 = vmatpush1.msra.mxu0 %v860
      %2464 = vmatprep.subr.mxu0 %v1380
      %2465 = vmatpush1.msra.mxu0 %v1276
      %2466 = vmatprep.subr.mxu0 %v1796
      %2467 = vmatpush1.msra.mxu0 %v1692
      %2468 = vmatprep.subr.mxu0 %v2212
      %2469 = vmatpush1.msra.mxu0 %v2108
      %2470 = vmatprep.subr.mxu0 0.0
      %2471 = vmatpush1.msra.mxu0 0.0
      %2472 = vmatprep.subr.mxu0 0.0
      %2473 = vmatpush1.msra.mxu0 0.0
      %2474 = vmatprep.subr.mxu0 0.0
      %2475 = vmatpush1.msra.mxu0 0.0
      %2476 = vmatprep.subr.mxu0 0.0
      %2477 = vmatpush1.msra.mxu0 0.0
      %2478 = vmatprep.subr.mxu0 0.0
      %2479 = vmatpush1.msra.mxu0 0.0
      %2480 = vmatprep.subr.mxu0 0.0
      %2481 = vmatpush1.msra.mxu0 0.0
      %2482 = vmatprep.subr.mxu0 0.0
      %2483 = vmatpush1.msra.mxu0 0.0
      %2484 = vmatprep.subr.mxu0 0.0
      %2485 = vmatpush1.msra.mxu0 0.0
      %2486 = vmatprep.subr.mxu0 0.0
      %2487 = vmatpush1.msra.mxu0 0.0
      %2488 = vmatprep.subr.mxu0 0.0
      %2489 = vmatpush1.msra.mxu0 0.0
      %2490 = vmatprep.subr.mxu0 0.0
      %2491 = vmatpush1.msra.mxu0 0.0
      %2492 = vmatprep.subr.mxu0 0.0
      %2493 = vmatpush1.msra.mxu0 0.0
      %2494 = vmatprep.subr.mxu0 0.0
      %2495 = vmatpush1.msra.mxu0 0.0
      %2496 = vmatprep.subr.mxu0 0.0
      %2497 = vmatpush1.msra.mxu0 0.0
      %2498 = vmatprep.subr.mxu0 0.0
      %2499 = vmatpush1.msra.mxu0 0.0
      %2500 = vmatprep.subr.mxu0 0.0
      %2501 = vmatpush1.msra.mxu0 0.0
      %2502 = vmatprep.subr.mxu0 0.0
      %2503 = vmatpush1.msra.mxu0 0.0
      %2504 = vmatprep.subr.mxu0 0.0
      %2505 = vmatpush1.msra.mxu0 0.0
      %2506 = vmatprep.subr.mxu0 0.0
      %2507 = vmatpush1.msra.mxu0 0.0
      %2508 = vmatprep.subr.mxu0 0.0
      %2509 = vmatpush1.msra.mxu0 0.0
      %2510 = vmatprep.subr.mxu0 0.0
      %2511 = vmatpush1.msra.mxu0 0.0
      %2512 = vmatprep.subr.mxu0 0.0
      %2513 = vmatpush1.msra.mxu0 0.0
      %2514 = vmatprep.subr.mxu0 0.0
      %2515 = vmatpush1.msra.mxu0 0.0
      %2516 = vmatprep.subr.mxu0 0.0
      %2517 = vmatpush1.msra.mxu0 0.0
      %2518 = vmatprep.subr.mxu0 0.0
      %2519 = vmatpush1.msra.mxu0 0.0
      %2520 = vmatprep.subr.mxu0 0.0
      %2521 = vmatpush1.msra.mxu0 0.0
      %2522 = vmatprep.subr.mxu0 0.0
      %2523 = vmatpush1.msra.mxu0 0.0
      %2524 = vmatprep.subr.mxu0 0.0
      %2525 = vmatpush1.msra.mxu0 0.0
      %2526 = vmatprep.mubr.f32.mxu0 0.0
      %2527 = vmatmul.mubr.f32.gmra.mrb[0].mxu0 %v2451
      %v2528 = vpop.f32.mrb[0].mxu0
      %v2529 = vadd.f32 %v2432, %v2528
      %v2530 = vpop.f32.mrb[0].mxu0
      %v2531 = vadd.f32 %v2432, %v2530
      %2532 = vmatprep.mubr.f32.mxu0 0.0
      %2533 = vmatmul.mubr.f32.gmra.mrb[0].mxu0 %v2454
      %v2534 = vpop.f32.mrb[0].mxu0
      %v2535 = vadd.f32 %v2437, %v2534
      %v2536 = vpop.f32.mrb[0].mxu0
      %v2537 = vadd.f32 %v2437, %v2536
      %2538 = vmatprep.mubr.f32.mxu0 0.0
      %2539 = vmatmul.mubr.f32.gmra.mrb[0].mxu0 %v2457
      %v2540 = vpop.f32.mrb[0].mxu0
      %v2541 = vadd.f32 %v2442, %v2540
      %v2542 = vpop.f32.mrb[0].mxu0
      %v2543 = vadd.f32 %v2442, %v2542
      %2544 = vmatprep.mubr.f32.mxu0 0.0
      %2545 = vmatmul.mubr.f32.gmra.mrb[0].mxu0 %v2460
      %v2546 = vpop.f32.mrb[0].mxu0
      %v2547 = vadd.f32 %v2447, %v2546
      %v2548 = vpop.f32.mrb[0].mxu0
      %v2549 = vadd.f32 %v2447, %v2548
      %2550 = vdwg.mxu0
      %2551 = vmatprep.subr.mxu0 %v1172
      %2552 = vmatpush1.msra.mxu0 %v1068
      %2553 = vmatprep.subr.mxu0 %v1588
      %2554 = vmatpush1.msra.mxu0 %v1484
      %2555 = vmatprep.subr.mxu0 %v2004
      %2556 = vmatpush1.msra.mxu0 %v1900
      %2557 = vmatprep.subr.mxu0 %v2420
      %2558 = vmatpush1.msra.mxu0 %v2316
      %2559 = vmatprep.subr.mxu0 0.0
      %2560 = vmatpush1.msra.mxu0 0.0
      %2561 = vmatprep.subr.mxu0 0.0
      %2562 = vmatpush1.msra.mxu0 0.0
      %2563 = vmatprep.subr.mxu0 0.0
      %2564 = vmatpush1.msra.mxu0 0.0
      %2565 = vmatprep.subr.mxu0 0.0
      %2566 = vmatpush1.msra.mxu0 0.0
      %2567 = vmatprep.subr.mxu0 0.0
      %2568 = vmatpush1.msra.mxu0 0.0
      %2569 = vmatprep.subr.mxu0 0.0
      %2570 = vmatpush1.msra.mxu0 0.0
      %2571 = vmatprep.subr.mxu0 0.0
      %2572 = vmatpush1.msra.mxu0 0.0
      %2573 = vmatprep.subr.mxu0 0.0
      %2574 = vmatpush1.msra.mxu0 0.0
      %2575 = vmatprep.subr.mxu0 0.0
      %2576 = vmatpush1.msra.mxu0 0.0
      %2577 = vmatprep.subr.mxu0 0.0
      %2578 = vmatpush1.msra.mxu0 0.0
      %2579 = vmatprep.subr.mxu0 0.0
      %2580 = vmatpush1.msra.mxu0 0.0
      %2581 = vmatprep.subr.mxu0 0.0
      %2582 = vmatpush1.msra.mxu0 0.0
      %2583 = vmatprep.subr.mxu0 0.0
      %2584 = vmatpush1.msra.mxu0 0.0
      %2585 = vmatprep.subr.mxu0 0.0
      %2586 = vmatpush1.msra.mxu0 0.0
      %2587 = vmatprep.subr.mxu0 0.0
      %2588 = vmatpush1.msra.mxu0 0.0
      %2589 = vmatprep.subr.mxu0 0.0
      %2590 = vmatpush1.msra.mxu0 0.0
      %2591 = vmatprep.subr.mxu0 0.0
      %2592 = vmatpush1.msra.mxu0 0.0
      %2593 = vmatprep.subr.mxu0 0.0
      %2594 = vmatpush1.msra.mxu0 0.0
      %2595 = vmatprep.subr.mxu0 0.0
      %2596 = vmatpush1.msra.mxu0 0.0
      %2597 = vmatprep.subr.mxu0 0.0
      %2598 = vmatpush1.msra.mxu0 0.0
      %2599 = vmatprep.subr.mxu0 0.0
      %2600 = vmatpush1.msra.mxu0 0.0
      %2601 = vmatprep.subr.mxu0 0.0
      %2602 = vmatpush1.msra.mxu0 0.0
      %2603 = vmatprep.subr.mxu0 0.0
      %2604 = vmatpush1.msra.mxu0 0.0
      %2605 = vmatprep.subr.mxu0 0.0
      %2606 = vmatpush1.msra.mxu0 0.0
      %2607 = vmatprep.subr.mxu0 0.0
      %2608 = vmatpush1.msra.mxu0 0.0
      %2609 = vmatprep.subr.mxu0 0.0
      %2610 = vmatpush1.msra.mxu0 0.0
      %2611 = vmatprep.subr.mxu0 0.0
      %2612 = vmatpush1.msra.mxu0 0.0
      %2613 = vmatprep.subr.mxu0 0.0
      %2614 = vmatpush1.msra.mxu0 0.0
      %2615 = vmatprep.mubr.f32.mxu0 0.0
      %2616 = vmatmul.mubr.f32.gmra.mrb[0].mxu0 %v2451
      %v2617 = vpop.f32.mrb[0].mxu0
      %v2618 = vadd.f32 %v2432, %v2617
      %v2619 = vpop.f32.mrb[0].mxu0
      %v2620 = vadd.f32 %v2432, %v2619
      %2621 = vmatprep.mubr.f32.mxu0 0.0
      %2622 = vmatmul.mubr.f32.gmra.mrb[0].mxu0 %v2454
      %v2623 = vpop.f32.mrb[0].mxu0
      %v2624 = vadd.f32 %v2437, %v2623
      %v2625 = vpop.f32.mrb[0].mxu0
      %v2626 = vadd.f32 %v2437, %v2625
      %2627 = vmatprep.mubr.f32.mxu0 0.0
      %2628 = vmatmul.mubr.f32.gmra.mrb[0].mxu0 %v2457
      %v2629 = vpop.f32.mrb[0].mxu0
      %v2630 = vadd.f32 %v2442, %v2629
      %v2631 = vpop.f32.mrb[0].mxu0
      %v2632 = vadd.f32 %v2442, %v2631
      %2633 = vmatprep.mubr.f32.mxu0 0.0
      %2634 = vmatmul.mubr.f32.gmra.mrb[0].mxu0 %v2460
      %v2635 = vpop.f32.mrb[0].mxu0
      %v2636 = vadd.f32 %v2447, %v2635
      %v2637 = vpop.f32.mrb[0].mxu0
      %v2638 = vadd.f32 %v2447, %v2637
      %2639 = vdwg.mxu0
      %v2640 = vand.u32 2147483647, %v2529
      %vm2641 = vcmp.le.f32.partialorder %v2640, 0.7853982
      %vm2642 = vcmp.lt.s32.totalorder %v2529, 0
      %v2643 = vand.u32 %v2529, 2139095040
      %v2644 = vshrl.u32 %v2643, 23
      %v2645 = vsub.s32 %v2644, 127
      %v2646 = vand.u32 2147483647, %v2529
      %v2647 = vand.u32 %v2646, 8388607
      %v2648 = vor.u32 %v2647, 8388608
      %v2649 = vsub.s32 0, %v2648
      %v2650 = vadd.s32 %v2645, 1
      %vm2651 = vcmp.gt.s32.totalorder %v2650, 0
      %v2652 = vsel %vm2651, %v2650, 0
      %v2653 = vshrl.u32 %v2652, 5
      %v2654 = vand.u32 %v2652, 31
      %v2655 = vsub.s32 32, %v2654
      %v2656 = vshrl.u32 683565275, %v2655
      %v2657 = vshll.u32 683565275, %v2654
      %v2658 = vshrl.u32 2475754826, %v2655
      %v2659 = vor.u32 %v2657, %v2658
      %v2660 = vshll.u32 2475754826, %v2654
      %v2661 = vshrl.u32 2131351028, %v2655
      %v2662 = vor.u32 %v2660, %v2661
      %v2663 = vshll.u32 2131351028, %v2654
      %v2664 = vshrl.u32 2102212464, %v2655
      %v2665 = vor.u32 %v2663, %v2664
      %v2666 = vshll.u32 2102212464, %v2654
      %v2667 = vshrl.u32 920167782, %v2655
      %v2668 = vor.u32 %v2666, %v2667
      %v2669 = vshll.u32 920167782, %v2654
      %v2670 = vshrl.u32 1326507024, %v2655
      %v2671 = vor.u32 %v2669, %v2670
      %vm2672 = vcmp.lt.s32.totalorder %v2653, 1
      %vm2673 = vcmp.lt.s32.totalorder %v2653, 2
      %vm2674 = vcmp.lt.s32.totalorder %v2653, 3
      %vm2675 = vcmp.lt.s32.totalorder %v2653, 4
      %v2676 = vsel %vm2672, %v2656, %v2659
      %v2677 = vsel %vm2675, %v2665, 2102212464
      %v2678 = vsel %vm2674, %v2662, %v2677
      %v2679 = vsel %vm2673, %v2676, %v2678
      %v2680 = vsel %vm2672, %v2659, %v2662
      %v2681 = vsel %vm2675, %v2668, 920167782
      %v2682 = vsel %vm2674, %v2665, %v2681
      %v2683 = vsel %vm2673, %v2680, %v2682
      %v2684 = vsel %vm2672, %v2662, %v2665
      %v2685 = vsel %vm2675, %v2671, 1326507024
      %v2686 = vsel %vm2674, %v2668, %v2685
      %v2687 = vsel %vm2673, %v2684, %v2686
      %v2688 = vshll.u32 %v2648, 8
      %v2689 = vmul.u32.u64.compose %v2688, %v2687
      %v2690 = vextract.low.u32 %v2689
      %v2691 = vextract.high.u32 %v2689
      %v2692 = vmul.u32.u64.compose %v2688, %v2683
      %v2693 = vextract.low.u32 %v2692
      %v2694 = vextract.high.u32 %v2692
      %v2695 = vmul.u32 %v2688, %v2679
      %v2696 = vadd.s32 %v2691, %v2693
      %vm2697 = vc.u32 %v2691, %v2693
      %v2698 = vadd.s32 %v2694, 1
      %v2699 = vsel %vm2697, %v2698, %v2694
      %v2700 = vadd.s32 %v2695, %v2699
      %v2701 = vadd.s32 %v2700, 536870912
      %v2702 = vshrl.u32 %v2701, 30
      %v2703 = vshll.u32 %v2702, 30
      %v2704 = vsub.s32 %v2700, %v2703
      %vm2705 = vcmp.lt.s32.totalorder %v2704, 0
      %v2706 = vsub.s32 0, %v2704
      %v2707 = vsel %vm2705, %v2706, %v2704
      %v2708 = vclz %v2707
      %v2709 = vsub.s32 %v2708, 2
      %vm2710 = vcmp.gt.s32.totalorder 0, %v2709
      %v2711 = vsel %vm2710, 0, %v2709
      %v2712 = vsub.s32 32, %v2711
      %v2713 = vshll.u32 %v2704, %v2711
      %v2714 = vshrl.u32 %v2696, %v2712
      %v2715 = vor.u32 %v2713, %v2714
      %v2716 = vsub.s32 4294967266, %v2711
      %v2717 = vadd.s32 %v2716, 127
      %v2718 = vshll.u32 %v2717, 23
      %v2719 = vor.u32 4788187, %v2718
      %v2720 = vand.u32 2147483647, %v2719
      %v2722 = vcvt.s32.f32 %v2715
      %v2723 = vmul.f32 %v2722, %v2720
      %v2724 = vxor.u32 %v2723, 2147483648
      %v2725 = vsel %vm2642, %v2724, %v2723
      %v2726 = vsub.s32 4, %v2702
      %v2727 = vsel %vm2642, %v2726, %v2702
      %v2728 = vsel %vm2641, %v2529, %v2725
      %v2729 = vsel %vm2641, 0, %v2727
      %v2730 = vcosq.f32.pop %v2728
      %v2731 = vsinq.f32.pop %v2728
      %vm2732 = vweird.f32 %v2529
      %v2733 = vadd.s32 %v2729, 3
      %v2734 = vand.u32 %v2733, 3
      %vm2735 = vcmp.lt.s32.totalorder %v2734, 2
      %vm2736 = vcmp.eq.s32.totalorder %v2734, 0
      %v2737 = vxor.u32 %v2731, 2147483648
      %v2738 = vsel %vm2736, %v2730, %v2737
      %vm2739 = vcmp.eq.s32.totalorder %v2734, 2
      %v2740 = vxor.u32 %v2730, 2147483648
      %v2741 = vsel %vm2739, %v2740, %v2731
      %v2742 = vsel %vm2735, %v2738, %v2741
      %v2743 = vsel %vm2732, nan, %v2742
      %v2744 = vand.u32 2147483647, %v2531
      %vm2745 = vcmp.le.f32.partialorder %v2744, 0.7853982
      %vm2746 = vcmp.lt.s32.totalorder %v2531, 0
      %v2747 = vand.u32 %v2531, 2139095040
      %v2748 = vshrl.u32 %v2747, 23
      %v2749 = vsub.s32 %v2748, 127
      %v2750 = vand.u32 2147483647, %v2531
      %v2751 = vand.u32 %v2750, 8388607
      %v2752 = vor.u32 %v2751, 8388608
      %v2753 = vsub.s32 0, %v2752
      %v2754 = vadd.s32 %v2749, 1
      %vm2755 = vcmp.gt.s32.totalorder %v2754, 0
      %v2756 = vsel %vm2755, %v2754, 0
      %v2757 = vshrl.u32 %v2756, 5
      %v2758 = vand.u32 %v2756, 31
      %v2759 = vsub.s32 32, %v2758
      %v2760 = vshrl.u32 683565275, %v2759
      %v2761 = vshll.u32 683565275, %v2758
      %v2762 = vshrl.u32 2475754826, %v2759
      %v2763 = vor.u32 %v2761, %v2762
      %v2764 = vshll.u32 2475754826, %v2758
      %v2765 = vshrl.u32 2131351028, %v2759
      %v2766 = vor.u32 %v2764, %v2765
      %v2767 = vshll.u32 2131351028, %v2758
      %v2768 = vshrl.u32 2102212464, %v2759
      %v2769 = vor.u32 %v2767, %v2768
      %v2770 = vshll.u32 2102212464, %v2758
      %v2771 = vshrl.u32 920167782, %v2759
      %v2772 = vor.u32 %v2770, %v2771
      %v2773 = vshll.u32 920167782, %v2758
      %v2774 = vshrl.u32 1326507024, %v2759
      %v2775 = vor.u32 %v2773, %v2774
      %vm2776 = vcmp.lt.s32.totalorder %v2757, 1
      %vm2777 = vcmp.lt.s32.totalorder %v2757, 2
      %vm2778 = vcmp.lt.s32.totalorder %v2757, 3
      %vm2779 = vcmp.lt.s32.totalorder %v2757, 4
      %v2780 = vsel %vm2776, %v2760, %v2763
      %v2781 = vsel %vm2779, %v2769, 2102212464
      %v2782 = vsel %vm2778, %v2766, %v2781
      %v2783 = vsel %vm2777, %v2780, %v2782
      %v2784 = vsel %vm2776, %v2763, %v2766
      %v2785 = vsel %vm2779, %v2772, 920167782
      %v2786 = vsel %vm2778, %v2769, %v2785
      %v2787 = vsel %vm2777, %v2784, %v2786
      %v2788 = vsel %vm2776, %v2766, %v2769
      %v2789 = vsel %vm2779, %v2775, 1326507024
      %v2790 = vsel %vm2778, %v2772, %v2789
      %v2791 = vsel %vm2777, %v2788, %v2790
      %v2792 = vshll.u32 %v2752, 8
      %v2793 = vmul.u32.u64.compose %v2792, %v2791
      %v2794 = vextract.low.u32 %v2793
      %v2795 = vextract.high.u32 %v2793
      %v2796 = vmul.u32.u64.compose %v2792, %v2787
      %v2797 = vextract.low.u32 %v2796
      %v2798 = vextract.high.u32 %v2796
      %v2799 = vmul.u32 %v2792, %v2783
      %v2800 = vadd.s32 %v2795, %v2797
      %vm2801 = vc.u32 %v2795, %v2797
      %v2802 = vadd.s32 %v2798, 1
      %v2803 = vsel %vm2801, %v2802, %v2798
      %v2804 = vadd.s32 %v2799, %v2803
      %v2805 = vadd.s32 %v2804, 536870912
      %v2806 = vshrl.u32 %v2805, 30
      %v2807 = vshll.u32 %v2806, 30
      %v2808 = vsub.s32 %v2804, %v2807
      %vm2809 = vcmp.lt.s32.totalorder %v2808, 0
      %v2810 = vsub.s32 0, %v2808
      %v2811 = vsel %vm2809, %v2810, %v2808
      %v2812 = vclz %v2811
      %v2813 = vsub.s32 %v2812, 2
      %vm2814 = vcmp.gt.s32.totalorder 0, %v2813
      %v2815 = vsel %vm2814, 0, %v2813
      %v2816 = vsub.s32 32, %v2815
      %v2817 = vshll.u32 %v2808, %v2815
      %v2818 = vshrl.u32 %v2800, %v2816
      %v2819 = vor.u32 %v2817, %v2818
      %v2820 = vsub.s32 4294967266, %v2815
      %v2821 = vadd.s32 %v2820, 127
      %v2822 = vshll.u32 %v2821, 23
      %v2823 = vor.u32 4788187, %v2822
      %v2824 = vand.u32 2147483647, %v2823
      %v2826 = vcvt.s32.f32 %v2819
      %v2827 = vmul.f32 %v2826, %v2824
      %v2828 = vxor.u32 %v2827, 2147483648
      %v2829 = vsel %vm2746, %v2828, %v2827
      %v2830 = vsub.s32 4, %v2806
      %v2831 = vsel %vm2746, %v2830, %v2806
      %v2832 = vsel %vm2745, %v2531, %v2829
      %v2833 = vsel %vm2745, 0, %v2831
      %v2834 = vcosq.f32.pop %v2832
      %v2835 = vsinq.f32.pop %v2832
      %vm2836 = vweird.f32 %v2531
      %v2837 = vadd.s32 %v2833, 3
      %v2838 = vand.u32 %v2837, 3
      %vm2839 = vcmp.lt.s32.totalorder %v2838, 2
      %vm2840 = vcmp.eq.s32.totalorder %v2838, 0
      %v2841 = vxor.u32 %v2835, 2147483648
      %v2842 = vsel %vm2840, %v2834, %v2841
      %vm2843 = vcmp.eq.s32.totalorder %v2838, 2
      %v2844 = vxor.u32 %v2834, 2147483648
      %v2845 = vsel %vm2843, %v2844, %v2835
      %v2846 = vsel %vm2839, %v2842, %v2845
      %v2847 = vsel %vm2836, nan, %v2846
      %v2848 = vand.u32 2147483647, %v2618
      %vm2849 = vcmp.le.f32.partialorder %v2848, 0.7853982
      %vm2850 = vcmp.lt.s32.totalorder %v2618, 0
      %v2851 = vand.u32 %v2618, 2139095040
      %v2852 = vshrl.u32 %v2851, 23
      %v2853 = vsub.s32 %v2852, 127
      %v2854 = vand.u32 2147483647, %v2618
      %v2855 = vand.u32 %v2854, 8388607
      %v2856 = vor.u32 %v2855, 8388608
      %v2857 = vsub.s32 0, %v2856
      %v2858 = vadd.s32 %v2853, 1
      %vm2859 = vcmp.gt.s32.totalorder %v2858, 0
      %v2860 = vsel %vm2859, %v2858, 0
      %v2861 = vshrl.u32 %v2860, 5
      %v2862 = vand.u32 %v2860, 31
      %v2863 = vsub.s32 32, %v2862
      %v2864 = vshrl.u32 683565275, %v2863
      %v2865 = vshll.u32 683565275, %v2862
      %v2866 = vshrl.u32 2475754826, %v2863
      %v2867 = vor.u32 %v2865, %v2866
      %v2868 = vshll.u32 2475754826, %v2862
      %v2869 = vshrl.u32 2131351028, %v2863
      %v2870 = vor.u32 %v2868, %v2869
      %v2871 = vshll.u32 2131351028, %v2862
      %v2872 = vshrl.u32 2102212464, %v2863
      %v2873 = vor.u32 %v2871, %v2872
      %v2874 = vshll.u32 2102212464, %v2862
      %v2875 = vshrl.u32 920167782, %v2863
      %v2876 = vor.u32 %v2874, %v2875
      %v2877 = vshll.u32 920167782, %v2862
      %v2878 = vshrl.u32 1326507024, %v2863
      %v2879 = vor.u32 %v2877, %v2878
      %vm2880 = vcmp.lt.s32.totalorder %v2861, 1
      %vm2881 = vcmp.lt.s32.totalorder %v2861, 2
      %vm2882 = vcmp.lt.s32.totalorder %v2861, 3
      %vm2883 = vcmp.lt.s32.totalorder %v2861, 4
      %v2884 = vsel %vm2880, %v2864, %v2867
      %v2885 = vsel %vm2883, %v2873, 2102212464
      %v2886 = vsel %vm2882, %v2870, %v2885
      %v2887 = vsel %vm2881, %v2884, %v2886
      %v2888 = vsel %vm2880, %v2867, %v2870
      %v2889 = vsel %vm2883, %v2876, 920167782
      %v2890 = vsel %vm2882, %v2873, %v2889
      %v2891 = vsel %vm2881, %v2888, %v2890
      %v2892 = vsel %vm2880, %v2870, %v2873
      %v2893 = vsel %vm2883, %v2879, 1326507024
      %v2894 = vsel %vm2882, %v2876, %v2893
      %v2895 = vsel %vm2881, %v2892, %v2894
      %v2896 = vshll.u32 %v2856, 8
      %v2897 = vmul.u32.u64.compose %v2896, %v2895
      %v2898 = vextract.low.u32 %v2897
      %v2899 = vextract.high.u32 %v2897
      %v2900 = vmul.u32.u64.compose %v2896, %v2891
      %v2901 = vextract.low.u32 %v2900
      %v2902 = vextract.high.u32 %v2900
      %v2903 = vmul.u32 %v2896, %v2887
      %v2904 = vadd.s32 %v2899, %v2901
      %vm2905 = vc.u32 %v2899, %v2901
      %v2906 = vadd.s32 %v2902, 1
      %v2907 = vsel %vm2905, %v2906, %v2902
      %v2908 = vadd.s32 %v2903, %v2907
      %v2909 = vadd.s32 %v2908, 536870912
      %v2910 = vshrl.u32 %v2909, 30
      %v2911 = vshll.u32 %v2910, 30
      %v2912 = vsub.s32 %v2908, %v2911
      %vm2913 = vcmp.lt.s32.totalorder %v2912, 0
      %v2914 = vsub.s32 0, %v2912
      %v2915 = vsel %vm2913, %v2914, %v2912
      %v2916 = vclz %v2915
      %v2917 = vsub.s32 %v2916, 2
      %vm2918 = vcmp.gt.s32.totalorder 0, %v2917
      %v2919 = vsel %vm2918, 0, %v2917
      %v2920 = vsub.s32 32, %v2919
      %v2921 = vshll.u32 %v2912, %v2919
      %v2922 = vshrl.u32 %v2904, %v2920
      %v2923 = vor.u32 %v2921, %v2922
      %v2924 = vsub.s32 4294967266, %v2919
      %v2925 = vadd.s32 %v2924, 127
      %v2926 = vshll.u32 %v2925, 23
      %v2927 = vor.u32 4788187, %v2926
      %v2928 = vand.u32 2147483647, %v2927
      %v2930 = vcvt.s32.f32 %v2923
      %v2931 = vmul.f32 %v2930, %v2928
      %v2932 = vxor.u32 %v2931, 2147483648
      %v2933 = vsel %vm2850, %v2932, %v2931
      %v2934 = vsub.s32 4, %v2910
      %v2935 = vsel %vm2850, %v2934, %v2910
      %v2936 = vsel %vm2849, %v2618, %v2933
      %v2937 = vsel %vm2849, 0, %v2935
      %v2938 = vcosq.f32.pop %v2936
      %v2939 = vsinq.f32.pop %v2936
      %vm2940 = vweird.f32 %v2618
      %v2941 = vadd.s32 %v2937, 3
      %v2942 = vand.u32 %v2941, 3
      %vm2943 = vcmp.lt.s32.totalorder %v2942, 2
      %vm2944 = vcmp.eq.s32.totalorder %v2942, 0
      %v2945 = vxor.u32 %v2939, 2147483648
      %v2946 = vsel %vm2944, %v2938, %v2945
      %vm2947 = vcmp.eq.s32.totalorder %v2942, 2
      %v2948 = vxor.u32 %v2938, 2147483648
      %v2949 = vsel %vm2947, %v2948, %v2939
      %v2950 = vsel %vm2943, %v2946, %v2949
      %v2951 = vsel %vm2940, nan, %v2950
      %v2952 = vand.u32 2147483647, %v2620
      %vm2953 = vcmp.le.f32.partialorder %v2952, 0.7853982
      %vm2954 = vcmp.lt.s32.totalorder %v2620, 0
      %v2955 = vand.u32 %v2620, 2139095040
      %v2956 = vshrl.u32 %v2955, 23
      %v2957 = vsub.s32 %v2956, 127
      %v2958 = vand.u32 2147483647, %v2620
      %v2959 = vand.u32 %v2958, 8388607
      %v2960 = vor.u32 %v2959, 8388608
      %v2961 = vsub.s32 0, %v2960
      %v2962 = vadd.s32 %v2957, 1
      %vm2963 = vcmp.gt.s32.totalorder %v2962, 0
      %v2964 = vsel %vm2963, %v2962, 0
      %v2965 = vshrl.u32 %v2964, 5
      %v2966 = vand.u32 %v2964, 31
      %v2967 = vsub.s32 32, %v2966
      %v2968 = vshrl.u32 683565275, %v2967
      %v2969 = vshll.u32 683565275, %v2966
      %v2970 = vshrl.u32 2475754826, %v2967
      %v2971 = vor.u32 %v2969, %v2970
      %v2972 = vshll.u32 2475754826, %v2966
      %v2973 = vshrl.u32 2131351028, %v2967
      %v2974 = vor.u32 %v2972, %v2973
      %v2975 = vshll.u32 2131351028, %v2966
      %v2976 = vshrl.u32 2102212464, %v2967
      %v2977 = vor.u32 %v2975, %v2976
      %v2978 = vshll.u32 2102212464, %v2966
      %v2979 = vshrl.u32 920167782, %v2967
      %v2980 = vor.u32 %v2978, %v2979
      %v2981 = vshll.u32 920167782, %v2966
      %v2982 = vshrl.u32 1326507024, %v2967
      %v2983 = vor.u32 %v2981, %v2982
      %vm2984 = vcmp.lt.s32.totalorder %v2965, 1
      %vm2985 = vcmp.lt.s32.totalorder %v2965, 2
      %vm2986 = vcmp.lt.s32.totalorder %v2965, 3
      %vm2987 = vcmp.lt.s32.totalorder %v2965, 4
      %v2988 = vsel %vm2984, %v2968, %v2971
      %v2989 = vsel %vm2987, %v2977, 2102212464
      %v2990 = vsel %vm2986, %v2974, %v2989
      %v2991 = vsel %vm2985, %v2988, %v2990
      %v2992 = vsel %vm2984, %v2971, %v2974
      %v2993 = vsel %vm2987, %v2980, 920167782
      %v2994 = vsel %vm2986, %v2977, %v2993
      %v2995 = vsel %vm2985, %v2992, %v2994
      %v2996 = vsel %vm2984, %v2974, %v2977
      %v2997 = vsel %vm2987, %v2983, 1326507024
      %v2998 = vsel %vm2986, %v2980, %v2997
      %v2999 = vsel %vm2985, %v2996, %v2998
      %v3000 = vshll.u32 %v2960, 8
      %v3001 = vmul.u32.u64.compose %v3000, %v2999
      %v3002 = vextract.low.u32 %v3001
      %v3003 = vextract.high.u32 %v3001
      %v3004 = vmul.u32.u64.compose %v3000, %v2995
      %v3005 = vextract.low.u32 %v3004
      %v3006 = vextract.high.u32 %v3004
      %v3007 = vmul.u32 %v3000, %v2991
      %v3008 = vadd.s32 %v3003, %v3005
      %vm3009 = vc.u32 %v3003, %v3005
      %v3010 = vadd.s32 %v3006, 1
      %v3011 = vsel %vm3009, %v3010, %v3006
      %v3012 = vadd.s32 %v3007, %v3011
      %v3013 = vadd.s32 %v3012, 536870912
      %v3014 = vshrl.u32 %v3013, 30
      %v3015 = vshll.u32 %v3014, 30
      %v3016 = vsub.s32 %v3012, %v3015
      %vm3017 = vcmp.lt.s32.totalorder %v3016, 0
      %v3018 = vsub.s32 0, %v3016
      %v3019 = vsel %vm3017, %v3018, %v3016
      %v3020 = vclz %v3019
      %v3021 = vsub.s32 %v3020, 2
      %vm3022 = vcmp.gt.s32.totalorder 0, %v3021
      %v3023 = vsel %vm3022, 0, %v3021
      %v3024 = vsub.s32 32, %v3023
      %v3025 = vshll.u32 %v3016, %v3023
      %v3026 = vshrl.u32 %v3008, %v3024
      %v3027 = vor.u32 %v3025, %v3026
      %v3028 = vsub.s32 4294967266, %v3023
      %v3029 = vadd.s32 %v3028, 127
      %v3030 = vshll.u32 %v3029, 23
      %v3031 = vor.u32 4788187, %v3030
      %v3032 = vand.u32 2147483647, %v3031
      %v3034 = vcvt.s32.f32 %v3027
      %v3035 = vmul.f32 %v3034, %v3032
      %v3036 = vxor.u32 %v3035, 2147483648
      %v3037 = vsel %vm2954, %v3036, %v3035
      %v3038 = vsub.s32 4, %v3014
      %v3039 = vsel %vm2954, %v3038, %v3014
      %v3040 = vsel %vm2953, %v2620, %v3037
      %v3041 = vsel %vm2953, 0, %v3039
      %v3042 = vcosq.f32.pop %v3040
      %v3043 = vsinq.f32.pop %v3040
      %vm3044 = vweird.f32 %v2620
      %v3045 = vadd.s32 %v3041, 3
      %v3046 = vand.u32 %v3045, 3
      %vm3047 = vcmp.lt.s32.totalorder %v3046, 2
      %vm3048 = vcmp.eq.s32.totalorder %v3046, 0
      %v3049 = vxor.u32 %v3043, 2147483648
      %v3050 = vsel %vm3048, %v3042, %v3049
      %vm3051 = vcmp.eq.s32.totalorder %v3046, 2
      %v3052 = vxor.u32 %v3042, 2147483648
      %v3053 = vsel %vm3051, %v3052, %v3043
      %v3054 = vsel %vm3047, %v3050, %v3053
      %v3055 = vsel %vm3044, nan, %v3054
      %v3056 = vand.u32 2147483647, %v2535
      %vm3057 = vcmp.le.f32.partialorder %v3056, 0.7853982
      %vm3058 = vcmp.lt.s32.totalorder %v2535, 0
      %v3059 = vand.u32 %v2535, 2139095040
      %v3060 = vshrl.u32 %v3059, 23
      %v3061 = vsub.s32 %v3060, 127
      %v3062 = vand.u32 2147483647, %v2535
      %v3063 = vand.u32 %v3062, 8388607
      %v3064 = vor.u32 %v3063, 8388608
      %v3065 = vsub.s32 0, %v3064
      %v3066 = vadd.s32 %v3061, 1
      %vm3067 = vcmp.gt.s32.totalorder %v3066, 0
      %v3068 = vsel %vm3067, %v3066, 0
      %v3069 = vshrl.u32 %v3068, 5
      %v3070 = vand.u32 %v3068, 31
      %v3071 = vsub.s32 32, %v3070
      %v3072 = vshrl.u32 683565275, %v3071
      %v3073 = vshll.u32 683565275, %v3070
      %v3074 = vshrl.u32 2475754826, %v3071
      %v3075 = vor.u32 %v3073, %v3074
      %v3076 = vshll.u32 2475754826, %v3070
      %v3077 = vshrl.u32 2131351028, %v3071
      %v3078 = vor.u32 %v3076, %v3077
      %v3079 = vshll.u32 2131351028, %v3070
      %v3080 = vshrl.u32 2102212464, %v3071
      %v3081 = vor.u32 %v3079, %v3080
      %v3082 = vshll.u32 2102212464, %v3070
      %v3083 = vshrl.u32 920167782, %v3071
      %v3084 = vor.u32 %v3082, %v3083
      %v3085 = vshll.u32 920167782, %v3070
      %v3086 = vshrl.u32 1326507024, %v3071
      %v3087 = vor.u32 %v3085, %v3086
      %vm3088 = vcmp.lt.s32.totalorder %v3069, 1
      %vm3089 = vcmp.lt.s32.totalorder %v3069, 2
      %vm3090 = vcmp.lt.s32.totalorder %v3069, 3
      %vm3091 = vcmp.lt.s32.totalorder %v3069, 4
      %v3092 = vsel %vm3088, %v3072, %v3075
      %v3093 = vsel %vm3091, %v3081, 2102212464
      %v3094 = vsel %vm3090, %v3078, %v3093
      %v3095 = vsel %vm3089, %v3092, %v3094
      %v3096 = vsel %vm3088, %v3075, %v3078
      %v3097 = vsel %vm3091, %v3084, 920167782
      %v3098 = vsel %vm3090, %v3081, %v3097
      %v3099 = vsel %vm3089, %v3096, %v3098
      %v3100 = vsel %vm3088, %v3078, %v3081
      %v3101 = vsel %vm3091, %v3087, 1326507024
      %v3102 = vsel %vm3090, %v3084, %v3101
      %v3103 = vsel %vm3089, %v3100, %v3102
      %v3104 = vshll.u32 %v3064, 8
      %v3105 = vmul.u32.u64.compose %v3104, %v3103
      %v3106 = vextract.low.u32 %v3105
      %v3107 = vextract.high.u32 %v3105
      %v3108 = vmul.u32.u64.compose %v3104, %v3099
      %v3109 = vextract.low.u32 %v3108
      %v3110 = vextract.high.u32 %v3108
      %v3111 = vmul.u32 %v3104, %v3095
      %v3112 = vadd.s32 %v3107, %v3109
      %vm3113 = vc.u32 %v3107, %v3109
      %v3114 = vadd.s32 %v3110, 1
      %v3115 = vsel %vm3113, %v3114, %v3110
      %v3116 = vadd.s32 %v3111, %v3115
      %v3117 = vadd.s32 %v3116, 536870912
      %v3118 = vshrl.u32 %v3117, 30
      %v3119 = vshll.u32 %v3118, 30
      %v3120 = vsub.s32 %v3116, %v3119
      %vm3121 = vcmp.lt.s32.totalorder %v3120, 0
      %v3122 = vsub.s32 0, %v3120
      %v3123 = vsel %vm3121, %v3122, %v3120
      %v3124 = vclz %v3123
      %v3125 = vsub.s32 %v3124, 2
      %vm3126 = vcmp.gt.s32.totalorder 0, %v3125
      %v3127 = vsel %vm3126, 0, %v3125
      %v3128 = vsub.s32 32, %v3127
      %v3129 = vshll.u32 %v3120, %v3127
      %v3130 = vshrl.u32 %v3112, %v3128
      %v3131 = vor.u32 %v3129, %v3130
      %v3132 = vsub.s32 4294967266, %v3127
      %v3133 = vadd.s32 %v3132, 127
      %v3134 = vshll.u32 %v3133, 23
      %v3135 = vor.u32 4788187, %v3134
      %v3136 = vand.u32 2147483647, %v3135
      %v3138 = vcvt.s32.f32 %v3131
      %v3139 = vmul.f32 %v3138, %v3136
      %v3140 = vxor.u32 %v3139, 2147483648
      %v3141 = vsel %vm3058, %v3140, %v3139
      %v3142 = vsub.s32 4, %v3118
      %v3143 = vsel %vm3058, %v3142, %v3118
      %v3144 = vsel %vm3057, %v2535, %v3141
      %v3145 = vsel %vm3057, 0, %v3143
      %v3146 = vcosq.f32.pop %v3144
      %v3147 = vsinq.f32.pop %v3144
      %vm3148 = vweird.f32 %v2535
      %v3149 = vadd.s32 %v3145, 3
      %v3150 = vand.u32 %v3149, 3
      %vm3151 = vcmp.lt.s32.totalorder %v3150, 2
      %vm3152 = vcmp.eq.s32.totalorder %v3150, 0
      %v3153 = vxor.u32 %v3147, 2147483648
      %v3154 = vsel %vm3152, %v3146, %v3153
      %vm3155 = vcmp.eq.s32.totalorder %v3150, 2
      %v3156 = vxor.u32 %v3146, 2147483648
      %v3157 = vsel %vm3155, %v3156, %v3147
      %v3158 = vsel %vm3151, %v3154, %v3157
      %v3159 = vsel %vm3148, nan, %v3158
      %v3160 = vand.u32 2147483647, %v2537
      %vm3161 = vcmp.le.f32.partialorder %v3160, 0.7853982
      %vm3162 = vcmp.lt.s32.totalorder %v2537, 0
      %v3163 = vand.u32 %v2537, 2139095040
      %v3164 = vshrl.u32 %v3163, 23
      %v3165 = vsub.s32 %v3164, 127
      %v3166 = vand.u32 2147483647, %v2537
      %v3167 = vand.u32 %v3166, 8388607
      %v3168 = vor.u32 %v3167, 8388608
      %v3169 = vsub.s32 0, %v3168
      %v3170 = vadd.s32 %v3165, 1
      %vm3171 = vcmp.gt.s32.totalorder %v3170, 0
      %v3172 = vsel %vm3171, %v3170, 0
      %v3173 = vshrl.u32 %v3172, 5
      %v3174 = vand.u32 %v3172, 31
      %v3175 = vsub.s32 32, %v3174
      %v3176 = vshrl.u32 683565275, %v3175
      %v3177 = vshll.u32 683565275, %v3174
      %v3178 = vshrl.u32 2475754826, %v3175
      %v3179 = vor.u32 %v3177, %v3178
      %v3180 = vshll.u32 2475754826, %v3174
      %v3181 = vshrl.u32 2131351028, %v3175
      %v3182 = vor.u32 %v3180, %v3181
      %v3183 = vshll.u32 2131351028, %v3174
      %v3184 = vshrl.u32 2102212464, %v3175
      %v3185 = vor.u32 %v3183, %v3184
      %v3186 = vshll.u32 2102212464, %v3174
      %v3187 = vshrl.u32 920167782, %v3175
      %v3188 = vor.u32 %v3186, %v3187
      %v3189 = vshll.u32 920167782, %v3174
      %v3190 = vshrl.u32 1326507024, %v3175
      %v3191 = vor.u32 %v3189, %v3190
      %vm3192 = vcmp.lt.s32.totalorder %v3173, 1
      %vm3193 = vcmp.lt.s32.totalorder %v3173, 2
      %vm3194 = vcmp.lt.s32.totalorder %v3173, 3
      %vm3195 = vcmp.lt.s32.totalorder %v3173, 4
      %v3196 = vsel %vm3192, %v3176, %v3179
      %v3197 = vsel %vm3195, %v3185, 2102212464
      %v3198 = vsel %vm3194, %v3182, %v3197
      %v3199 = vsel %vm3193, %v3196, %v3198
      %v3200 = vsel %vm3192, %v3179, %v3182
      %v3201 = vsel %vm3195, %v3188, 920167782
      %v3202 = vsel %vm3194, %v3185, %v3201
      %v3203 = vsel %vm3193, %v3200, %v3202
      %v3204 = vsel %vm3192, %v3182, %v3185
      %v3205 = vsel %vm3195, %v3191, 1326507024
      %v3206 = vsel %vm3194, %v3188, %v3205
      %v3207 = vsel %vm3193, %v3204, %v3206
      %v3208 = vshll.u32 %v3168, 8
      %v3209 = vmul.u32.u64.compose %v3208, %v3207
      %v3210 = vextract.low.u32 %v3209
      %v3211 = vextract.high.u32 %v3209
      %v3212 = vmul.u32.u64.compose %v3208, %v3203
      %v3213 = vextract.low.u32 %v3212
      %v3214 = vextract.high.u32 %v3212
      %v3215 = vmul.u32 %v3208, %v3199
      %v3216 = vadd.s32 %v3211, %v3213
      %vm3217 = vc.u32 %v3211, %v3213
      %v3218 = vadd.s32 %v3214, 1
      %v3219 = vsel %vm3217, %v3218, %v3214
      %v3220 = vadd.s32 %v3215, %v3219
      %v3221 = vadd.s32 %v3220, 536870912
      %v3222 = vshrl.u32 %v3221, 30
      %v3223 = vshll.u32 %v3222, 30
      %v3224 = vsub.s32 %v3220, %v3223
      %vm3225 = vcmp.lt.s32.totalorder %v3224, 0
      %v3226 = vsub.s32 0, %v3224
      %v3227 = vsel %vm3225, %v3226, %v3224
      %v3228 = vclz %v3227
      %v3229 = vsub.s32 %v3228, 2
      %vm3230 = vcmp.gt.s32.totalorder 0, %v3229
      %v3231 = vsel %vm3230, 0, %v3229
      %v3232 = vsub.s32 32, %v3231
      %v3233 = vshll.u32 %v3224, %v3231
      %v3234 = vshrl.u32 %v3216, %v3232
      %v3235 = vor.u32 %v3233, %v3234
      %v3236 = vsub.s32 4294967266, %v3231
      %v3237 = vadd.s32 %v3236, 127
      %v3238 = vshll.u32 %v3237, 23
      %v3239 = vor.u32 4788187, %v3238
      %v3240 = vand.u32 2147483647, %v3239
      %v3242 = vcvt.s32.f32 %v3235
      %v3243 = vmul.f32 %v3242, %v3240
      %v3244 = vxor.u32 %v3243, 2147483648
      %v3245 = vsel %vm3162, %v3244, %v3243
      %v3246 = vsub.s32 4, %v3222
      %v3247 = vsel %vm3162, %v3246, %v3222
      %v3248 = vsel %vm3161, %v2537, %v3245
      %v3249 = vsel %vm3161, 0, %v3247
      %v3250 = vcosq.f32.pop %v3248
      %v3251 = vsinq.f32.pop %v3248
      %vm3252 = vweird.f32 %v2537
      %v3253 = vadd.s32 %v3249, 3
      %v3254 = vand.u32 %v3253, 3
      %vm3255 = vcmp.lt.s32.totalorder %v3254, 2
      %vm3256 = vcmp.eq.s32.totalorder %v3254, 0
      %v3257 = vxor.u32 %v3251, 2147483648
      %v3258 = vsel %vm3256, %v3250, %v3257
      %vm3259 = vcmp.eq.s32.totalorder %v3254, 2
      %v3260 = vxor.u32 %v3250, 2147483648
      %v3261 = vsel %vm3259, %v3260, %v3251
      %v3262 = vsel %vm3255, %v3258, %v3261
      %v3263 = vsel %vm3252, nan, %v3262
      %v3264 = vand.u32 2147483647, %v2624
      %vm3265 = vcmp.le.f32.partialorder %v3264, 0.7853982
      %vm3266 = vcmp.lt.s32.totalorder %v2624, 0
      %v3267 = vand.u32 %v2624, 2139095040
      %v3268 = vshrl.u32 %v3267, 23
      %v3269 = vsub.s32 %v3268, 127
      %v3270 = vand.u32 2147483647, %v2624
      %v3271 = vand.u32 %v3270, 8388607
      %v3272 = vor.u32 %v3271, 8388608
      %v3273 = vsub.s32 0, %v3272
      %v3274 = vadd.s32 %v3269, 1
      %vm3275 = vcmp.gt.s32.totalorder %v3274, 0
      %v3276 = vsel %vm3275, %v3274, 0
      %v3277 = vshrl.u32 %v3276, 5
      %v3278 = vand.u32 %v3276, 31
      %v3279 = vsub.s32 32, %v3278
      %v3280 = vshrl.u32 683565275, %v3279
      %v3281 = vshll.u32 683565275, %v3278
      %v3282 = vshrl.u32 2475754826, %v3279
      %v3283 = vor.u32 %v3281, %v3282
      %v3284 = vshll.u32 2475754826, %v3278
      %v3285 = vshrl.u32 2131351028, %v3279
      %v3286 = vor.u32 %v3284, %v3285
      %v3287 = vshll.u32 2131351028, %v3278
      %v3288 = vshrl.u32 2102212464, %v3279
      %v3289 = vor.u32 %v3287, %v3288
      %v3290 = vshll.u32 2102212464, %v3278
      %v3291 = vshrl.u32 920167782, %v3279
      %v3292 = vor.u32 %v3290, %v3291
      %v3293 = vshll.u32 920167782, %v3278
      %v3294 = vshrl.u32 1326507024, %v3279
      %v3295 = vor.u32 %v3293, %v3294
      %vm3296 = vcmp.lt.s32.totalorder %v3277, 1
      %vm3297 = vcmp.lt.s32.totalorder %v3277, 2
      %vm3298 = vcmp.lt.s32.totalorder %v3277, 3
      %vm3299 = vcmp.lt.s32.totalorder %v3277, 4
      %v3300 = vsel %vm3296, %v3280, %v3283
      %v3301 = vsel %vm3299, %v3289, 2102212464
      %v3302 = vsel %vm3298, %v3286, %v3301
      %v3303 = vsel %vm3297, %v3300, %v3302
      %v3304 = vsel %vm3296, %v3283, %v3286
      %v3305 = vsel %vm3299, %v3292, 920167782
      %v3306 = vsel %vm3298, %v3289, %v3305
      %v3307 = vsel %vm3297, %v3304, %v3306
      %v3308 = vsel %vm3296, %v3286, %v3289
      %v3309 = vsel %vm3299, %v3295, 1326507024
      %v3310 = vsel %vm3298, %v3292, %v3309
      %v3311 = vsel %vm3297, %v3308, %v3310
      %v3312 = vshll.u32 %v3272, 8
      %v3313 = vmul.u32.u64.compose %v3312, %v3311
      %v3314 = vextract.low.u32 %v3313
      %v3315 = vextract.high.u32 %v3313
      %v3316 = vmul.u32.u64.compose %v3312, %v3307
      %v3317 = vextract.low.u32 %v3316
      %v3318 = vextract.high.u32 %v3316
      %v3319 = vmul.u32 %v3312, %v3303
      %v3320 = vadd.s32 %v3315, %v3317
      %vm3321 = vc.u32 %v3315, %v3317
      %v3322 = vadd.s32 %v3318, 1
      %v3323 = vsel %vm3321, %v3322, %v3318
      %v3324 = vadd.s32 %v3319, %v3323
      %v3325 = vadd.s32 %v3324, 536870912
      %v3326 = vshrl.u32 %v3325, 30
      %v3327 = vshll.u32 %v3326, 30
      %v3328 = vsub.s32 %v3324, %v3327
      %vm3329 = vcmp.lt.s32.totalorder %v3328, 0
      %v3330 = vsub.s32 0, %v3328
      %v3331 = vsel %vm3329, %v3330, %v3328
      %v3332 = vclz %v3331
      %v3333 = vsub.s32 %v3332, 2
      %vm3334 = vcmp.gt.s32.totalorder 0, %v3333
      %v3335 = vsel %vm3334, 0, %v3333
      %v3336 = vsub.s32 32, %v3335
      %v3337 = vshll.u32 %v3328, %v3335
      %v3338 = vshrl.u32 %v3320, %v3336
      %v3339 = vor.u32 %v3337, %v3338
      %v3340 = vsub.s32 4294967266, %v3335
      %v3341 = vadd.s32 %v3340, 127
      %v3342 = vshll.u32 %v3341, 23
      %v3343 = vor.u32 4788187, %v3342
      %v3344 = vand.u32 2147483647, %v3343
      %v3346 = vcvt.s32.f32 %v3339
      %v3347 = vmul.f32 %v3346, %v3344
      %v3348 = vxor.u32 %v3347, 2147483648
      %v3349 = vsel %vm3266, %v3348, %v3347
      %v3350 = vsub.s32 4, %v3326
      %v3351 = vsel %vm3266, %v3350, %v3326
      %v3352 = vsel %vm3265, %v2624, %v3349
      %v3353 = vsel %vm3265, 0, %v3351
      %v3354 = vcosq.f32.pop %v3352
      %v3355 = vsinq.f32.pop %v3352
      %vm3356 = vweird.f32 %v2624
      %v3357 = vadd.s32 %v3353, 3
      %v3358 = vand.u32 %v3357, 3
      %vm3359 = vcmp.lt.s32.totalorder %v3358, 2
      %vm3360 = vcmp.eq.s32.totalorder %v3358, 0
      %v3361 = vxor.u32 %v3355, 2147483648
      %v3362 = vsel %vm3360, %v3354, %v3361
      %vm3363 = vcmp.eq.s32.totalorder %v3358, 2
      %v3364 = vxor.u32 %v3354, 2147483648
      %v3365 = vsel %vm3363, %v3364, %v3355
      %v3366 = vsel %vm3359, %v3362, %v3365
      %v3367 = vsel %vm3356, nan, %v3366
      %v3368 = vand.u32 2147483647, %v2626
      %vm3369 = vcmp.le.f32.partialorder %v3368, 0.7853982
      %vm3370 = vcmp.lt.s32.totalorder %v2626, 0
      %v3371 = vand.u32 %v2626, 2139095040
      %v3372 = vshrl.u32 %v3371, 23
      %v3373 = vsub.s32 %v3372, 127
      %v3374 = vand.u32 2147483647, %v2626
      %v3375 = vand.u32 %v3374, 8388607
      %v3376 = vor.u32 %v3375, 8388608
      %v3377 = vsub.s32 0, %v3376
      %v3378 = vadd.s32 %v3373, 1
      %vm3379 = vcmp.gt.s32.totalorder %v3378, 0
      %v3380 = vsel %vm3379, %v3378, 0
      %v3381 = vshrl.u32 %v3380, 5
      %v3382 = vand.u32 %v3380, 31
      %v3383 = vsub.s32 32, %v3382
      %v3384 = vshrl.u32 683565275, %v3383
      %v3385 = vshll.u32 683565275, %v3382
      %v3386 = vshrl.u32 2475754826, %v3383
      %v3387 = vor.u32 %v3385, %v3386
      %v3388 = vshll.u32 2475754826, %v3382
      %v3389 = vshrl.u32 2131351028, %v3383
      %v3390 = vor.u32 %v3388, %v3389
      %v3391 = vshll.u32 2131351028, %v3382
      %v3392 = vshrl.u32 2102212464, %v3383
      %v3393 = vor.u32 %v3391, %v3392
      %v3394 = vshll.u32 2102212464, %v3382
      %v3395 = vshrl.u32 920167782, %v3383
      %v3396 = vor.u32 %v3394, %v3395
      %v3397 = vshll.u32 920167782, %v3382
      %v3398 = vshrl.u32 1326507024, %v3383
      %v3399 = vor.u32 %v3397, %v3398
      %vm3400 = vcmp.lt.s32.totalorder %v3381, 1
      %vm3401 = vcmp.lt.s32.totalorder %v3381, 2
      %vm3402 = vcmp.lt.s32.totalorder %v3381, 3
      %vm3403 = vcmp.lt.s32.totalorder %v3381, 4
      %v3404 = vsel %vm3400, %v3384, %v3387
      %v3405 = vsel %vm3403, %v3393, 2102212464
      %v3406 = vsel %vm3402, %v3390, %v3405
      %v3407 = vsel %vm3401, %v3404, %v3406
      %v3408 = vsel %vm3400, %v3387, %v3390
      %v3409 = vsel %vm3403, %v3396, 920167782
      %v3410 = vsel %vm3402, %v3393, %v3409
      %v3411 = vsel %vm3401, %v3408, %v3410
      %v3412 = vsel %vm3400, %v3390, %v3393
      %v3413 = vsel %vm3403, %v3399, 1326507024
      %v3414 = vsel %vm3402, %v3396, %v3413
      %v3415 = vsel %vm3401, %v3412, %v3414
      %v3416 = vshll.u32 %v3376, 8
      %v3417 = vmul.u32.u64.compose %v3416, %v3415
      %v3418 = vextract.low.u32 %v3417
      %v3419 = vextract.high.u32 %v3417
      %v3420 = vmul.u32.u64.compose %v3416, %v3411
      %v3421 = vextract.low.u32 %v3420
      %v3422 = vextract.high.u32 %v3420
      %v3423 = vmul.u32 %v3416, %v3407
      %v3424 = vadd.s32 %v3419, %v3421
      %vm3425 = vc.u32 %v3419, %v3421
      %v3426 = vadd.s32 %v3422, 1
      %v3427 = vsel %vm3425, %v3426, %v3422
      %v3428 = vadd.s32 %v3423, %v3427
      %v3429 = vadd.s32 %v3428, 536870912
      %v3430 = vshrl.u32 %v3429, 30
      %v3431 = vshll.u32 %v3430, 30
      %v3432 = vsub.s32 %v3428, %v3431
      %vm3433 = vcmp.lt.s32.totalorder %v3432, 0
      %v3434 = vsub.s32 0, %v3432
      %v3435 = vsel %vm3433, %v3434, %v3432
      %v3436 = vclz %v3435
      %v3437 = vsub.s32 %v3436, 2
      %vm3438 = vcmp.gt.s32.totalorder 0, %v3437
      %v3439 = vsel %vm3438, 0, %v3437
      %v3440 = vsub.s32 32, %v3439
      %v3441 = vshll.u32 %v3432, %v3439
      %v3442 = vshrl.u32 %v3424, %v3440
      %v3443 = vor.u32 %v3441, %v3442
      %v3444 = vsub.s32 4294967266, %v3439
      %v3445 = vadd.s32 %v3444, 127
      %v3446 = vshll.u32 %v3445, 23
      %v3447 = vor.u32 4788187, %v3446
      %v3448 = vand.u32 2147483647, %v3447
      %v3450 = vcvt.s32.f32 %v3443
      %v3451 = vmul.f32 %v3450, %v3448
      %v3452 = vxor.u32 %v3451, 2147483648
      %v3453 = vsel %vm3370, %v3452, %v3451
      %v3454 = vsub.s32 4, %v3430
      %v3455 = vsel %vm3370, %v3454, %v3430
      %v3456 = vsel %vm3369, %v2626, %v3453
      %v3457 = vsel %vm3369, 0, %v3455
      %v3458 = vcosq.f32.pop %v3456
      %v3459 = vsinq.f32.pop %v3456
      %vm3460 = vweird.f32 %v2626
      %v3461 = vadd.s32 %v3457, 3
      %v3462 = vand.u32 %v3461, 3
      %vm3463 = vcmp.lt.s32.totalorder %v3462, 2
      %vm3464 = vcmp.eq.s32.totalorder %v3462, 0
      %v3465 = vxor.u32 %v3459, 2147483648
      %v3466 = vsel %vm3464, %v3458, %v3465
      %vm3467 = vcmp.eq.s32.totalorder %v3462, 2
      %v3468 = vxor.u32 %v3458, 2147483648
      %v3469 = vsel %vm3467, %v3468, %v3459
      %v3470 = vsel %vm3463, %v3466, %v3469
      %v3471 = vsel %vm3460, nan, %v3470
      %v3472 = vand.u32 2147483647, %v2541
      %vm3473 = vcmp.le.f32.partialorder %v3472, 0.7853982
      %vm3474 = vcmp.lt.s32.totalorder %v2541, 0
      %v3475 = vand.u32 %v2541, 2139095040
      %v3476 = vshrl.u32 %v3475, 23
      %v3477 = vsub.s32 %v3476, 127
      %v3478 = vand.u32 2147483647, %v2541
      %v3479 = vand.u32 %v3478, 8388607
      %v3480 = vor.u32 %v3479, 8388608
      %v3481 = vsub.s32 0, %v3480
      %v3482 = vadd.s32 %v3477, 1
      %vm3483 = vcmp.gt.s32.totalorder %v3482, 0
      %v3484 = vsel %vm3483, %v3482, 0
      %v3485 = vshrl.u32 %v3484, 5
      %v3486 = vand.u32 %v3484, 31
      %v3487 = vsub.s32 32, %v3486
      %v3488 = vshrl.u32 683565275, %v3487
      %v3489 = vshll.u32 683565275, %v3486
      %v3490 = vshrl.u32 2475754826, %v3487
      %v3491 = vor.u32 %v3489, %v3490
      %v3492 = vshll.u32 2475754826, %v3486
      %v3493 = vshrl.u32 2131351028, %v3487
      %v3494 = vor.u32 %v3492, %v3493
      %v3495 = vshll.u32 2131351028, %v3486
      %v3496 = vshrl.u32 2102212464, %v3487
      %v3497 = vor.u32 %v3495, %v3496
      %v3498 = vshll.u32 2102212464, %v3486
      %v3499 = vshrl.u32 920167782, %v3487
      %v3500 = vor.u32 %v3498, %v3499
      %v3501 = vshll.u32 920167782, %v3486
      %v3502 = vshrl.u32 1326507024, %v3487
      %v3503 = vor.u32 %v3501, %v3502
      %vm3504 = vcmp.lt.s32.totalorder %v3485, 1
      %vm3505 = vcmp.lt.s32.totalorder %v3485, 2
      %vm3506 = vcmp.lt.s32.totalorder %v3485, 3
      %vm3507 = vcmp.lt.s32.totalorder %v3485, 4
      %v3508 = vsel %vm3504, %v3488, %v3491
      %v3509 = vsel %vm3507, %v3497, 2102212464
      %v3510 = vsel %vm3506, %v3494, %v3509
      %v3511 = vsel %vm3505, %v3508, %v3510
      %v3512 = vsel %vm3504, %v3491, %v3494
      %v3513 = vsel %vm3507, %v3500, 920167782
      %v3514 = vsel %vm3506, %v3497, %v3513
      %v3515 = vsel %vm3505, %v3512, %v3514
      %v3516 = vsel %vm3504, %v3494, %v3497
      %v3517 = vsel %vm3507, %v3503, 1326507024
      %v3518 = vsel %vm3506, %v3500, %v3517
      %v3519 = vsel %vm3505, %v3516, %v3518
      %v3520 = vshll.u32 %v3480, 8
      %v3521 = vmul.u32.u64.compose %v3520, %v3519
      %v3522 = vextract.low.u32 %v3521
      %v3523 = vextract.high.u32 %v3521
      %v3524 = vmul.u32.u64.compose %v3520, %v3515
      %v3525 = vextract.low.u32 %v3524
      %v3526 = vextract.high.u32 %v3524
      %v3527 = vmul.u32 %v3520, %v3511
      %v3528 = vadd.s32 %v3523, %v3525
      %vm3529 = vc.u32 %v3523, %v3525
      %v3530 = vadd.s32 %v3526, 1
      %v3531 = vsel %vm3529, %v3530, %v3526
      %v3532 = vadd.s32 %v3527, %v3531
      %v3533 = vadd.s32 %v3532, 536870912
      %v3534 = vshrl.u32 %v3533, 30
      %v3535 = vshll.u32 %v3534, 30
      %v3536 = vsub.s32 %v3532, %v3535
      %vm3537 = vcmp.lt.s32.totalorder %v3536, 0
      %v3538 = vsub.s32 0, %v3536
      %v3539 = vsel %vm3537, %v3538, %v3536
      %v3540 = vclz %v3539
      %v3541 = vsub.s32 %v3540, 2
      %vm3542 = vcmp.gt.s32.totalorder 0, %v3541
      %v3543 = vsel %vm3542, 0, %v3541
      %v3544 = vsub.s32 32, %v3543
      %v3545 = vshll.u32 %v3536, %v3543
      %v3546 = vshrl.u32 %v3528, %v3544
      %v3547 = vor.u32 %v3545, %v3546
      %v3548 = vsub.s32 4294967266, %v3543
      %v3549 = vadd.s32 %v3548, 127
      %v3550 = vshll.u32 %v3549, 23
      %v3551 = vor.u32 4788187, %v3550
      %v3552 = vand.u32 2147483647, %v3551
      %v3554 = vcvt.s32.f32 %v3547
      %v3555 = vmul.f32 %v3554, %v3552
      %v3556 = vxor.u32 %v3555, 2147483648
      %v3557 = vsel %vm3474, %v3556, %v3555
      %v3558 = vsub.s32 4, %v3534
      %v3559 = vsel %vm3474, %v3558, %v3534
      %v3560 = vsel %vm3473, %v2541, %v3557
      %v3561 = vsel %vm3473, 0, %v3559
      %v3562 = vcosq.f32.pop %v3560
      %v3563 = vsinq.f32.pop %v3560
      %vm3564 = vweird.f32 %v2541
      %v3565 = vadd.s32 %v3561, 3
      %v3566 = vand.u32 %v3565, 3
      %vm3567 = vcmp.lt.s32.totalorder %v3566, 2
      %vm3568 = vcmp.eq.s32.totalorder %v3566, 0
      %v3569 = vxor.u32 %v3563, 2147483648
      %v3570 = vsel %vm3568, %v3562, %v3569
      %vm3571 = vcmp.eq.s32.totalorder %v3566, 2
      %v3572 = vxor.u32 %v3562, 2147483648
      %v3573 = vsel %vm3571, %v3572, %v3563
      %v3574 = vsel %vm3567, %v3570, %v3573
      %v3575 = vsel %vm3564, nan, %v3574
      %v3576 = vand.u32 2147483647, %v2543
      %vm3577 = vcmp.le.f32.partialorder %v3576, 0.7853982
      %vm3578 = vcmp.lt.s32.totalorder %v2543, 0
      %v3579 = vand.u32 %v2543, 2139095040
      %v3580 = vshrl.u32 %v3579, 23
      %v3581 = vsub.s32 %v3580, 127
      %v3582 = vand.u32 2147483647, %v2543
      %v3583 = vand.u32 %v3582, 8388607
      %v3584 = vor.u32 %v3583, 8388608
      %v3585 = vsub.s32 0, %v3584
      %v3586 = vadd.s32 %v3581, 1
      %vm3587 = vcmp.gt.s32.totalorder %v3586, 0
      %v3588 = vsel %vm3587, %v3586, 0
      %v3589 = vshrl.u32 %v3588, 5
      %v3590 = vand.u32 %v3588, 31
      %v3591 = vsub.s32 32, %v3590
      %v3592 = vshrl.u32 683565275, %v3591
      %v3593 = vshll.u32 683565275, %v3590
      %v3594 = vshrl.u32 2475754826, %v3591
      %v3595 = vor.u32 %v3593, %v3594
      %v3596 = vshll.u32 2475754826, %v3590
      %v3597 = vshrl.u32 2131351028, %v3591
      %v3598 = vor.u32 %v3596, %v3597
      %v3599 = vshll.u32 2131351028, %v3590
      %v3600 = vshrl.u32 2102212464, %v3591
      %v3601 = vor.u32 %v3599, %v3600
      %v3602 = vshll.u32 2102212464, %v3590
      %v3603 = vshrl.u32 920167782, %v3591
      %v3604 = vor.u32 %v3602, %v3603
      %v3605 = vshll.u32 920167782, %v3590
      %v3606 = vshrl.u32 1326507024, %v3591
      %v3607 = vor.u32 %v3605, %v3606
      %vm3608 = vcmp.lt.s32.totalorder %v3589, 1
      %vm3609 = vcmp.lt.s32.totalorder %v3589, 2
      %vm3610 = vcmp.lt.s32.totalorder %v3589, 3
      %vm3611 = vcmp.lt.s32.totalorder %v3589, 4
      %v3612 = vsel %vm3608, %v3592, %v3595
      %v3613 = vsel %vm3611, %v3601, 2102212464
      %v3614 = vsel %vm3610, %v3598, %v3613
      %v3615 = vsel %vm3609, %v3612, %v3614
      %v3616 = vsel %vm3608, %v3595, %v3598
      %v3617 = vsel %vm3611, %v3604, 920167782
      %v3618 = vsel %vm3610, %v3601, %v3617
      %v3619 = vsel %vm3609, %v3616, %v3618
      %v3620 = vsel %vm3608, %v3598, %v3601
      %v3621 = vsel %vm3611, %v3607, 1326507024
      %v3622 = vsel %vm3610, %v3604, %v3621
      %v3623 = vsel %vm3609, %v3620, %v3622
      %v3624 = vshll.u32 %v3584, 8
      %v3625 = vmul.u32.u64.compose %v3624, %v3623
      %v3626 = vextract.low.u32 %v3625
      %v3627 = vextract.high.u32 %v3625
      %v3628 = vmul.u32.u64.compose %v3624, %v3619
      %v3629 = vextract.low.u32 %v3628
      %v3630 = vextract.high.u32 %v3628
      %v3631 = vmul.u32 %v3624, %v3615
      %v3632 = vadd.s32 %v3627, %v3629
      %vm3633 = vc.u32 %v3627, %v3629
      %v3634 = vadd.s32 %v3630, 1
      %v3635 = vsel %vm3633, %v3634, %v3630
      %v3636 = vadd.s32 %v3631, %v3635
      %v3637 = vadd.s32 %v3636, 536870912
      %v3638 = vshrl.u32 %v3637, 30
      %v3639 = vshll.u32 %v3638, 30
      %v3640 = vsub.s32 %v3636, %v3639
      %vm3641 = vcmp.lt.s32.totalorder %v3640, 0
      %v3642 = vsub.s32 0, %v3640
      %v3643 = vsel %vm3641, %v3642, %v3640
      %v3644 = vclz %v3643
      %v3645 = vsub.s32 %v3644, 2
      %vm3646 = vcmp.gt.s32.totalorder 0, %v3645
      %v3647 = vsel %vm3646, 0, %v3645
      %v3648 = vsub.s32 32, %v3647
      %v3649 = vshll.u32 %v3640, %v3647
      %v3650 = vshrl.u32 %v3632, %v3648
      %v3651 = vor.u32 %v3649, %v3650
      %v3652 = vsub.s32 4294967266, %v3647
      %v3653 = vadd.s32 %v3652, 127
      %v3654 = vshll.u32 %v3653, 23
      %v3655 = vor.u32 4788187, %v3654
      %v3656 = vand.u32 2147483647, %v3655
      %v3658 = vcvt.s32.f32 %v3651
      %v3659 = vmul.f32 %v3658, %v3656
      %v3660 = vxor.u32 %v3659, 2147483648
      %v3661 = vsel %vm3578, %v3660, %v3659
      %v3662 = vsub.s32 4, %v3638
      %v3663 = vsel %vm3578, %v3662, %v3638
      %v3664 = vsel %vm3577, %v2543, %v3661
      %v3665 = vsel %vm3577, 0, %v3663
      %v3666 = vcosq.f32.pop %v3664
      %v3667 = vsinq.f32.pop %v3664
      %vm3668 = vweird.f32 %v2543
      %v3669 = vadd.s32 %v3665, 3
      %v3670 = vand.u32 %v3669, 3
      %vm3671 = vcmp.lt.s32.totalorder %v3670, 2
      %vm3672 = vcmp.eq.s32.totalorder %v3670, 0
      %v3673 = vxor.u32 %v3667, 2147483648
      %v3674 = vsel %vm3672, %v3666, %v3673
      %vm3675 = vcmp.eq.s32.totalorder %v3670, 2
      %v3676 = vxor.u32 %v3666, 2147483648
      %v3677 = vsel %vm3675, %v3676, %v3667
      %v3678 = vsel %vm3671, %v3674, %v3677
      %v3679 = vsel %vm3668, nan, %v3678
      %v3680 = vand.u32 2147483647, %v2630
      %vm3681 = vcmp.le.f32.partialorder %v3680, 0.7853982
      %vm3682 = vcmp.lt.s32.totalorder %v2630, 0
      %v3683 = vand.u32 %v2630, 2139095040
      %v3684 = vshrl.u32 %v3683, 23
      %v3685 = vsub.s32 %v3684, 127
      %v3686 = vand.u32 2147483647, %v2630
      %v3687 = vand.u32 %v3686, 8388607
      %v3688 = vor.u32 %v3687, 8388608
      %v3689 = vsub.s32 0, %v3688
      %v3690 = vadd.s32 %v3685, 1
      %vm3691 = vcmp.gt.s32.totalorder %v3690, 0
      %v3692 = vsel %vm3691, %v3690, 0
      %v3693 = vshrl.u32 %v3692, 5
      %v3694 = vand.u32 %v3692, 31
      %v3695 = vsub.s32 32, %v3694
      %v3696 = vshrl.u32 683565275, %v3695
      %v3697 = vshll.u32 683565275, %v3694
      %v3698 = vshrl.u32 2475754826, %v3695
      %v3699 = vor.u32 %v3697, %v3698
      %v3700 = vshll.u32 2475754826, %v3694
      %v3701 = vshrl.u32 2131351028, %v3695
      %v3702 = vor.u32 %v3700, %v3701
      %v3703 = vshll.u32 2131351028, %v3694
      %v3704 = vshrl.u32 2102212464, %v3695
      %v3705 = vor.u32 %v3703, %v3704
      %v3706 = vshll.u32 2102212464, %v3694
      %v3707 = vshrl.u32 920167782, %v3695
      %v3708 = vor.u32 %v3706, %v3707
      %v3709 = vshll.u32 920167782, %v3694
      %v3710 = vshrl.u32 1326507024, %v3695
      %v3711 = vor.u32 %v3709, %v3710
      %vm3712 = vcmp.lt.s32.totalorder %v3693, 1
      %vm3713 = vcmp.lt.s32.totalorder %v3693, 2
      %vm3714 = vcmp.lt.s32.totalorder %v3693, 3
      %vm3715 = vcmp.lt.s32.totalorder %v3693, 4
      %v3716 = vsel %vm3712, %v3696, %v3699
      %v3717 = vsel %vm3715, %v3705, 2102212464
      %v3718 = vsel %vm3714, %v3702, %v3717
      %v3719 = vsel %vm3713, %v3716, %v3718
      %v3720 = vsel %vm3712, %v3699, %v3702
      %v3721 = vsel %vm3715, %v3708, 920167782
      %v3722 = vsel %vm3714, %v3705, %v3721
      %v3723 = vsel %vm3713, %v3720, %v3722
      %v3724 = vsel %vm3712, %v3702, %v3705
      %v3725 = vsel %vm3715, %v3711, 1326507024
      %v3726 = vsel %vm3714, %v3708, %v3725
      %v3727 = vsel %vm3713, %v3724, %v3726
      %v3728 = vshll.u32 %v3688, 8
      %v3729 = vmul.u32.u64.compose %v3728, %v3727
      %v3730 = vextract.low.u32 %v3729
      %v3731 = vextract.high.u32 %v3729
      %v3732 = vmul.u32.u64.compose %v3728, %v3723
      %v3733 = vextract.low.u32 %v3732
      %v3734 = vextract.high.u32 %v3732
      %v3735 = vmul.u32 %v3728, %v3719
      %v3736 = vadd.s32 %v3731, %v3733
      %vm3737 = vc.u32 %v3731, %v3733
      %v3738 = vadd.s32 %v3734, 1
      %v3739 = vsel %vm3737, %v3738, %v3734
      %v3740 = vadd.s32 %v3735, %v3739
      %v3741 = vadd.s32 %v3740, 536870912
      %v3742 = vshrl.u32 %v3741, 30
      %v3743 = vshll.u32 %v3742, 30
      %v3744 = vsub.s32 %v3740, %v3743
      %vm3745 = vcmp.lt.s32.totalorder %v3744, 0
      %v3746 = vsub.s32 0, %v3744
      %v3747 = vsel %vm3745, %v3746, %v3744
      %v3748 = vclz %v3747
      %v3749 = vsub.s32 %v3748, 2
      %vm3750 = vcmp.gt.s32.totalorder 0, %v3749
      %v3751 = vsel %vm3750, 0, %v3749
      %v3752 = vsub.s32 32, %v3751
      %v3753 = vshll.u32 %v3744, %v3751
      %v3754 = vshrl.u32 %v3736, %v3752
      %v3755 = vor.u32 %v3753, %v3754
      %v3756 = vsub.s32 4294967266, %v3751
      %v3757 = vadd.s32 %v3756, 127
      %v3758 = vshll.u32 %v3757, 23
      %v3759 = vor.u32 4788187, %v3758
      %v3760 = vand.u32 2147483647, %v3759
      %v3762 = vcvt.s32.f32 %v3755
      %v3763 = vmul.f32 %v3762, %v3760
      %v3764 = vxor.u32 %v3763, 2147483648
      %v3765 = vsel %vm3682, %v3764, %v3763
      %v3766 = vsub.s32 4, %v3742
      %v3767 = vsel %vm3682, %v3766, %v3742
      %v3768 = vsel %vm3681, %v2630, %v3765
      %v3769 = vsel %vm3681, 0, %v3767
      %v3770 = vcosq.f32.pop %v3768
      %v3771 = vsinq.f32.pop %v3768
      %vm3772 = vweird.f32 %v2630
      %v3773 = vadd.s32 %v3769, 3
      %v3774 = vand.u32 %v3773, 3
      %vm3775 = vcmp.lt.s32.totalorder %v3774, 2
      %vm3776 = vcmp.eq.s32.totalorder %v3774, 0
      %v3777 = vxor.u32 %v3771, 2147483648
      %v3778 = vsel %vm3776, %v3770, %v3777
      %vm3779 = vcmp.eq.s32.totalorder %v3774, 2
      %v3780 = vxor.u32 %v3770, 2147483648
      %v3781 = vsel %vm3779, %v3780, %v3771
      %v3782 = vsel %vm3775, %v3778, %v3781
      %v3783 = vsel %vm3772, nan, %v3782
      %v3784 = vand.u32 2147483647, %v2632
      %vm3785 = vcmp.le.f32.partialorder %v3784, 0.7853982
      %vm3786 = vcmp.lt.s32.totalorder %v2632, 0
      %v3787 = vand.u32 %v2632, 2139095040
      %v3788 = vshrl.u32 %v3787, 23
      %v3789 = vsub.s32 %v3788, 127
      %v3790 = vand.u32 2147483647, %v2632
      %v3791 = vand.u32 %v3790, 8388607
      %v3792 = vor.u32 %v3791, 8388608
      %v3793 = vsub.s32 0, %v3792
      %v3794 = vadd.s32 %v3789, 1
      %vm3795 = vcmp.gt.s32.totalorder %v3794, 0
      %v3796 = vsel %vm3795, %v3794, 0
      %v3797 = vshrl.u32 %v3796, 5
      %v3798 = vand.u32 %v3796, 31
      %v3799 = vsub.s32 32, %v3798
      %v3800 = vshrl.u32 683565275, %v3799
      %v3801 = vshll.u32 683565275, %v3798
      %v3802 = vshrl.u32 2475754826, %v3799
      %v3803 = vor.u32 %v3801, %v3802
      %v3804 = vshll.u32 2475754826, %v3798
      %v3805 = vshrl.u32 2131351028, %v3799
      %v3806 = vor.u32 %v3804, %v3805
      %v3807 = vshll.u32 2131351028, %v3798
      %v3808 = vshrl.u32 2102212464, %v3799
      %v3809 = vor.u32 %v3807, %v3808
      %v3810 = vshll.u32 2102212464, %v3798
      %v3811 = vshrl.u32 920167782, %v3799
      %v3812 = vor.u32 %v3810, %v3811
      %v3813 = vshll.u32 920167782, %v3798
      %v3814 = vshrl.u32 1326507024, %v3799
      %v3815 = vor.u32 %v3813, %v3814
      %vm3816 = vcmp.lt.s32.totalorder %v3797, 1
      %vm3817 = vcmp.lt.s32.totalorder %v3797, 2
      %vm3818 = vcmp.lt.s32.totalorder %v3797, 3
      %vm3819 = vcmp.lt.s32.totalorder %v3797, 4
      %v3820 = vsel %vm3816, %v3800, %v3803
      %v3821 = vsel %vm3819, %v3809, 2102212464
      %v3822 = vsel %vm3818, %v3806, %v3821
      %v3823 = vsel %vm3817, %v3820, %v3822
      %v3824 = vsel %vm3816, %v3803, %v3806
      %v3825 = vsel %vm3819, %v3812, 920167782
      %v3826 = vsel %vm3818, %v3809, %v3825
      %v3827 = vsel %vm3817, %v3824, %v3826
      %v3828 = vsel %vm3816, %v3806, %v3809
      %v3829 = vsel %vm3819, %v3815, 1326507024
      %v3830 = vsel %vm3818, %v3812, %v3829
      %v3831 = vsel %vm3817, %v3828, %v3830
      %v3832 = vshll.u32 %v3792, 8
      %v3833 = vmul.u32.u64.compose %v3832, %v3831
      %v3834 = vextract.low.u32 %v3833
      %v3835 = vextract.high.u32 %v3833
      %v3836 = vmul.u32.u64.compose %v3832, %v3827
      %v3837 = vextract.low.u32 %v3836
      %v3838 = vextract.high.u32 %v3836
      %v3839 = vmul.u32 %v3832, %v3823
      %v3840 = vadd.s32 %v3835, %v3837
      %vm3841 = vc.u32 %v3835, %v3837
      %v3842 = vadd.s32 %v3838, 1
      %v3843 = vsel %vm3841, %v3842, %v3838
      %v3844 = vadd.s32 %v3839, %v3843
      %v3845 = vadd.s32 %v3844, 536870912
      %v3846 = vshrl.u32 %v3845, 30
      %v3847 = vshll.u32 %v3846, 30
      %v3848 = vsub.s32 %v3844, %v3847
      %vm3849 = vcmp.lt.s32.totalorder %v3848, 0
      %v3850 = vsub.s32 0, %v3848
      %v3851 = vsel %vm3849, %v3850, %v3848
      %v3852 = vclz %v3851
      %v3853 = vsub.s32 %v3852, 2
      %vm3854 = vcmp.gt.s32.totalorder 0, %v3853
      %v3855 = vsel %vm3854, 0, %v3853
      %v3856 = vsub.s32 32, %v3855
      %v3857 = vshll.u32 %v3848, %v3855
      %v3858 = vshrl.u32 %v3840, %v3856
      %v3859 = vor.u32 %v3857, %v3858
      %v3860 = vsub.s32 4294967266, %v3855
      %v3861 = vadd.s32 %v3860, 127
      %v3862 = vshll.u32 %v3861, 23
      %v3863 = vor.u32 4788187, %v3862
      %v3864 = vand.u32 2147483647, %v3863
      %v3866 = vcvt.s32.f32 %v3859
      %v3867 = vmul.f32 %v3866, %v3864
      %v3868 = vxor.u32 %v3867, 2147483648
      %v3869 = vsel %vm3786, %v3868, %v3867
      %v3870 = vsub.s32 4, %v3846
      %v3871 = vsel %vm3786, %v3870, %v3846
      %v3872 = vsel %vm3785, %v2632, %v3869
      %v3873 = vsel %vm3785, 0, %v3871
      %v3874 = vcosq.f32.pop %v3872
      %v3875 = vsinq.f32.pop %v3872
      %vm3876 = vweird.f32 %v2632
      %v3877 = vadd.s32 %v3873, 3
      %v3878 = vand.u32 %v3877, 3
      %vm3879 = vcmp.lt.s32.totalorder %v3878, 2
      %vm3880 = vcmp.eq.s32.totalorder %v3878, 0
      %v3881 = vxor.u32 %v3875, 2147483648
      %v3882 = vsel %vm3880, %v3874, %v3881
      %vm3883 = vcmp.eq.s32.totalorder %v3878, 2
      %v3884 = vxor.u32 %v3874, 2147483648
      %v3885 = vsel %vm3883, %v3884, %v3875
      %v3886 = vsel %vm3879, %v3882, %v3885
      %v3887 = vsel %vm3876, nan, %v3886
      %v3888 = vand.u32 2147483647, %v2547
      %vm3889 = vcmp.le.f32.partialorder %v3888, 0.7853982
      %vm3890 = vcmp.lt.s32.totalorder %v2547, 0
      %v3891 = vand.u32 %v2547, 2139095040
      %v3892 = vshrl.u32 %v3891, 23
      %v3893 = vsub.s32 %v3892, 127
      %v3894 = vand.u32 2147483647, %v2547
      %v3895 = vand.u32 %v3894, 8388607
      %v3896 = vor.u32 %v3895, 8388608
      %v3897 = vsub.s32 0, %v3896
      %v3898 = vadd.s32 %v3893, 1
      %vm3899 = vcmp.gt.s32.totalorder %v3898, 0
      %v3900 = vsel %vm3899, %v3898, 0
      %v3901 = vshrl.u32 %v3900, 5
      %v3902 = vand.u32 %v3900, 31
      %v3903 = vsub.s32 32, %v3902
      %v3904 = vshrl.u32 683565275, %v3903
      %v3905 = vshll.u32 683565275, %v3902
      %v3906 = vshrl.u32 2475754826, %v3903
      %v3907 = vor.u32 %v3905, %v3906
      %v3908 = vshll.u32 2475754826, %v3902
      %v3909 = vshrl.u32 2131351028, %v3903
      %v3910 = vor.u32 %v3908, %v3909
      %v3911 = vshll.u32 2131351028, %v3902
      %v3912 = vshrl.u32 2102212464, %v3903
      %v3913 = vor.u32 %v3911, %v3912
      %v3914 = vshll.u32 2102212464, %v3902
      %v3915 = vshrl.u32 920167782, %v3903
      %v3916 = vor.u32 %v3914, %v3915
      %v3917 = vshll.u32 920167782, %v3902
      %v3918 = vshrl.u32 1326507024, %v3903
      %v3919 = vor.u32 %v3917, %v3918
      %vm3920 = vcmp.lt.s32.totalorder %v3901, 1
      %vm3921 = vcmp.lt.s32.totalorder %v3901, 2
      %vm3922 = vcmp.lt.s32.totalorder %v3901, 3
      %vm3923 = vcmp.lt.s32.totalorder %v3901, 4
      %v3924 = vsel %vm3920, %v3904, %v3907
      %v3925 = vsel %vm3923, %v3913, 2102212464
      %v3926 = vsel %vm3922, %v3910, %v3925
      %v3927 = vsel %vm3921, %v3924, %v3926
      %v3928 = vsel %vm3920, %v3907, %v3910
      %v3929 = vsel %vm3923, %v3916, 920167782
      %v3930 = vsel %vm3922, %v3913, %v3929
      %v3931 = vsel %vm3921, %v3928, %v3930
      %v3932 = vsel %vm3920, %v3910, %v3913
      %v3933 = vsel %vm3923, %v3919, 1326507024
      %v3934 = vsel %vm3922, %v3916, %v3933
      %v3935 = vsel %vm3921, %v3932, %v3934
      %v3936 = vshll.u32 %v3896, 8
      %v3937 = vmul.u32.u64.compose %v3936, %v3935
      %v3938 = vextract.low.u32 %v3937
      %v3939 = vextract.high.u32 %v3937
      %v3940 = vmul.u32.u64.compose %v3936, %v3931
      %v3941 = vextract.low.u32 %v3940
      %v3942 = vextract.high.u32 %v3940
      %v3943 = vmul.u32 %v3936, %v3927
      %v3944 = vadd.s32 %v3939, %v3941
      %vm3945 = vc.u32 %v3939, %v3941
      %v3946 = vadd.s32 %v3942, 1
      %v3947 = vsel %vm3945, %v3946, %v3942
      %v3948 = vadd.s32 %v3943, %v3947
      %v3949 = vadd.s32 %v3948, 536870912
      %v3950 = vshrl.u32 %v3949, 30
      %v3951 = vshll.u32 %v3950, 30
      %v3952 = vsub.s32 %v3948, %v3951
      %vm3953 = vcmp.lt.s32.totalorder %v3952, 0
      %v3954 = vsub.s32 0, %v3952
      %v3955 = vsel %vm3953, %v3954, %v3952
      %v3956 = vclz %v3955
      %v3957 = vsub.s32 %v3956, 2
      %vm3958 = vcmp.gt.s32.totalorder 0, %v3957
      %v3959 = vsel %vm3958, 0, %v3957
      %v3960 = vsub.s32 32, %v3959
      %v3961 = vshll.u32 %v3952, %v3959
      %v3962 = vshrl.u32 %v3944, %v3960
      %v3963 = vor.u32 %v3961, %v3962
      %v3964 = vsub.s32 4294967266, %v3959
      %v3965 = vadd.s32 %v3964, 127
      %v3966 = vshll.u32 %v3965, 23
      %v3967 = vor.u32 4788187, %v3966
      %v3968 = vand.u32 2147483647, %v3967
      %v3970 = vcvt.s32.f32 %v3963
      %v3971 = vmul.f32 %v3970, %v3968
      %v3972 = vxor.u32 %v3971, 2147483648
      %v3973 = vsel %vm3890, %v3972, %v3971
      %v3974 = vsub.s32 4, %v3950
      %v3975 = vsel %vm3890, %v3974, %v3950
      %v3976 = vsel %vm3889, %v2547, %v3973
      %v3977 = vsel %vm3889, 0, %v3975
      %v3978 = vcosq.f32.pop %v3976
      %v3979 = vsinq.f32.pop %v3976
      %vm3980 = vweird.f32 %v2547
      %v3981 = vadd.s32 %v3977, 3
      %v3982 = vand.u32 %v3981, 3
      %vm3983 = vcmp.lt.s32.totalorder %v3982, 2
      %vm3984 = vcmp.eq.s32.totalorder %v3982, 0
      %v3985 = vxor.u32 %v3979, 2147483648
      %v3986 = vsel %vm3984, %v3978, %v3985
      %vm3987 = vcmp.eq.s32.totalorder %v3982, 2
      %v3988 = vxor.u32 %v3978, 2147483648
      %v3989 = vsel %vm3987, %v3988, %v3979
      %v3990 = vsel %vm3983, %v3986, %v3989
      %v3991 = vsel %vm3980, nan, %v3990
      %v3992 = vand.u32 2147483647, %v2549
      %vm3993 = vcmp.le.f32.partialorder %v3992, 0.7853982
      %vm3994 = vcmp.lt.s32.totalorder %v2549, 0
      %v3995 = vand.u32 %v2549, 2139095040
      %v3996 = vshrl.u32 %v3995, 23
      %v3997 = vsub.s32 %v3996, 127
      %v3998 = vand.u32 2147483647, %v2549
      %v3999 = vand.u32 %v3998, 8388607
      %v4000 = vor.u32 %v3999, 8388608
      %v4001 = vsub.s32 0, %v4000
      %v4002 = vadd.s32 %v3997, 1
      %vm4003 = vcmp.gt.s32.totalorder %v4002, 0
      %v4004 = vsel %vm4003, %v4002, 0
      %v4005 = vshrl.u32 %v4004, 5
      %v4006 = vand.u32 %v4004, 31
      %v4007 = vsub.s32 32, %v4006
      %v4008 = vshrl.u32 683565275, %v4007
      %v4009 = vshll.u32 683565275, %v4006
      %v4010 = vshrl.u32 2475754826, %v4007
      %v4011 = vor.u32 %v4009, %v4010
      %v4012 = vshll.u32 2475754826, %v4006
      %v4013 = vshrl.u32 2131351028, %v4007
      %v4014 = vor.u32 %v4012, %v4013
      %v4015 = vshll.u32 2131351028, %v4006
      %v4016 = vshrl.u32 2102212464, %v4007
      %v4017 = vor.u32 %v4015, %v4016
      %v4018 = vshll.u32 2102212464, %v4006
      %v4019 = vshrl.u32 920167782, %v4007
      %v4020 = vor.u32 %v4018, %v4019
      %v4021 = vshll.u32 920167782, %v4006
      %v4022 = vshrl.u32 1326507024, %v4007
      %v4023 = vor.u32 %v4021, %v4022
      %vm4024 = vcmp.lt.s32.totalorder %v4005, 1
      %vm4025 = vcmp.lt.s32.totalorder %v4005, 2
      %vm4026 = vcmp.lt.s32.totalorder %v4005, 3
      %vm4027 = vcmp.lt.s32.totalorder %v4005, 4
      %v4028 = vsel %vm4024, %v4008, %v4011
      %v4029 = vsel %vm4027, %v4017, 2102212464
      %v4030 = vsel %vm4026, %v4014, %v4029
      %v4031 = vsel %vm4025, %v4028, %v4030
      %v4032 = vsel %vm4024, %v4011, %v4014
      %v4033 = vsel %vm4027, %v4020, 920167782
      %v4034 = vsel %vm4026, %v4017, %v4033
      %v4035 = vsel %vm4025, %v4032, %v4034
      %v4036 = vsel %vm4024, %v4014, %v4017
      %v4037 = vsel %vm4027, %v4023, 1326507024
      %v4038 = vsel %vm4026, %v4020, %v4037
      %v4039 = vsel %vm4025, %v4036, %v4038
      %v4040 = vshll.u32 %v4000, 8
      %v4041 = vmul.u32.u64.compose %v4040, %v4039
      %v4042 = vextract.low.u32 %v4041
      %v4043 = vextract.high.u32 %v4041
      %v4044 = vmul.u32.u64.compose %v4040, %v4035
      %v4045 = vextract.low.u32 %v4044
      %v4046 = vextract.high.u32 %v4044
      %v4047 = vmul.u32 %v4040, %v4031
      %v4048 = vadd.s32 %v4043, %v4045
      %vm4049 = vc.u32 %v4043, %v4045
      %v4050 = vadd.s32 %v4046, 1
      %v4051 = vsel %vm4049, %v4050, %v4046
      %v4052 = vadd.s32 %v4047, %v4051
      %v4053 = vadd.s32 %v4052, 536870912
      %v4054 = vshrl.u32 %v4053, 30
      %v4055 = vshll.u32 %v4054, 30
      %v4056 = vsub.s32 %v4052, %v4055
      %vm4057 = vcmp.lt.s32.totalorder %v4056, 0
      %v4058 = vsub.s32 0, %v4056
      %v4059 = vsel %vm4057, %v4058, %v4056
      %v4060 = vclz %v4059
      %v4061 = vsub.s32 %v4060, 2
      %vm4062 = vcmp.gt.s32.totalorder 0, %v4061
      %v4063 = vsel %vm4062, 0, %v4061
      %v4064 = vsub.s32 32, %v4063
      %v4065 = vshll.u32 %v4056, %v4063
      %v4066 = vshrl.u32 %v4048, %v4064
      %v4067 = vor.u32 %v4065, %v4066
      %v4068 = vsub.s32 4294967266, %v4063
      %v4069 = vadd.s32 %v4068, 127
      %v4070 = vshll.u32 %v4069, 23
      %v4071 = vor.u32 4788187, %v4070
      %v4072 = vand.u32 2147483647, %v4071
      %v4074 = vcvt.s32.f32 %v4067
      %v4075 = vmul.f32 %v4074, %v4072
      %v4076 = vxor.u32 %v4075, 2147483648
      %v4077 = vsel %vm3994, %v4076, %v4075
      %v4078 = vsub.s32 4, %v4054
      %v4079 = vsel %vm3994, %v4078, %v4054
      %v4080 = vsel %vm3993, %v2549, %v4077
      %v4081 = vsel %vm3993, 0, %v4079
      %v4082 = vcosq.f32.pop %v4080
      %v4083 = vsinq.f32.pop %v4080
      %vm4084 = vweird.f32 %v2549
      %v4085 = vadd.s32 %v4081, 3
      %v4086 = vand.u32 %v4085, 3
      %vm4087 = vcmp.lt.s32.totalorder %v4086, 2
      %vm4088 = vcmp.eq.s32.totalorder %v4086, 0
      %v4089 = vxor.u32 %v4083, 2147483648
      %v4090 = vsel %vm4088, %v4082, %v4089
      %vm4091 = vcmp.eq.s32.totalorder %v4086, 2
      %v4092 = vxor.u32 %v4082, 2147483648
      %v4093 = vsel %vm4091, %v4092, %v4083
      %v4094 = vsel %vm4087, %v4090, %v4093
      %v4095 = vsel %vm4084, nan, %v4094
      %v4096 = vand.u32 2147483647, %v2636
      %vm4097 = vcmp.le.f32.partialorder %v4096, 0.7853982
      %vm4098 = vcmp.lt.s32.totalorder %v2636, 0
      %v4099 = vand.u32 %v2636, 2139095040
      %v4100 = vshrl.u32 %v4099, 23
      %v4101 = vsub.s32 %v4100, 127
      %v4102 = vand.u32 2147483647, %v2636
      %v4103 = vand.u32 %v4102, 8388607
      %v4104 = vor.u32 %v4103, 8388608
      %v4105 = vsub.s32 0, %v4104
      %v4106 = vadd.s32 %v4101, 1
      %vm4107 = vcmp.gt.s32.totalorder %v4106, 0
      %v4108 = vsel %vm4107, %v4106, 0
      %v4109 = vshrl.u32 %v4108, 5
      %v4110 = vand.u32 %v4108, 31
      %v4111 = vsub.s32 32, %v4110
      %v4112 = vshrl.u32 683565275, %v4111
      %v4113 = vshll.u32 683565275, %v4110
      %v4114 = vshrl.u32 2475754826, %v4111
      %v4115 = vor.u32 %v4113, %v4114
      %v4116 = vshll.u32 2475754826, %v4110
      %v4117 = vshrl.u32 2131351028, %v4111
      %v4118 = vor.u32 %v4116, %v4117
      %v4119 = vshll.u32 2131351028, %v4110
      %v4120 = vshrl.u32 2102212464, %v4111
      %v4121 = vor.u32 %v4119, %v4120
      %v4122 = vshll.u32 2102212464, %v4110
      %v4123 = vshrl.u32 920167782, %v4111
      %v4124 = vor.u32 %v4122, %v4123
      %v4125 = vshll.u32 920167782, %v4110
      %v4126 = vshrl.u32 1326507024, %v4111
      %v4127 = vor.u32 %v4125, %v4126
      %vm4128 = vcmp.lt.s32.totalorder %v4109, 1
      %vm4129 = vcmp.lt.s32.totalorder %v4109, 2
      %vm4130 = vcmp.lt.s32.totalorder %v4109, 3
      %vm4131 = vcmp.lt.s32.totalorder %v4109, 4
      %v4132 = vsel %vm4128, %v4112, %v4115
      %v4133 = vsel %vm4131, %v4121, 2102212464
      %v4134 = vsel %vm4130, %v4118, %v4133
      %v4135 = vsel %vm4129, %v4132, %v4134
      %v4136 = vsel %vm4128, %v4115, %v4118
      %v4137 = vsel %vm4131, %v4124, 920167782
      %v4138 = vsel %vm4130, %v4121, %v4137
      %v4139 = vsel %vm4129, %v4136, %v4138
      %v4140 = vsel %vm4128, %v4118, %v4121
      %v4141 = vsel %vm4131, %v4127, 1326507024
      %v4142 = vsel %vm4130, %v4124, %v4141
      %v4143 = vsel %vm4129, %v4140, %v4142
      %v4144 = vshll.u32 %v4104, 8
      %v4145 = vmul.u32.u64.compose %v4144, %v4143
      %v4146 = vextract.low.u32 %v4145
      %v4147 = vextract.high.u32 %v4145
      %v4148 = vmul.u32.u64.compose %v4144, %v4139
      %v4149 = vextract.low.u32 %v4148
      %v4150 = vextract.high.u32 %v4148
      %v4151 = vmul.u32 %v4144, %v4135
      %v4152 = vadd.s32 %v4147, %v4149
      %vm4153 = vc.u32 %v4147, %v4149
      %v4154 = vadd.s32 %v4150, 1
      %v4155 = vsel %vm4153, %v4154, %v4150
      %v4156 = vadd.s32 %v4151, %v4155
      %v4157 = vadd.s32 %v4156, 536870912
      %v4158 = vshrl.u32 %v4157, 30
      %v4159 = vshll.u32 %v4158, 30
      %v4160 = vsub.s32 %v4156, %v4159
      %vm4161 = vcmp.lt.s32.totalorder %v4160, 0
      %v4162 = vsub.s32 0, %v4160
      %v4163 = vsel %vm4161, %v4162, %v4160
      %v4164 = vclz %v4163
      %v4165 = vsub.s32 %v4164, 2
      %vm4166 = vcmp.gt.s32.totalorder 0, %v4165
      %v4167 = vsel %vm4166, 0, %v4165
      %v4168 = vsub.s32 32, %v4167
      %v4169 = vshll.u32 %v4160, %v4167
      %v4170 = vshrl.u32 %v4152, %v4168
      %v4171 = vor.u32 %v4169, %v4170
      %v4172 = vsub.s32 4294967266, %v4167
      %v4173 = vadd.s32 %v4172, 127
      %v4174 = vshll.u32 %v4173, 23
      %v4175 = vor.u32 4788187, %v4174
      %v4176 = vand.u32 2147483647, %v4175
      %v4178 = vcvt.s32.f32 %v4171
      %v4179 = vmul.f32 %v4178, %v4176
      %v4180 = vxor.u32 %v4179, 2147483648
      %v4181 = vsel %vm4098, %v4180, %v4179
      %v4182 = vsub.s32 4, %v4158
      %v4183 = vsel %vm4098, %v4182, %v4158
      %v4184 = vsel %vm4097, %v2636, %v4181
      %v4185 = vsel %vm4097, 0, %v4183
      %v4186 = vcosq.f32.pop %v4184
      %v4187 = vsinq.f32.pop %v4184
      %vm4188 = vweird.f32 %v2636
      %v4189 = vadd.s32 %v4185, 3
      %v4190 = vand.u32 %v4189, 3
      %vm4191 = vcmp.lt.s32.totalorder %v4190, 2
      %vm4192 = vcmp.eq.s32.totalorder %v4190, 0
      %v4193 = vxor.u32 %v4187, 2147483648
      %v4194 = vsel %vm4192, %v4186, %v4193
      %vm4195 = vcmp.eq.s32.totalorder %v4190, 2
      %v4196 = vxor.u32 %v4186, 2147483648
      %v4197 = vsel %vm4195, %v4196, %v4187
      %v4198 = vsel %vm4191, %v4194, %v4197
      %v4199 = vsel %vm4188, nan, %v4198
      %v4200 = vand.u32 2147483647, %v2638
      %vm4201 = vcmp.le.f32.partialorder %v4200, 0.7853982
      %vm4202 = vcmp.lt.s32.totalorder %v2638, 0
      %v4203 = vand.u32 %v2638, 2139095040
      %v4204 = vshrl.u32 %v4203, 23
      %v4205 = vsub.s32 %v4204, 127
      %v4206 = vand.u32 2147483647, %v2638
      %v4207 = vand.u32 %v4206, 8388607
      %v4208 = vor.u32 %v4207, 8388608
      %v4209 = vsub.s32 0, %v4208
      %v4210 = vadd.s32 %v4205, 1
      %vm4211 = vcmp.gt.s32.totalorder %v4210, 0
      %v4212 = vsel %vm4211, %v4210, 0
      %v4213 = vshrl.u32 %v4212, 5
      %v4214 = vand.u32 %v4212, 31
      %v4215 = vsub.s32 32, %v4214
      %v4216 = vshrl.u32 683565275, %v4215
      %v4217 = vshll.u32 683565275, %v4214
      %v4218 = vshrl.u32 2475754826, %v4215
      %v4219 = vor.u32 %v4217, %v4218
      %v4220 = vshll.u32 2475754826, %v4214
      %v4221 = vshrl.u32 2131351028, %v4215
      %v4222 = vor.u32 %v4220, %v4221
      %v4223 = vshll.u32 2131351028, %v4214
      %v4224 = vshrl.u32 2102212464, %v4215
      %v4225 = vor.u32 %v4223, %v4224
      %v4226 = vshll.u32 2102212464, %v4214
      %v4227 = vshrl.u32 920167782, %v4215
      %v4228 = vor.u32 %v4226, %v4227
      %v4229 = vshll.u32 920167782, %v4214
      %v4230 = vshrl.u32 1326507024, %v4215
      %v4231 = vor.u32 %v4229, %v4230
      %vm4232 = vcmp.lt.s32.totalorder %v4213, 1
      %vm4233 = vcmp.lt.s32.totalorder %v4213, 2
      %vm4234 = vcmp.lt.s32.totalorder %v4213, 3
      %vm4235 = vcmp.lt.s32.totalorder %v4213, 4
      %v4236 = vsel %vm4232, %v4216, %v4219
      %v4237 = vsel %vm4235, %v4225, 2102212464
      %v4238 = vsel %vm4234, %v4222, %v4237
      %v4239 = vsel %vm4233, %v4236, %v4238
      %v4240 = vsel %vm4232, %v4219, %v4222
      %v4241 = vsel %vm4235, %v4228, 920167782
      %v4242 = vsel %vm4234, %v4225, %v4241
      %v4243 = vsel %vm4233, %v4240, %v4242
      %v4244 = vsel %vm4232, %v4222, %v4225
      %v4245 = vsel %vm4235, %v4231, 1326507024
      %v4246 = vsel %vm4234, %v4228, %v4245
      %v4247 = vsel %vm4233, %v4244, %v4246
      %v4248 = vshll.u32 %v4208, 8
      %v4249 = vmul.u32.u64.compose %v4248, %v4247
      %v4250 = vextract.low.u32 %v4249
      %v4251 = vextract.high.u32 %v4249
      %v4252 = vmul.u32.u64.compose %v4248, %v4243
      %v4253 = vextract.low.u32 %v4252
      %v4254 = vextract.high.u32 %v4252
      %v4255 = vmul.u32 %v4248, %v4239
      %v4256 = vadd.s32 %v4251, %v4253
      %vm4257 = vc.u32 %v4251, %v4253
      %v4258 = vadd.s32 %v4254, 1
      %v4259 = vsel %vm4257, %v4258, %v4254
      %v4260 = vadd.s32 %v4255, %v4259
      %v4261 = vadd.s32 %v4260, 536870912
      %v4262 = vshrl.u32 %v4261, 30
      %v4263 = vshll.u32 %v4262, 30
      %v4264 = vsub.s32 %v4260, %v4263
      %vm4265 = vcmp.lt.s32.totalorder %v4264, 0
      %v4266 = vsub.s32 0, %v4264
      %v4267 = vsel %vm4265, %v4266, %v4264
      %v4268 = vclz %v4267
      %v4269 = vsub.s32 %v4268, 2
      %vm4270 = vcmp.gt.s32.totalorder 0, %v4269
      %v4271 = vsel %vm4270, 0, %v4269
      %v4272 = vsub.s32 32, %v4271
      %v4273 = vshll.u32 %v4264, %v4271
      %v4274 = vshrl.u32 %v4256, %v4272
      %v4275 = vor.u32 %v4273, %v4274
      %v4276 = vsub.s32 4294967266, %v4271
      %v4277 = vadd.s32 %v4276, 127
      %v4278 = vshll.u32 %v4277, 23
      %v4279 = vor.u32 4788187, %v4278
      %v4280 = vand.u32 2147483647, %v4279
      %v4282 = vcvt.s32.f32 %v4275
      %v4283 = vmul.f32 %v4282, %v4280
      %v4284 = vxor.u32 %v4283, 2147483648
      %v4285 = vsel %vm4202, %v4284, %v4283
      %v4286 = vsub.s32 4, %v4262
      %v4287 = vsel %vm4202, %v4286, %v4262
      %v4288 = vsel %vm4201, %v2638, %v4285
      %v4289 = vsel %vm4201, 0, %v4287
      %v4290 = vcosq.f32.pop %v4288
      %v4291 = vsinq.f32.pop %v4288
      %vm4292 = vweird.f32 %v2638
      %v4293 = vadd.s32 %v4289, 3
      %v4294 = vand.u32 %v4293, 3
      %vm4295 = vcmp.lt.s32.totalorder %v4294, 2
      %vm4296 = vcmp.eq.s32.totalorder %v4294, 0
      %v4297 = vxor.u32 %v4291, 2147483648
      %v4298 = vsel %vm4296, %v4290, %v4297
      %vm4299 = vcmp.eq.s32.totalorder %v4294, 2
      %v4300 = vxor.u32 %v4290, 2147483648
      %v4301 = vsel %vm4299, %v4300, %v4291
      %v4302 = vsel %vm4295, %v4298, %v4301
      %v4303 = vsel %vm4292, nan, %v4302
      %v4304 = vld [vmem:[%s5] sm:$0xff]
      %v4305 = vld [vmem:[%s6] sm:$0xff]
      %4307 = vset.pattern.permute.xlu0 0
      %4308 = vperm.xlu0 %4307, %v4305
      %v4309 = vpop.permute.xlu0 %4308
      %v4312 = vsel %vm2449, %v4304, 0
      %4314 = vmatprep.subr.mxu0 %v2847
      %4315 = vmatpush1.msra.mxu0 %v2743
      %4316 = vmatprep.subr.mxu0 %v3263
      %4317 = vmatpush1.msra.mxu0 %v3159
      %4318 = vmatprep.subr.mxu0 %v3679
      %4319 = vmatpush1.msra.mxu0 %v3575
      %4320 = vmatprep.subr.mxu0 %v4095
      %4321 = vmatpush1.msra.mxu0 %v3991
      %4322 = vmatprep.subr.mxu0 0.0
      %4323 = vmatpush1.msra.mxu0 0.0
      %4324 = vmatprep.subr.mxu0 0.0
      %4325 = vmatpush1.msra.mxu0 0.0
      %4326 = vmatprep.subr.mxu0 0.0
      %4327 = vmatpush1.msra.mxu0 0.0
      %4328 = vmatprep.subr.mxu0 0.0
      %4329 = vmatpush1.msra.mxu0 0.0
      %4330 = vmatprep.subr.mxu0 0.0
      %4331 = vmatpush1.msra.mxu0 0.0
      %4332 = vmatprep.subr.mxu0 0.0
      %4333 = vmatpush1.msra.mxu0 0.0
      %4334 = vmatprep.subr.mxu0 0.0
      %4335 = vmatpush1.msra.mxu0 0.0
      %4336 = vmatprep.subr.mxu0 0.0
      %4337 = vmatpush1.msra.mxu0 0.0
      %4338 = vmatprep.subr.mxu0 0.0
      %4339 = vmatpush1.msra.mxu0 0.0
      %4340 = vmatprep.subr.mxu0 0.0
      %4341 = vmatpush1.msra.mxu0 0.0
      %4342 = vmatprep.subr.mxu0 0.0
      %4343 = vmatpush1.msra.mxu0 0.0
      %4344 = vmatprep.subr.mxu0 0.0
      %4345 = vmatpush1.msra.mxu0 0.0
      %4346 = vmatprep.subr.mxu0 0.0
      %4347 = vmatpush1.msra.mxu0 0.0
      %4348 = vmatprep.subr.mxu0 0.0
      %4349 = vmatpush1.msra.mxu0 0.0
      %4350 = vmatprep.subr.mxu0 0.0
      %4351 = vmatpush1.msra.mxu0 0.0
      %4352 = vmatprep.subr.mxu0 0.0
      %4353 = vmatpush1.msra.mxu0 0.0
      %4354 = vmatprep.subr.mxu0 0.0
      %4355 = vmatpush1.msra.mxu0 0.0
      %4356 = vmatprep.subr.mxu0 0.0
      %4357 = vmatpush1.msra.mxu0 0.0
      %4358 = vmatprep.subr.mxu0 0.0
      %4359 = vmatpush1.msra.mxu0 0.0
      %4360 = vmatprep.subr.mxu0 0.0
      %4361 = vmatpush1.msra.mxu0 0.0
      %4362 = vmatprep.subr.mxu0 0.0
      %4363 = vmatpush1.msra.mxu0 0.0
      %4364 = vmatprep.subr.mxu0 0.0
      %4365 = vmatpush1.msra.mxu0 0.0
      %4366 = vmatprep.subr.mxu0 0.0
      %4367 = vmatpush1.msra.mxu0 0.0
      %4368 = vmatprep.subr.mxu0 0.0
      %4369 = vmatpush1.msra.mxu0 0.0
      %4370 = vmatprep.subr.mxu0 0.0
      %4371 = vmatpush1.msra.mxu0 0.0
      %4372 = vmatprep.subr.mxu0 0.0
      %4373 = vmatpush1.msra.mxu0 0.0
      %4374 = vmatprep.subr.mxu0 0.0
      %4375 = vmatpush1.msra.mxu0 0.0
      %4376 = vmatprep.subr.mxu0 0.0
      %4377 = vmatpush1.msra.mxu0 0.0
      %4378 = vmatprep.mubr.f32.mxu0 0.0
      %4379 = vmatmul.mubr.f32.gmra.mrb[0].mxu0 %v4312
      %v4380 = vpop.f32.mrb[0].mxu0
      %v4381 = vadd.f32 %v4309, %v4380
      %v4382 = vpop.f32.mrb[0].mxu0
      %v4383 = vadd.f32 %v4309, %v4382
      %4384 = vdwg.mxu0
      %4385 = vmatprep.subr.mxu0 %v3055
      %4386 = vmatpush1.msra.mxu0 %v2951
      %4387 = vmatprep.subr.mxu0 %v3471
      %4388 = vmatpush1.msra.mxu0 %v3367
      %4389 = vmatprep.subr.mxu0 %v3887
      %4390 = vmatpush1.msra.mxu0 %v3783
      %4391 = vmatprep.subr.mxu0 %v4303
      %4392 = vmatpush1.msra.mxu0 %v4199
      %4393 = vmatprep.subr.mxu0 0.0
      %4394 = vmatpush1.msra.mxu0 0.0
      %4395 = vmatprep.subr.mxu0 0.0
      %4396 = vmatpush1.msra.mxu0 0.0
      %4397 = vmatprep.subr.mxu0 0.0
      %4398 = vmatpush1.msra.mxu0 0.0
      %4399 = vmatprep.subr.mxu0 0.0
      %4400 = vmatpush1.msra.mxu0 0.0
      %4401 = vmatprep.subr.mxu0 0.0
      %4402 = vmatpush1.msra.mxu0 0.0
      %4403 = vmatprep.subr.mxu0 0.0
      %4404 = vmatpush1.msra.mxu0 0.0
      %4405 = vmatprep.subr.mxu0 0.0
      %4406 = vmatpush1.msra.mxu0 0.0
      %4407 = vmatprep.subr.mxu0 0.0
      %4408 = vmatpush1.msra.mxu0 0.0
      %4409 = vmatprep.subr.mxu0 0.0
      %4410 = vmatpush1.msra.mxu0 0.0
      %4411 = vmatprep.subr.mxu0 0.0
      %4412 = vmatpush1.msra.mxu0 0.0
      %4413 = vmatprep.subr.mxu0 0.0
      %4414 = vmatpush1.msra.mxu0 0.0
      %4415 = vmatprep.subr.mxu0 0.0
      %4416 = vmatpush1.msra.mxu0 0.0
      %4417 = vmatprep.subr.mxu0 0.0
      %4418 = vmatpush1.msra.mxu0 0.0
      %4419 = vmatprep.subr.mxu0 0.0
      %4420 = vmatpush1.msra.mxu0 0.0
      %4421 = vmatprep.subr.mxu0 0.0
      %4422 = vmatpush1.msra.mxu0 0.0
      %4423 = vmatprep.subr.mxu0 0.0
      %4424 = vmatpush1.msra.mxu0 0.0
      %4425 = vmatprep.subr.mxu0 0.0
      %4426 = vmatpush1.msra.mxu0 0.0
      %4427 = vmatprep.subr.mxu0 0.0
      %4428 = vmatpush1.msra.mxu0 0.0
      %4429 = vmatprep.subr.mxu0 0.0
      %4430 = vmatpush1.msra.mxu0 0.0
      %4431 = vmatprep.subr.mxu0 0.0
      %4432 = vmatpush1.msra.mxu0 0.0
      %4433 = vmatprep.subr.mxu0 0.0
      %4434 = vmatpush1.msra.mxu0 0.0
      %4435 = vmatprep.subr.mxu0 0.0
      %4436 = vmatpush1.msra.mxu0 0.0
      %4437 = vmatprep.subr.mxu0 0.0
      %4438 = vmatpush1.msra.mxu0 0.0
      %4439 = vmatprep.subr.mxu0 0.0
      %4440 = vmatpush1.msra.mxu0 0.0
      %4441 = vmatprep.subr.mxu0 0.0
      %4442 = vmatpush1.msra.mxu0 0.0
      %4443 = vmatprep.subr.mxu0 0.0
      %4444 = vmatpush1.msra.mxu0 0.0
      %4445 = vmatprep.subr.mxu0 0.0
      %4446 = vmatpush1.msra.mxu0 0.0
      %4447 = vmatprep.subr.mxu0 0.0
      %4448 = vmatpush1.msra.mxu0 0.0
      %4449 = vmatprep.mubr.f32.mxu0 0.0
      %4450 = vmatmul.mubr.f32.gmra.mrb[0].mxu0 %v4312
      %v4451 = vpop.f32.mrb[0].mxu0
      %v4452 = vadd.f32 %v4309, %v4451
      %v4453 = vpop.f32.mrb[0].mxu0
      %v4454 = vadd.f32 %v4309, %v4453
      %4455 = vdwg.mxu0
      %v4456 = vand.u32 2147483647, %v4381
      %vm4457 = vcmp.le.f32.partialorder %v4456, 0.7853982
      %vm4458 = vcmp.lt.s32.totalorder %v4381, 0
      %v4459 = vand.u32 %v4381, 2139095040
      %v4460 = vshrl.u32 %v4459, 23
      %v4461 = vsub.s32 %v4460, 127
      %v4462 = vand.u32 2147483647, %v4381
      %v4463 = vand.u32 %v4462, 8388607
      %v4464 = vor.u32 %v4463, 8388608
      %v4465 = vsub.s32 0, %v4464
      %v4466 = vadd.s32 %v4461, 1
      %vm4467 = vcmp.gt.s32.totalorder %v4466, 0
      %v4468 = vsel %vm4467, %v4466, 0
      %v4469 = vshrl.u32 %v4468, 5
      %v4470 = vand.u32 %v4468, 31
      %v4471 = vsub.s32 32, %v4470
      %v4472 = vshrl.u32 683565275, %v4471
      %v4473 = vshll.u32 683565275, %v4470
      %v4474 = vshrl.u32 2475754826, %v4471
      %v4475 = vor.u32 %v4473, %v4474
      %v4476 = vshll.u32 2475754826, %v4470
      %v4477 = vshrl.u32 2131351028, %v4471
      %v4478 = vor.u32 %v4476, %v4477
      %v4479 = vshll.u32 2131351028, %v4470
      %v4480 = vshrl.u32 2102212464, %v4471
      %v4481 = vor.u32 %v4479, %v4480
      %v4482 = vshll.u32 2102212464, %v4470
      %v4483 = vshrl.u32 920167782, %v4471
      %v4484 = vor.u32 %v4482, %v4483
      %v4485 = vshll.u32 920167782, %v4470
      %v4486 = vshrl.u32 1326507024, %v4471
      %v4487 = vor.u32 %v4485, %v4486
      %vm4488 = vcmp.lt.s32.totalorder %v4469, 1
      %vm4489 = vcmp.lt.s32.totalorder %v4469, 2
      %vm4490 = vcmp.lt.s32.totalorder %v4469, 3
      %vm4491 = vcmp.lt.s32.totalorder %v4469, 4
      %v4492 = vsel %vm4488, %v4472, %v4475
      %v4493 = vsel %vm4491, %v4481, 2102212464
      %v4494 = vsel %vm4490, %v4478, %v4493
      %v4495 = vsel %vm4489, %v4492, %v4494
      %v4496 = vsel %vm4488, %v4475, %v4478
      %v4497 = vsel %vm4491, %v4484, 920167782
      %v4498 = vsel %vm4490, %v4481, %v4497
      %v4499 = vsel %vm4489, %v4496, %v4498
      %v4500 = vsel %vm4488, %v4478, %v4481
      %v4501 = vsel %vm4491, %v4487, 1326507024
      %v4502 = vsel %vm4490, %v4484, %v4501
      %v4503 = vsel %vm4489, %v4500, %v4502
      %v4504 = vshll.u32 %v4464, 8
      %v4505 = vmul.u32.u64.compose %v4504, %v4503
      %v4506 = vextract.low.u32 %v4505
      %v4507 = vextract.high.u32 %v4505
      %v4508 = vmul.u32.u64.compose %v4504, %v4499
      %v4509 = vextract.low.u32 %v4508
      %v4510 = vextract.high.u32 %v4508
      %v4511 = vmul.u32 %v4504, %v4495
      %v4512 = vadd.s32 %v4507, %v4509
      %vm4513 = vc.u32 %v4507, %v4509
      %v4514 = vadd.s32 %v4510, 1
      %v4515 = vsel %vm4513, %v4514, %v4510
      %v4516 = vadd.s32 %v4511, %v4515
      %v4517 = vadd.s32 %v4516, 536870912
      %v4518 = vshrl.u32 %v4517, 30
      %v4519 = vshll.u32 %v4518, 30
      %v4520 = vsub.s32 %v4516, %v4519
      %vm4521 = vcmp.lt.s32.totalorder %v4520, 0
      %v4522 = vsub.s32 0, %v4520
      %v4523 = vsel %vm4521, %v4522, %v4520
      %v4524 = vclz %v4523
      %v4525 = vsub.s32 %v4524, 2
      %vm4526 = vcmp.gt.s32.totalorder 0, %v4525
      %v4527 = vsel %vm4526, 0, %v4525
      %v4528 = vsub.s32 32, %v4527
      %v4529 = vshll.u32 %v4520, %v4527
      %v4530 = vshrl.u32 %v4512, %v4528
      %v4531 = vor.u32 %v4529, %v4530
      %v4532 = vsub.s32 4294967266, %v4527
      %v4533 = vadd.s32 %v4532, 127
      %v4534 = vshll.u32 %v4533, 23
      %v4535 = vor.u32 4788187, %v4534
      %v4536 = vand.u32 2147483647, %v4535
      %v4538 = vcvt.s32.f32 %v4531
      %v4539 = vmul.f32 %v4538, %v4536
      %v4540 = vxor.u32 %v4539, 2147483648
      %v4541 = vsel %vm4458, %v4540, %v4539
      %v4542 = vsub.s32 4, %v4518
      %v4543 = vsel %vm4458, %v4542, %v4518
      %v4544 = vsel %vm4457, %v4381, %v4541
      %v4545 = vsel %vm4457, 0, %v4543
      %v4546 = vcosq.f32.pop %v4544
      %v4547 = vsinq.f32.pop %v4544
      %vm4548 = vweird.f32 %v4381
      %v4549 = vadd.s32 %v4545, 3
      %v4550 = vand.u32 %v4549, 3
      %vm4551 = vcmp.lt.s32.totalorder %v4550, 2
      %vm4552 = vcmp.eq.s32.totalorder %v4550, 0
      %v4553 = vxor.u32 %v4547, 2147483648
      %v4554 = vsel %vm4552, %v4546, %v4553
      %vm4555 = vcmp.eq.s32.totalorder %v4550, 2
      %v4556 = vxor.u32 %v4546, 2147483648
      %v4557 = vsel %vm4555, %v4556, %v4547
      %v4558 = vsel %vm4551, %v4554, %v4557
      %v4559 = vsel %vm4548, nan, %v4558
      %v4560 = vand.u32 2147483647, %v4383
      %vm4561 = vcmp.le.f32.partialorder %v4560, 0.7853982
      %vm4562 = vcmp.lt.s32.totalorder %v4383, 0
      %v4563 = vand.u32 %v4383, 2139095040
      %v4564 = vshrl.u32 %v4563, 23
      %v4565 = vsub.s32 %v4564, 127
      %v4566 = vand.u32 2147483647, %v4383
      %v4567 = vand.u32 %v4566, 8388607
      %v4568 = vor.u32 %v4567, 8388608
      %v4569 = vsub.s32 0, %v4568
      %v4570 = vadd.s32 %v4565, 1
      %vm4571 = vcmp.gt.s32.totalorder %v4570, 0
      %v4572 = vsel %vm4571, %v4570, 0
      %v4573 = vshrl.u32 %v4572, 5
      %v4574 = vand.u32 %v4572, 31
      %v4575 = vsub.s32 32, %v4574
      %v4576 = vshrl.u32 683565275, %v4575
      %v4577 = vshll.u32 683565275, %v4574
      %v4578 = vshrl.u32 2475754826, %v4575
      %v4579 = vor.u32 %v4577, %v4578
      %v4580 = vshll.u32 2475754826, %v4574
      %v4581 = vshrl.u32 2131351028, %v4575
      %v4582 = vor.u32 %v4580, %v4581
      %v4583 = vshll.u32 2131351028, %v4574
      %v4584 = vshrl.u32 2102212464, %v4575
      %v4585 = vor.u32 %v4583, %v4584
      %v4586 = vshll.u32 2102212464, %v4574
      %v4587 = vshrl.u32 920167782, %v4575
      %v4588 = vor.u32 %v4586, %v4587
      %v4589 = vshll.u32 920167782, %v4574
      %v4590 = vshrl.u32 1326507024, %v4575
      %v4591 = vor.u32 %v4589, %v4590
      %vm4592 = vcmp.lt.s32.totalorder %v4573, 1
      %vm4593 = vcmp.lt.s32.totalorder %v4573, 2
      %vm4594 = vcmp.lt.s32.totalorder %v4573, 3
      %vm4595 = vcmp.lt.s32.totalorder %v4573, 4
      %v4596 = vsel %vm4592, %v4576, %v4579
      %v4597 = vsel %vm4595, %v4585, 2102212464
      %v4598 = vsel %vm4594, %v4582, %v4597
      %v4599 = vsel %vm4593, %v4596, %v4598
      %v4600 = vsel %vm4592, %v4579, %v4582
      %v4601 = vsel %vm4595, %v4588, 920167782
      %v4602 = vsel %vm4594, %v4585, %v4601
      %v4603 = vsel %vm4593, %v4600, %v4602
      %v4604 = vsel %vm4592, %v4582, %v4585
      %v4605 = vsel %vm4595, %v4591, 1326507024
      %v4606 = vsel %vm4594, %v4588, %v4605
      %v4607 = vsel %vm4593, %v4604, %v4606
      %v4608 = vshll.u32 %v4568, 8
      %v4609 = vmul.u32.u64.compose %v4608, %v4607
      %v4610 = vextract.low.u32 %v4609
      %v4611 = vextract.high.u32 %v4609
      %v4612 = vmul.u32.u64.compose %v4608, %v4603
      %v4613 = vextract.low.u32 %v4612
      %v4614 = vextract.high.u32 %v4612
      %v4615 = vmul.u32 %v4608, %v4599
      %v4616 = vadd.s32 %v4611, %v4613
      %vm4617 = vc.u32 %v4611, %v4613
      %v4618 = vadd.s32 %v4614, 1
      %v4619 = vsel %vm4617, %v4618, %v4614
      %v4620 = vadd.s32 %v4615, %v4619
      %v4621 = vadd.s32 %v4620, 536870912
      %v4622 = vshrl.u32 %v4621, 30
      %v4623 = vshll.u32 %v4622, 30
      %v4624 = vsub.s32 %v4620, %v4623
      %vm4625 = vcmp.lt.s32.totalorder %v4624, 0
      %v4626 = vsub.s32 0, %v4624
      %v4627 = vsel %vm4625, %v4626, %v4624
      %v4628 = vclz %v4627
      %v4629 = vsub.s32 %v4628, 2
      %vm4630 = vcmp.gt.s32.totalorder 0, %v4629
      %v4631 = vsel %vm4630, 0, %v4629
      %v4632 = vsub.s32 32, %v4631
      %v4633 = vshll.u32 %v4624, %v4631
      %v4634 = vshrl.u32 %v4616, %v4632
      %v4635 = vor.u32 %v4633, %v4634
      %v4636 = vsub.s32 4294967266, %v4631
      %v4637 = vadd.s32 %v4636, 127
      %v4638 = vshll.u32 %v4637, 23
      %v4639 = vor.u32 4788187, %v4638
      %v4640 = vand.u32 2147483647, %v4639
      %v4642 = vcvt.s32.f32 %v4635
      %v4643 = vmul.f32 %v4642, %v4640
      %v4644 = vxor.u32 %v4643, 2147483648
      %v4645 = vsel %vm4562, %v4644, %v4643
      %v4646 = vsub.s32 4, %v4622
      %v4647 = vsel %vm4562, %v4646, %v4622
      %v4648 = vsel %vm4561, %v4383, %v4645
      %v4649 = vsel %vm4561, 0, %v4647
      %v4650 = vcosq.f32.pop %v4648
      %v4651 = vsinq.f32.pop %v4648
      %vm4652 = vweird.f32 %v4383
      %v4653 = vadd.s32 %v4649, 3
      %v4654 = vand.u32 %v4653, 3
      %vm4655 = vcmp.lt.s32.totalorder %v4654, 2
      %vm4656 = vcmp.eq.s32.totalorder %v4654, 0
      %v4657 = vxor.u32 %v4651, 2147483648
      %v4658 = vsel %vm4656, %v4650, %v4657
      %vm4659 = vcmp.eq.s32.totalorder %v4654, 2
      %v4660 = vxor.u32 %v4650, 2147483648
      %v4661 = vsel %vm4659, %v4660, %v4651
      %v4662 = vsel %vm4655, %v4658, %v4661
      %v4663 = vsel %vm4652, nan, %v4662
      %v4664 = vand.u32 2147483647, %v4452
      %vm4665 = vcmp.le.f32.partialorder %v4664, 0.7853982
      %vm4666 = vcmp.lt.s32.totalorder %v4452, 0
      %v4667 = vand.u32 %v4452, 2139095040
      %v4668 = vshrl.u32 %v4667, 23
      %v4669 = vsub.s32 %v4668, 127
      %v4670 = vand.u32 2147483647, %v4452
      %v4671 = vand.u32 %v4670, 8388607
      %v4672 = vor.u32 %v4671, 8388608
      %v4673 = vsub.s32 0, %v4672
      %v4674 = vadd.s32 %v4669, 1
      %vm4675 = vcmp.gt.s32.totalorder %v4674, 0
      %v4676 = vsel %vm4675, %v4674, 0
      %v4677 = vshrl.u32 %v4676, 5
      %v4678 = vand.u32 %v4676, 31
      %v4679 = vsub.s32 32, %v4678
      %v4680 = vshrl.u32 683565275, %v4679
      %v4681 = vshll.u32 683565275, %v4678
      %v4682 = vshrl.u32 2475754826, %v4679
      %v4683 = vor.u32 %v4681, %v4682
      %v4684 = vshll.u32 2475754826, %v4678
      %v4685 = vshrl.u32 2131351028, %v4679
      %v4686 = vor.u32 %v4684, %v4685
      %v4687 = vshll.u32 2131351028, %v4678
      %v4688 = vshrl.u32 2102212464, %v4679
      %v4689 = vor.u32 %v4687, %v4688
      %v4690 = vshll.u32 2102212464, %v4678
      %v4691 = vshrl.u32 920167782, %v4679
      %v4692 = vor.u32 %v4690, %v4691
      %v4693 = vshll.u32 920167782, %v4678
      %v4694 = vshrl.u32 1326507024, %v4679
      %v4695 = vor.u32 %v4693, %v4694
      %vm4696 = vcmp.lt.s32.totalorder %v4677, 1
      %vm4697 = vcmp.lt.s32.totalorder %v4677, 2
      %vm4698 = vcmp.lt.s32.totalorder %v4677, 3
      %vm4699 = vcmp.lt.s32.totalorder %v4677, 4
      %v4700 = vsel %vm4696, %v4680, %v4683
      %v4701 = vsel %vm4699, %v4689, 2102212464
      %v4702 = vsel %vm4698, %v4686, %v4701
      %v4703 = vsel %vm4697, %v4700, %v4702
      %v4704 = vsel %vm4696, %v4683, %v4686
      %v4705 = vsel %vm4699, %v4692, 920167782
      %v4706 = vsel %vm4698, %v4689, %v4705
      %v4707 = vsel %vm4697, %v4704, %v4706
      %v4708 = vsel %vm4696, %v4686, %v4689
      %v4709 = vsel %vm4699, %v4695, 1326507024
      %v4710 = vsel %vm4698, %v4692, %v4709
      %v4711 = vsel %vm4697, %v4708, %v4710
      %v4712 = vshll.u32 %v4672, 8
      %v4713 = vmul.u32.u64.compose %v4712, %v4711
      %v4714 = vextract.low.u32 %v4713
      %v4715 = vextract.high.u32 %v4713
      %v4716 = vmul.u32.u64.compose %v4712, %v4707
      %v4717 = vextract.low.u32 %v4716
      %v4718 = vextract.high.u32 %v4716
      %v4719 = vmul.u32 %v4712, %v4703
      %v4720 = vadd.s32 %v4715, %v4717
      %vm4721 = vc.u32 %v4715, %v4717
      %v4722 = vadd.s32 %v4718, 1
      %v4723 = vsel %vm4721, %v4722, %v4718
      %v4724 = vadd.s32 %v4719, %v4723
      %v4725 = vadd.s32 %v4724, 536870912
      %v4726 = vshrl.u32 %v4725, 30
      %v4727 = vshll.u32 %v4726, 30
      %v4728 = vsub.s32 %v4724, %v4727
      %vm4729 = vcmp.lt.s32.totalorder %v4728, 0
      %v4730 = vsub.s32 0, %v4728
      %v4731 = vsel %vm4729, %v4730, %v4728
      %v4732 = vclz %v4731
      %v4733 = vsub.s32 %v4732, 2
      %vm4734 = vcmp.gt.s32.totalorder 0, %v4733
      %v4735 = vsel %vm4734, 0, %v4733
      %v4736 = vsub.s32 32, %v4735
      %v4737 = vshll.u32 %v4728, %v4735
      %v4738 = vshrl.u32 %v4720, %v4736
      %v4739 = vor.u32 %v4737, %v4738
      %v4740 = vsub.s32 4294967266, %v4735
      %v4741 = vadd.s32 %v4740, 127
      %v4742 = vshll.u32 %v4741, 23
      %v4743 = vor.u32 4788187, %v4742
      %v4744 = vand.u32 2147483647, %v4743
      %v4746 = vcvt.s32.f32 %v4739
      %v4747 = vmul.f32 %v4746, %v4744
      %v4748 = vxor.u32 %v4747, 2147483648
      %v4749 = vsel %vm4666, %v4748, %v4747
      %v4750 = vsub.s32 4, %v4726
      %v4751 = vsel %vm4666, %v4750, %v4726
      %v4752 = vsel %vm4665, %v4452, %v4749
      %v4753 = vsel %vm4665, 0, %v4751
      %v4754 = vcosq.f32.pop %v4752
      %v4755 = vsinq.f32.pop %v4752
      %vm4756 = vweird.f32 %v4452
      %v4757 = vadd.s32 %v4753, 3
      %v4758 = vand.u32 %v4757, 3
      %vm4759 = vcmp.lt.s32.totalorder %v4758, 2
      %vm4760 = vcmp.eq.s32.totalorder %v4758, 0
      %v4761 = vxor.u32 %v4755, 2147483648
      %v4762 = vsel %vm4760, %v4754, %v4761
      %vm4763 = vcmp.eq.s32.totalorder %v4758, 2
      %v4764 = vxor.u32 %v4754, 2147483648
      %v4765 = vsel %vm4763, %v4764, %v4755
      %v4766 = vsel %vm4759, %v4762, %v4765
      %v4767 = vsel %vm4756, nan, %v4766
      %v4768 = vand.u32 2147483647, %v4454
      %vm4769 = vcmp.le.f32.partialorder %v4768, 0.7853982
      %vm4770 = vcmp.lt.s32.totalorder %v4454, 0
      %v4771 = vand.u32 %v4454, 2139095040
      %v4772 = vshrl.u32 %v4771, 23
      %v4773 = vsub.s32 %v4772, 127
      %v4774 = vand.u32 2147483647, %v4454
      %v4775 = vand.u32 %v4774, 8388607
      %v4776 = vor.u32 %v4775, 8388608
      %v4777 = vsub.s32 0, %v4776
      %v4778 = vadd.s32 %v4773, 1
      %vm4779 = vcmp.gt.s32.totalorder %v4778, 0
      %v4780 = vsel %vm4779, %v4778, 0
      %v4781 = vshrl.u32 %v4780, 5
      %v4782 = vand.u32 %v4780, 31
      %v4783 = vsub.s32 32, %v4782
      %v4784 = vshrl.u32 683565275, %v4783
      %v4785 = vshll.u32 683565275, %v4782
      %v4786 = vshrl.u32 2475754826, %v4783
      %v4787 = vor.u32 %v4785, %v4786
      %v4788 = vshll.u32 2475754826, %v4782
      %v4789 = vshrl.u32 2131351028, %v4783
      %v4790 = vor.u32 %v4788, %v4789
      %v4791 = vshll.u32 2131351028, %v4782
      %v4792 = vshrl.u32 2102212464, %v4783
      %v4793 = vor.u32 %v4791, %v4792
      %v4794 = vshll.u32 2102212464, %v4782
      %v4795 = vshrl.u32 920167782, %v4783
      %v4796 = vor.u32 %v4794, %v4795
      %v4797 = vshll.u32 920167782, %v4782
      %v4798 = vshrl.u32 1326507024, %v4783
      %v4799 = vor.u32 %v4797, %v4798
      %vm4800 = vcmp.lt.s32.totalorder %v4781, 1
      %vm4801 = vcmp.lt.s32.totalorder %v4781, 2
      %vm4802 = vcmp.lt.s32.totalorder %v4781, 3
      %vm4803 = vcmp.lt.s32.totalorder %v4781, 4
      %v4804 = vsel %vm4800, %v4784, %v4787
      %v4805 = vsel %vm4803, %v4793, 2102212464
      %v4806 = vsel %vm4802, %v4790, %v4805
      %v4807 = vsel %vm4801, %v4804, %v4806
      %v4808 = vsel %vm4800, %v4787, %v4790
      %v4809 = vsel %vm4803, %v4796, 920167782
      %v4810 = vsel %vm4802, %v4793, %v4809
      %v4811 = vsel %vm4801, %v4808, %v4810
      %v4812 = vsel %vm4800, %v4790, %v4793
      %v4813 = vsel %vm4803, %v4799, 1326507024
      %v4814 = vsel %vm4802, %v4796, %v4813
      %v4815 = vsel %vm4801, %v4812, %v4814
      %v4816 = vshll.u32 %v4776, 8
      %v4817 = vmul.u32.u64.compose %v4816, %v4815
      %v4818 = vextract.low.u32 %v4817
      %v4819 = vextract.high.u32 %v4817
      %v4820 = vmul.u32.u64.compose %v4816, %v4811
      %v4821 = vextract.low.u32 %v4820
      %v4822 = vextract.high.u32 %v4820
      %v4823 = vmul.u32 %v4816, %v4807
      %v4824 = vadd.s32 %v4819, %v4821
      %vm4825 = vc.u32 %v4819, %v4821
      %v4826 = vadd.s32 %v4822, 1
      %v4827 = vsel %vm4825, %v4826, %v4822
      %v4828 = vadd.s32 %v4823, %v4827
      %v4829 = vadd.s32 %v4828, 536870912
      %v4830 = vshrl.u32 %v4829, 30
      %v4831 = vshll.u32 %v4830, 30
      %v4832 = vsub.s32 %v4828, %v4831
      %vm4833 = vcmp.lt.s32.totalorder %v4832, 0
      %v4834 = vsub.s32 0, %v4832
      %v4835 = vsel %vm4833, %v4834, %v4832
      %v4836 = vclz %v4835
      %v4837 = vsub.s32 %v4836, 2
      %vm4838 = vcmp.gt.s32.totalorder 0, %v4837
      %v4839 = vsel %vm4838, 0, %v4837
      %v4840 = vsub.s32 32, %v4839
      %v4841 = vshll.u32 %v4832, %v4839
      %v4842 = vshrl.u32 %v4824, %v4840
      %v4843 = vor.u32 %v4841, %v4842
      %v4844 = vsub.s32 4294967266, %v4839
      %v4845 = vadd.s32 %v4844, 127
      %v4846 = vshll.u32 %v4845, 23
      %v4847 = vor.u32 4788187, %v4846
      %v4848 = vand.u32 2147483647, %v4847
      %v4850 = vcvt.s32.f32 %v4843
      %v4851 = vmul.f32 %v4850, %v4848
      %v4852 = vxor.u32 %v4851, 2147483648
      %v4853 = vsel %vm4770, %v4852, %v4851
      %v4854 = vsub.s32 4, %v4830
      %v4855 = vsel %vm4770, %v4854, %v4830
      %v4856 = vsel %vm4769, %v4454, %v4853
      %v4857 = vsel %vm4769, 0, %v4855
      %v4858 = vcosq.f32.pop %v4856
      %v4859 = vsinq.f32.pop %v4856
      %vm4860 = vweird.f32 %v4454
      %v4861 = vadd.s32 %v4857, 3
      %v4862 = vand.u32 %v4861, 3
      %vm4863 = vcmp.lt.s32.totalorder %v4862, 2
      %vm4864 = vcmp.eq.s32.totalorder %v4862, 0
      %v4865 = vxor.u32 %v4859, 2147483648
      %v4866 = vsel %vm4864, %v4858, %v4865
      %vm4867 = vcmp.eq.s32.totalorder %v4862, 2
      %v4868 = vxor.u32 %v4858, 2147483648
      %v4869 = vsel %vm4867, %v4868, %v4859
      %v4870 = vsel %vm4863, %v4866, %v4869
      %v4871 = vsel %vm4860, nan, %v4870
      %4872 = vxpose.xlu0.b32.start [1/16] %v4559, 128
      %4873 = vxpose.xlu0.b32.cont [2/16] 0.0, 128
      %4874 = vxpose.xlu0.b32.cont [3/16] 0.0, 128
      %4875 = vxpose.xlu0.b32.cont [4/16] 0.0, 128
      %4876 = vxpose.xlu0.b32.cont [5/16] 0.0, 128
      %4877 = vxpose.xlu0.b32.cont [6/16] 0.0, 128
      %4878 = vxpose.xlu0.b32.cont [7/16] 0.0, 128
      %4879 = vxpose.xlu0.b32.cont [8/16] 0.0, 128
      %4880 = vxpose.xlu0.b32.cont [9/16] 0.0, 128
      %4881 = vxpose.xlu0.b32.cont [10/16] 0.0, 128
      %4882 = vxpose.xlu0.b32.cont [11/16] 0.0, 128
      %4883 = vxpose.xlu0.b32.cont [12/16] 0.0, 128
      %4884 = vxpose.xlu0.b32.cont [13/16] 0.0, 128
      %4885 = vxpose.xlu0.b32.cont [14/16] 0.0, 128
      %4886 = vxpose.xlu0.b32.cont [15/16] 0.0, 128
      %4887 = vxpose.xlu0.b32.end [16/16] 0.0, 128
      %v4888 = vpop.trf.xlu0
      %v4889 = vpop.trf.xlu0
      %v4890 = vpop.trf.xlu0
      %v4891 = vpop.trf.xlu0
      %v4892 = vpop.trf.xlu0
      %v4893 = vpop.trf.xlu0
      %v4894 = vpop.trf.xlu0
      %v4895 = vpop.trf.xlu0
      %v4896 = vpop.trf.xlu0
      %v4897 = vpop.trf.xlu0
      %v4898 = vpop.trf.xlu0
      %v4899 = vpop.trf.xlu0
      %v4900 = vpop.trf.xlu0
      %v4901 = vpop.trf.xlu0
      %v4902 = vpop.trf.xlu0
      %v4903 = vpop.trf.xlu0
      %4904 = vxpose.xlu0.b32.start [1/16] %v4663, 128
      %4905 = vxpose.xlu0.b32.cont [2/16] 0.0, 128
      %4906 = vxpose.xlu0.b32.cont [3/16] 0.0, 128
      %4907 = vxpose.xlu0.b32.cont [4/16] 0.0, 128
      %4908 = vxpose.xlu0.b32.cont [5/16] 0.0, 128
      %4909 = vxpose.xlu0.b32.cont [6/16] 0.0, 128
      %4910 = vxpose.xlu0.b32.cont [7/16] 0.0, 128
      %4911 = vxpose.xlu0.b32.cont [8/16] 0.0, 128
      %4912 = vxpose.xlu0.b32.cont [9/16] 0.0, 128
      %4913 = vxpose.xlu0.b32.cont [10/16] 0.0, 128
      %4914 = vxpose.xlu0.b32.cont [11/16] 0.0, 128
      %4915 = vxpose.xlu0.b32.cont [12/16] 0.0, 128
      %4916 = vxpose.xlu0.b32.cont [13/16] 0.0, 128
      %4917 = vxpose.xlu0.b32.cont [14/16] 0.0, 128
      %4918 = vxpose.xlu0.b32.cont [15/16] 0.0, 128
      %4919 = vxpose.xlu0.b32.end [16/16] 0.0, 128
      %v4920 = vpop.trf.xlu0
      %v4921 = vpop.trf.xlu0
      %v4922 = vpop.trf.xlu0
      %v4923 = vpop.trf.xlu0
      %v4924 = vpop.trf.xlu0
      %v4925 = vpop.trf.xlu0
      %v4926 = vpop.trf.xlu0
      %v4927 = vpop.trf.xlu0
      %v4928 = vpop.trf.xlu0
      %v4929 = vpop.trf.xlu0
      %v4930 = vpop.trf.xlu0
      %v4931 = vpop.trf.xlu0
      %v4932 = vpop.trf.xlu0
      %v4933 = vpop.trf.xlu0
      %v4934 = vpop.trf.xlu0
      %v4935 = vpop.trf.xlu0
      %4936 = vxpose.xlu0.b32.start [1/16] %v4767, 128
      %4937 = vxpose.xlu0.b32.cont [2/16] 0.0, 128
      %4938 = vxpose.xlu0.b32.cont [3/16] 0.0, 128
      %4939 = vxpose.xlu0.b32.cont [4/16] 0.0, 128
      %4940 = vxpose.xlu0.b32.cont [5/16] 0.0, 128
      %4941 = vxpose.xlu0.b32.cont [6/16] 0.0, 128
      %4942 = vxpose.xlu0.b32.cont [7/16] 0.0, 128
      %4943 = vxpose.xlu0.b32.cont [8/16] 0.0, 128
      %4944 = vxpose.xlu0.b32.cont [9/16] 0.0, 128
      %4945 = vxpose.xlu0.b32.cont [10/16] 0.0, 128
      %4946 = vxpose.xlu0.b32.cont [11/16] 0.0, 128
      %4947 = vxpose.xlu0.b32.cont [12/16] 0.0, 128
      %4948 = vxpose.xlu0.b32.cont [13/16] 0.0, 128
      %4949 = vxpose.xlu0.b32.cont [14/16] 0.0, 128
      %4950 = vxpose.xlu0.b32.cont [15/16] 0.0, 128
      %4951 = vxpose.xlu0.b32.end [16/16] 0.0, 128
      %v4952 = vpop.trf.xlu0
      %v4953 = vpop.trf.xlu0
      %v4954 = vpop.trf.xlu0
      %v4955 = vpop.trf.xlu0
      %v4956 = vpop.trf.xlu0
      %v4957 = vpop.trf.xlu0
      %v4958 = vpop.trf.xlu0
      %v4959 = vpop.trf.xlu0
      %v4960 = vpop.trf.xlu0
      %v4961 = vpop.trf.xlu0
      %v4962 = vpop.trf.xlu0
      %v4963 = vpop.trf.xlu0
      %v4964 = vpop.trf.xlu0
      %v4965 = vpop.trf.xlu0
      %v4966 = vpop.trf.xlu0
      %v4967 = vpop.trf.xlu0
      %4968 = vxpose.xlu0.b32.start [1/16] %v4871, 128
      %4969 = vxpose.xlu0.b32.cont [2/16] 0.0, 128
      %4970 = vxpose.xlu0.b32.cont [3/16] 0.0, 128
      %4971 = vxpose.xlu0.b32.cont [4/16] 0.0, 128
      %4972 = vxpose.xlu0.b32.cont [5/16] 0.0, 128
      %4973 = vxpose.xlu0.b32.cont [6/16] 0.0, 128
      %4974 = vxpose.xlu0.b32.cont [7/16] 0.0, 128
      %4975 = vxpose.xlu0.b32.cont [8/16] 0.0, 128
      %4976 = vxpose.xlu0.b32.cont [9/16] 0.0, 128
      %4977 = vxpose.xlu0.b32.cont [10/16] 0.0, 128
      %4978 = vxpose.xlu0.b32.cont [11/16] 0.0, 128
      %4979 = vxpose.xlu0.b32.cont [12/16] 0.0, 128
      %4980 = vxpose.xlu0.b32.cont [13/16] 0.0, 128
      %4981 = vxpose.xlu0.b32.cont [14/16] 0.0, 128
      %4982 = vxpose.xlu0.b32.cont [15/16] 0.0, 128
      %4983 = vxpose.xlu0.b32.end [16/16] 0.0, 128
      %v4984 = vpop.trf.xlu0
      %v4985 = vpop.trf.xlu0
      %v4986 = vpop.trf.xlu0
      %v4987 = vpop.trf.xlu0
      %v4988 = vpop.trf.xlu0
      %v4989 = vpop.trf.xlu0
      %v4990 = vpop.trf.xlu0
      %v4991 = vpop.trf.xlu0
      %v4992 = vpop.trf.xlu0
      %v4993 = vpop.trf.xlu0
      %v4994 = vpop.trf.xlu0
      %v4995 = vpop.trf.xlu0
      %v4996 = vpop.trf.xlu0
      %v4997 = vpop.trf.xlu0
      %v4998 = vpop.trf.xlu0
      %v4999 = vpop.trf.xlu0
      %vm5000 = vcmask 64512
      %5001 = vst.msk [vmem:[%s280] sm:$0xff] %vm5000, %v4888
      %5002 = vst.msk [vmem:[%s280 + $0x8] sm:$0xff] %vm5000, %v4889
      %5003 = vst.msk [vmem:[%s280 + $0x10] sm:$0xff] %vm5000, %v4890
      %5004 = vst.msk [vmem:[%s280 + $0x18] sm:$0xff] %vm5000, %v4891
      %5005 = vst.msk [vmem:[%s280 + $0x20] sm:$0xff] %vm5000, %v4892
      %5006 = vst.msk [vmem:[%s280 + $0x28] sm:$0xff] %vm5000, %v4893
      %5007 = vst.msk [vmem:[%s280 + $0x30] sm:$0xff] %vm5000, %v4894
      %5008 = vst.msk [vmem:[%s280 + $0x38] sm:$0xff] %vm5000, %v4895
      %5009 = vst.msk [vmem:[%s280 + $0x40] sm:$0xff] %vm5000, %v4896
      %5010 = vst.msk [vmem:[%s280 + $0x48] sm:$0xff] %vm5000, %v4897
      %5011 = vst.msk [vmem:[%s280 + $0x50] sm:$0xff] %vm5000, %v4898
      %5012 = vst.msk [vmem:[%s280 + $0x58] sm:$0xff] %vm5000, %v4899
      %5013 = vst.msk [vmem:[%s280 + $0x60] sm:$0xff] %vm5000, %v4900
      %5014 = vst.msk [vmem:[%s280 + $0x68] sm:$0xff] %vm5000, %v4901
      %5015 = vst.msk [vmem:[%s280 + $0x70] sm:$0xff] %vm5000, %v4902
      %5016 = vst.msk [vmem:[%s280 + $0x78] sm:$0xff] %vm5000, %v4903
      %5017 = vst.msk [vmem:[%s280 + $0x80] sm:$0xff] %vm5000, %v4920
      %5018 = vst.msk [vmem:[%s280 + $0x88] sm:$0xff] %vm5000, %v4921
      %5019 = vst.msk [vmem:[%s280 + $0x90] sm:$0xff] %vm5000, %v4922
      %5020 = vst.msk [vmem:[%s280 + $0x98] sm:$0xff] %vm5000, %v4923
      %5021 = vst.msk [vmem:[%s280 + $0xa0] sm:$0xff] %vm5000, %v4924
      %5022 = vst.msk [vmem:[%s280 + $0xa8] sm:$0xff] %vm5000, %v4925
      %5023 = vst.msk [vmem:[%s280 + $0xb0] sm:$0xff] %vm5000, %v4926
      %5024 = vst.msk [vmem:[%s280 + $0xb8] sm:$0xff] %vm5000, %v4927
      %5025 = vst.msk [vmem:[%s280 + $0xc0] sm:$0xff] %vm5000, %v4928
      %5026 = vst.msk [vmem:[%s280 + $0xc8] sm:$0xff] %vm5000, %v4929
      %5027 = vst.msk [vmem:[%s280 + $0xd0] sm:$0xff] %vm5000, %v4930
      %5028 = vst.msk [vmem:[%s280 + $0xd8] sm:$0xff] %vm5000, %v4931
      %5029 = vst.msk [vmem:[%s280 + $0xe0] sm:$0xff] %vm5000, %v4932
      %5030 = vst.msk [vmem:[%s280 + $0xe8] sm:$0xff] %vm5000, %v4933
      %5031 = vst.msk [vmem:[%s280 + $0xf0] sm:$0xff] %vm5000, %v4934
      %5032 = vst.msk [vmem:[%s280 + $0xf8] sm:$0xff] %vm5000, %v4935
      %5033 = vst.msk [vmem:[%s280 + $0x100] sm:$0xff] %vm5000, %v4952
      %5034 = vst.msk [vmem:[%s280 + $0x108] sm:$0xff] %vm5000, %v4953
      %5035 = vst.msk [vmem:[%s280 + $0x110] sm:$0xff] %vm5000, %v4954
      %5036 = vst.msk [vmem:[%s280 + $0x118] sm:$0xff] %vm5000, %v4955
      %5037 = vst.msk [vmem:[%s280 + $0x120] sm:$0xff] %vm5000, %v4956
      %5038 = vst.msk [vmem:[%s280 + $0x128] sm:$0xff] %vm5000, %v4957
      %5039 = vst.msk [vmem:[%s280 + $0x130] sm:$0xff] %vm5000, %v4958
      %5040 = vst.msk [vmem:[%s280 + $0x138] sm:$0xff] %vm5000, %v4959
      %5041 = vst.msk [vmem:[%s280 + $0x140] sm:$0xff] %vm5000, %v4960
      %5042 = vst.msk [vmem:[%s280 + $0x148] sm:$0xff] %vm5000, %v4961
      %5043 = vst.msk [vmem:[%s280 + $0x150] sm:$0xff] %vm5000, %v4962
      %5044 = vst.msk [vmem:[%s280 + $0x158] sm:$0xff] %vm5000, %v4963
      %5045 = vst.msk [vmem:[%s280 + $0x160] sm:$0xff] %vm5000, %v4964
      %5046 = vst.msk [vmem:[%s280 + $0x168] sm:$0xff] %vm5000, %v4965
      %5047 = vst.msk [vmem:[%s280 + $0x170] sm:$0xff] %vm5000, %v4966
      %5048 = vst.msk [vmem:[%s280 + $0x178] sm:$0xff] %vm5000, %v4967
      %5049 = vst.msk [vmem:[%s280 + $0x180] sm:$0xff] %vm5000, %v4984
      %5050 = vst.msk [vmem:[%s280 + $0x188] sm:$0xff] %vm5000, %v4985
      %5051 = vst.msk [vmem:[%s280 + $0x190] sm:$0xff] %vm5000, %v4986
      %5052 = vst.msk [vmem:[%s280 + $0x198] sm:$0xff] %vm5000, %v4987
      %5053 = vst.msk [vmem:[%s280 + $0x1a0] sm:$0xff] %vm5000, %v4988
      %5054 = vst.msk [vmem:[%s280 + $0x1a8] sm:$0xff] %vm5000, %v4989
      %5055 = vst.msk [vmem:[%s280 + $0x1b0] sm:$0xff] %vm5000, %v4990
      %5056 = vst.msk [vmem:[%s280 + $0x1b8] sm:$0xff] %vm5000, %v4991
      %5057 = vst.msk [vmem:[%s280 + $0x1c0] sm:$0xff] %vm5000, %v4992
      %5058 = vst.msk [vmem:[%s280 + $0x1c8] sm:$0xff] %vm5000, %v4993
      %5059 = vst.msk [vmem:[%s280 + $0x1d0] sm:$0xff] %vm5000, %v4994
      %5060 = vst.msk [vmem:[%s280 + $0x1d8] sm:$0xff] %vm5000, %v4995
      %5061 = vst.msk [vmem:[%s280 + $0x1e0] sm:$0xff] %vm5000, %v4996
      %5062 = vst.msk [vmem:[%s280 + $0x1e8] sm:$0xff] %vm5000, %v4997
      %5063 = vst.msk [vmem:[%s280 + $0x1f0] sm:$0xff] %vm5000, %v4998
      %5064 = vst.msk [vmem:[%s280 + $0x1f8] sm:$0xff] %vm5000, %v4999
      %s5065 = smul.u32 64, %s18
      %p5066 = scmp.lt.s32.totalorder %s5065, 255
      %s5067 = scalar_select %p5066, %s5065, 255
      %s5068 = smul.addr %s5067, 8
      %s5069 = scalar_lea.vmem %s7, %s5068
      // Predicated region
      $region49: #{sirens_forward.1} parent=47 // pred_check
        %p5070 = pneg %p188
      $region50: #{sirens_forward.1} parent=47 // pred_check_branch
        %5072 = sbr.rel (%p5070) target = $region52
      $region51: #{sirens_forward.1} parent=47 // pred_region
        %s5073 = smul.u32 64, %s18
      $region52: #{sirens_forward.1} parent=47 // pred_fallthru
        _
    $region48: #{sirens_forward.1} parent=5 // pred_fallthru
      _
    %p5074 = scmp.le.s32.totalorder 2, %s13
    // Predicated region
    $region53: #{sirens_forward.1} parent=5 // pred_check
      %p5075 = pneg %p5074
    $region54: #{sirens_forward.1} parent=5 // pred_check_branch
      %5077 = sbr.rel (%p5075) target = $region56
    $region55: #{sirens_forward.1} parent=5 // pred_region
      %s5078 = ssub.s32 %s13, 2
      // Predicated region
      $region57: #{sirens_forward.1} parent=55 // pred_check
        %p5079 = pneg %p194
      $region58: #{sirens_forward.1} parent=55 // pred_check_branch
        %5081 = sbr.rel (%p5079) target = $region60
      $region59: #{sirens_forward.1} parent=55 // pred_region
        %s5082 = smul.u32 64, %s19
        %p5083 = scmp.lt.s32.totalorder %s5082, 255
        %s5084 = scalar_select %p5083, %s5082, 255
        %s5085 = smul.addr %s5084, 8
        %s5086 = scalar_lea.vmem %s7, %s5085
      $region60: #{sirens_forward.1} parent=55 // pred_fallthru
        _
    $region56: #{sirens_forward.1} parent=5 // pred_fallthru
      _
  $region6: #{sirens_forward.1} parent=0 // loop_footer
    %s17 = sadd.s32 1, %s13
  $region7: #{sirens_forward.1} parent=0 // loop_footer_branch
    %12 = sbr.rel target = $region3
  $region8: #{sirens_forward.1} parent=0 // loop_exit
    _

</llo_original>
